<compile_context>
chip_gen: v7x
topology: tpu7x:2x2x1
jax: 0.10.0
libtpu: 0.0.40
codegen_flags: <defaults>
</compile_context>

<pallas_src>
import functools

import jax
import jax.numpy as jnp
from jax import lax
from jax.experimental import pallas as pl
from jax.experimental.pallas import tpu as pltpu


# ----------------------------- small helpers --------------------------------

def _round_up(x, m):
    return ((x + m - 1) // m) * m


def _pick_tm(m):
    if m >= 1024:
        return 512
    if m >= 512:
        return 256          # >= 2 tiles so both v7x TensorCores get work
    return max(8, _round_up(m, 8))


def _apply_act(x, act):
    if act == "leaky":
        return jnp.where(x >= 0, x, 0.2 * x)
    if act == "relu":
        return jnp.maximum(x, 0.0)
    if act == "sigmoid":
        # numerically stable sigmoid (no exp overflow for very negative x)
        z = jnp.exp(-jnp.abs(x))
        return jnp.where(x >= 0, 1.0 / (1.0 + z), z / (1.0 + z))
    if act == "tanh":
        return jnp.tanh(x)
    return x


# ----------------------------- Pallas kernels -------------------------------

def _mm_act_kernel(p_ref, w_ref, o_ref, *, act):
    acc = jnp.dot(p_ref[...], w_ref[...], preferred_element_type=jnp.float32)
    o_ref[...] = _apply_act(acc, act).astype(o_ref.dtype)


def _mm_stats_kernel(p_ref, w_ref, o_ref, s_ref):
    acc = jnp.dot(p_ref[...], w_ref[...], preferred_element_type=jnp.float32)
    o_ref[...] = acc.astype(o_ref.dtype)
    # per-tile partial BatchNorm statistics (padded rows are zero -> no bias)
    s_ref[0:1, :] = jnp.sum(acc, axis=0, keepdims=True)
    s_ref[1:2, :] = jnp.sum(acc * acc, axis=0, keepdims=True)


def _scale_shift_act_kernel(x_ref, sc_ref, sh_ref, o_ref, *, act):
    y = x_ref[...].astype(jnp.float32) * sc_ref[...] + sh_ref[...]
    o_ref[...] = _apply_act(y, act).astype(o_ref.dtype)


# ----------------------------- Pallas wrappers -------------------------------

def matmul_act(patches, weight, act="none", out_dtype=jnp.bfloat16):
    """(M,K)@(K,N) with fused activation. bf16 MXU inputs, f32 accumulation."""
    M, K = patches.shape
    _, N = weight.shape
    tm = _pick_tm(M)
    Mp = _round_up(M, tm)
    Np = _round_up(N, 128)
    p = jnp.pad(patches.astype(jnp.bfloat16), ((0, Mp - M), (0, 0)))
    w = jnp.pad(weight.astype(jnp.bfloat16), ((0, 0), (0, Np - N)))
    out = pl.pallas_call(
        functools.partial(_mm_act_kernel, act=act),
        out_shape=jax.ShapeDtypeStruct((Mp, Np), out_dtype),
        grid=(Mp // tm,),
        in_specs=[
            pl.BlockSpec((tm, K), lambda i: (i, 0)),
            pl.BlockSpec((K, Np), lambda i: (0, 0)),
        ],
        out_specs=pl.BlockSpec((tm, Np), lambda i: (i, 0)),
        compiler_params=pltpu.CompilerParams(
            dimension_semantics=("parallel",)),
    )(p, w)
    return out, (M, N, Mp, Np, tm)


def matmul_stats(patches, weight, out_dtype=jnp.bfloat16):
    """Conv matmul that also emits per-M-tile partial (sum, sum^2) columns."""
    M, K = patches.shape
    _, N = weight.shape
    tm = _pick_tm(M)
    Mp = _round_up(M, tm)
    Np = _round_up(N, 128)
    T = Mp // tm
    p = jnp.pad(patches.astype(jnp.bfloat16), ((0, Mp - M), (0, 0)))
    w = jnp.pad(weight.astype(jnp.bfloat16), ((0, 0), (0, Np - N)))
    out, stats = pl.pallas_call(
        _mm_stats_kernel,
        out_shape=(jax.ShapeDtypeStruct((Mp, Np), out_dtype),
                   jax.ShapeDtypeStruct((T, 2, Np), jnp.float32)),
        grid=(T,),
        in_specs=[
            pl.BlockSpec((tm, K), lambda i: (i, 0)),
            pl.BlockSpec((K, Np), lambda i: (0, 0)),
        ],
        out_specs=(pl.BlockSpec((tm, Np), lambda i: (i, 0)),
                   pl.BlockSpec((None, 2, Np), lambda i: (i, 0, 0))),
        compiler_params=pltpu.CompilerParams(
            dimension_semantics=("parallel",)),
    )(p, w)
    return out, stats, (M, N, Mp, Np, tm)


def batchnorm_apply(conv_out, stats, meta, gamma, beta, act, groups, eps=1e-5):
    """Fold partial stats into per-channel scale/shift (tiny), then a gridded,
    lane-dense Pallas kernel applies x*scale + shift followed by activation."""
    M, N, Mp, Np, tm = meta
    c = gamma.shape[0]
    ncols = groups * c                     # == N (columns are (group, channel))
    s = jnp.sum(stats, axis=0)                              # (2, Np)
    s = s[:, :ncols].reshape(2, groups, c).sum(axis=1)      # (2, C)
    cnt = float(M * groups)                # true element count per channel
    mean = s[0] / cnt
    var = jnp.maximum(s[1] / cnt - mean * mean, 0.0)        # biased, training BN
    scale = gamma * lax.rsqrt(var + eps)
    shift = beta - mean * scale
    scale_cols = jnp.pad(jnp.tile(scale, groups), (0, Np - ncols)).reshape(1, Np)
    shift_cols = jnp.pad(jnp.tile(shift, groups), (0, Np - ncols)).reshape(1, Np)
    out = pl.pallas_call(
        functools.partial(_scale_shift_act_kernel, act=act),
        out_shape=jax.ShapeDtypeStruct((Mp, Np), jnp.bfloat16),
        grid=(Mp // tm,),
        in_specs=[
            pl.BlockSpec((tm, Np), lambda i: (i, 0)),
            pl.BlockSpec((1, Np), lambda i: (0, 0)),
            pl.BlockSpec((1, Np), lambda i: (0, 0)),
        ],
        out_specs=pl.BlockSpec((tm, Np), lambda i: (i, 0)),
        compiler_params=pltpu.CompilerParams(
            dimension_semantics=("parallel",)),
    )(conv_out, scale_cols, shift_cols)
    return out


# ----------------------------- JAX glue (layout only) ------------------------

def _im2col_nhwc(x, k, stride, pad):
    """x: (N, H, W, C) -> patches (N*Ho*Wo, k*k*C), columns ordered (kh,kw,c)."""
    if pad:
        x = jnp.pad(x, ((0, 0), (pad, pad), (pad, pad), (0, 0)))
    n, h, w, c = x.shape
    ho = (h - k) // stride + 1
    wo = (w - k) // stride + 1
    cols = []
    for kh in range(k):
        for kw in range(k):
            cols.append(x[:, kh:kh + stride * ho:stride,
                          kw:kw + stride * wo:stride, :])
    p = jnp.concatenate(cols, axis=-1)                 # (N, Ho, Wo, k*k*C)
    return p.reshape(n * ho * wo, k * k * c), (n, ho, wo)


def _conv_weight_matrix(w):
    # PyTorch Conv2d weight (Cout, Cin, k, k) -> (k*k*Cin, Cout)
    cout, cin, k, _ = w.shape
    return w.transpose(2, 3, 1, 0).reshape(k * k * cin, cout)


def _convT_s1_weight_matrix(w_t):
    # ConvTranspose2d weight (Cin, Cout, k, k), stride 1: equivalent forward
    # conv with spatially flipped kernel.
    cin, cout, k, _ = w_t.shape
    w_flip = jnp.flip(w_t, axis=(2, 3))
    return w_flip.transpose(2, 3, 0, 1).reshape(k * k * cin, cout)


def _convT_s2_subpixel_weight(w_t):
    # ConvTranspose2d (Cin, Cout, 4, 4), stride 2, pad 1 -> combined block-sparse
    # weight (9*Cin, 4*Cout); rows ordered (dy, dx, ci), cols ordered (py, px, co).
    cin, cout, k, _ = w_t.shape
    assert k == 4
    wbig = jnp.zeros((3, 3, cin, 2, 2, cout), w_t.dtype)
    for py in range(2):
        for px in range(2):
            for a in range(2):
                for b in range(2):
                    wbig = wbig.at[py + a, px + b, :, py, px, :].set(
                        w_t[:, :, 3 - py - 2 * a, 3 - px - 2 * b])
    return wbig.reshape(9 * cin, 4 * cout)


def _depth_to_space(out2d, n, h, w, cout):
    # out2d: (n*h*w, 4*cout) with columns ordered (py, px, co)
    y = out2d.reshape(n, h, w, 2, 2, cout)
    y = y.transpose(0, 1, 3, 2, 4, 5)
    return y.reshape(n, 2 * h, 2 * w, cout)


# ----------------------------- layer functions --------------------------------

def conv2d_act(x, w, stride, pad, act):
    cout, _, k, _ = w.shape
    patches, (n, ho, wo) = _im2col_nhwc(x, k, stride, pad)
    out, (M, N, _, _, _) = matmul_act(patches, _conv_weight_matrix(w), act=act)
    return out[:M, :N].reshape(n, ho, wo, cout)


def conv2d_bn_act(x, w, gamma, beta, stride, pad, act):
    cout, _, k, _ = w.shape
    patches, (n, ho, wo) = _im2col_nhwc(x, k, stride, pad)
    conv_out, stats, meta = matmul_stats(patches, _conv_weight_matrix(w))
    out = batchnorm_apply(conv_out, stats, meta, gamma, beta, act, groups=1)
    M, N = meta[0], meta[1]
    return out[:M, :N].reshape(n, ho, wo, cout)


def convT_s1_bn_act(x, w_t, gamma, beta, act, pad):
    cin, cout, k, _ = w_t.shape
    patches, (n, ho, wo) = _im2col_nhwc(x, k, 1, k - 1 - pad)
    conv_out, stats, meta = matmul_stats(patches, _convT_s1_weight_matrix(w_t))
    out = batchnorm_apply(conv_out, stats, meta, gamma, beta, act, groups=1)
    M, N = meta[0], meta[1]
    return out[:M, :N].reshape(n, ho, wo, cout)


def convT_s2_bn_act(x, w_t, gamma, beta, act):
    cout = w_t.shape[1]
    n, h, w, _ = x.shape
    patches, _ = _im2col_nhwc(x, 3, 1, 1)                 # (n*h*w, 9*cin)
    conv_out, stats, meta = matmul_stats(patches, _convT_s2_subpixel_weight(w_t))
    out = batchnorm_apply(conv_out, stats, meta, gamma, beta, act, groups=4)
    M, N = meta[0], meta[1]
    return _depth_to_space(out[:M, :N], n, h, w, cout)


def convT_s2_act(x, w_t, act):
    cout = w_t.shape[1]
    n, h, w, _ = x.shape
    patches, _ = _im2col_nhwc(x, 3, 1, 1)
    out, (M, N, _, _, _) = matmul_act(patches, _convT_s2_subpixel_weight(w_t),
                                      act=act)
    return _depth_to_space(out[:M, :N], n, h, w, cout)


# ----------------------------- forward passes ---------------------------------

def _generator_forward(p, z_nchw):
    x = z_nchw.transpose(0, 2, 3, 1)                      # NCHW -> NHWC
    x = convT_s1_bn_act(x, p["g_w1"], *p["g_bn1"], act="relu", pad=0)
    x = convT_s2_bn_act(x, p["g_w2"], *p["g_bn2"], act="relu")
    x = convT_s2_bn_act(x, p["g_w3"], *p["g_bn3"], act="relu")
    x = convT_s2_bn_act(x, p["g_w4"], *p["g_bn4"], act="relu")
    x = convT_s2_act(x, p["g_w5"], act="tanh")
    return x.transpose(0, 3, 1, 2).astype(jnp.float32)    # NHWC -> NCHW


def _discriminator_forward(p, img_nchw):
    x = img_nchw.transpose(0, 2, 3, 1).astype(jnp.bfloat16)   # NCHW -> NHWC
    x = conv2d_act(x, p["d_w1"], stride=2, pad=1, act="leaky")
    x = conv2d_bn_act(x, p["d_w2"], *p["d_bn2"], stride=2, pad=1, act="leaky")
    x = conv2d_bn_act(x, p["d_w3"], *p["d_bn3"], stride=2, pad=1, act="leaky")
    x = conv2d_bn_act(x, p["d_w4"], *p["d_bn4"], stride=2, pad=1, act="leaky")
    x = conv2d_act(x, p["d_w5"], stride=1, pad=0, act="sigmoid")
    return x.reshape(x.shape[0], -1).astype(jnp.float32)      # .view(N, -1)


# ------------------------------ dcGAN module ----------------------------------

def init_params(key, latent_length, in_channel, channel):
    ks = list(jax.random.split(key, 24))
    it = iter(ks)

    def conv_w(shape):
        return 0.02 * jax.random.normal(next(it), shape, jnp.float32)

    def bn(c):
        g = 1.0 + 0.02 * jax.random.normal(next(it), (c,), jnp.float32)
        b = jnp.zeros((c,), jnp.float32)
        return g, b

    ch = channel
    p = {}
    # Generator (ConvTranspose2d weights are (Cin, Cout, 4, 4))
    p["g_w1"] = conv_w((latent_length, ch * 8, 4, 4)); p["g_bn1"] = bn(ch * 8)
    p["g_w2"] = conv_w((ch * 8, ch * 4, 4, 4));        p["g_bn2"] = bn(ch * 4)
    p["g_w3"] = conv_w((ch * 4, ch * 2, 4, 4));        p["g_bn3"] = bn(ch * 2)
    p["g_w4"] = conv_w((ch * 2, ch, 4, 4));            p["g_bn4"] = bn(ch)
    p["g_w5"] = conv_w((ch, in_channel, 4, 4))
    # Discriminator (Conv2d weights are (Cout, Cin, 4, 4))
    p["d_w1"] = conv_w((ch, in_channel, 4, 4))
    p["d_w2"] = conv_w((ch * 2, ch, 4, 4));            p["d_bn2"] = bn(ch * 2)
    p["d_w3"] = conv_w((ch * 4, ch * 2, 4, 4));        p["d_bn3"] = bn(ch * 4)
    p["d_w4"] = conv_w((ch * 8, ch * 4, 4, 4));        p["d_bn4"] = bn(ch * 8)
    p["d_w5"] = conv_w((1, ch * 8, 4, 4))
    return p


class DCGANPallas:
    def __init__(self, distribution, latent_length=16, in_channel=3,
                 channel=8, key=None):
        self.distribution = distribution
        self.latent_length = latent_length
        self.in_channel = in_channel
        self.channel = channel
        self.params = init_params(key, latent_length, in_channel, channel)
        self._gen = jax.jit(_generator_forward)
        self._disc = jax.jit(_discriminator_forward)

    def generate(self, z):
        return self._gen(self.params, z)

    def discriminate(self, image):
        return self._disc(self.params, image)

    def _latent_random(self, numbers, key):
        shape = (numbers, self.latent_length, 1, 1)
        if self.distribution == "uniform":
            return jax.random.uniform(key, shape, jnp.float32, -1.0, 1.0)
        elif self.distribution in ("normal", "torch"):
            return jax.random.normal(key, shape, jnp.float32)
        # TODO(synk): 'oth_normal' (numpy-based orthogonalization of the latent)
        # has no in-kernel equivalent; falling back to plain normal sampling.
        elif self.distribution == "oth_normal":
            return jax.random.normal(key, shape, jnp.float32)
        else:
            raise RuntimeError("Can't generate random latent vector.")

    def forward(self, feed, mode="generate", key=None):
        if mode not in ["generate", "discriminate"]:
            raise ValueError(
                "Please check the model mode, [generate or discrimiate].")
        if mode == "generate":
            z = self._latent_random(feed, key)
            return self.generate(z)
        return self.discriminate(feed)


# ----------------------------------- main --------------------------------------

if __name__ == "__main__":
    key = jax.random.PRNGKey(0)
    k_param, k_latent = jax.random.split(key, 2)

    # Small config: latent=16, in_channel=3, channel=8, batch=2, image 64x64
    model = DCGANPallas(distribution="normal", latent_length=16,
                        in_channel=3, channel=8, key=k_param)

    batch = 2
    # generate mode: feed = number of samples
    fake_images = model.forward(batch, mode="generate", key=k_latent)
    # discriminate mode: feed = NCHW image batch
    scores = model.forward(fake_images, mode="discriminate")

    fake_images = jax.block_until_ready(fake_images)
    scores = jax.block_until_ready(scores)

    assert fake_images.shape == (batch, 3, 64, 64), fake_images.shape
    assert scores.shape == (batch, 1), scores.shape
    assert bool(jnp.all(jnp.isfinite(fake_images)))
    assert bool(jnp.all((scores >= 0.0) & (scores <= 1.0)))

    print("KERNEL_OK")
</pallas_src>

<mosaic_0001>
module attributes {stable_mosaic.version = 11 : i64} {
  func.func @_mm_stats_kernel(%arg0: i32, %arg1: memref<32x256xbf16, #tpu.memory_space<vmem>>, %arg2: memref<256x128xbf16, #tpu.memory_space<vmem>>, %arg3: memref<32x128xbf16, #tpu.memory_space<vmem>>, %arg4: memref<1x2x128xf32, #tpu.memory_space<vmem>>) attributes {dimension_semantics = [#tpu.dimension_semantics<parallel>], iteration_bounds = array<i64: 1>, scalar_prefetch = 0 : i64, scratch_operands = 0 : i64, tpu.core_type = #tpu.core_type<tc>, window_params = [{transform_indices = @transform_0, window_bounds = array<i64: 32, 256>}, {pipeline_mode = #tpu.pipeline_mode<synchronous>, transform_indices = @transform_1, window_bounds = array<i64: 256, 128>}, {transform_indices = @transform_2, window_bounds = array<i64: 32, 128>}, {transform_indices = @transform_3, window_bounds = array<i64: 1, 2, 128>}]} {
    %c0 = arith.constant 0 : index
    %c0_0 = arith.constant 0 : index
    %0 = vector.load %arg1[%c0, %c0_0] : memref<32x256xbf16, #tpu.memory_space<vmem>>, vector<32x256xbf16>
    %c0_1 = arith.constant 0 : index
    %c0_2 = arith.constant 0 : index
    %1 = vector.load %arg2[%c0_1, %c0_2] : memref<256x128xbf16, #tpu.memory_space<vmem>>, vector<256x128xbf16>
    %cst = arith.constant dense<0.000000e+00> : vector<32x128xf32>
    %2 = tpu.matmul %0, %1, %cst {dimension_numbers = #tpu.dot_dimension_numbers<[1], [0], [0], [1], [0, 0, 1, 1], [], []>} : vector<32x256xbf16>, vector<256x128xbf16>, vector<32x128xf32> -> vector<32x128xf32>
    %3 = arith.truncf %2 : vector<32x128xf32> to vector<32x128xbf16>
    %c0_3 = arith.constant 0 : index
    %c0_4 = arith.constant 0 : index
    %4 = vector.load %arg3[%c0_3, %c0_4] : memref<32x128xbf16, #tpu.memory_space<vmem>>, vector<32x128xbf16>
    tpu.vector_store %arg3[%c0_3, %c0_4], %3 {strides = array<i32>} : memref<32x128xbf16, #tpu.memory_space<vmem>>, vector<32x128xbf16>,
    %cst_5 = arith.constant dense<0.000000e+00> : vector<128xf32>
    %5 = vector.multi_reduction <add>, %2, %cst_5 [0] : vector<32x128xf32> to vector<128xf32>
    %6 = vector.shape_cast %5 : vector<128xf32> to vector<1x128xf32>
    %c0_6 = arith.constant 0 : index
    %c0_7 = arith.constant 0 : index
    %c0_8 = arith.constant 0 : index
    %7 = vector.load %arg4[%c0_6, %c0_7, %c0_8] : memref<1x2x128xf32, #tpu.memory_space<vmem>>, vector<1x1x128xf32>
    %8 = vector.shape_cast %7 : vector<1x1x128xf32> to vector<1x128xf32>
    %9 = vector.shape_cast %6 : vector<1x128xf32> to vector<1x1x128xf32>
    tpu.vector_store %arg4[%c0_6, %c0_7, %c0_8], %9 {strides = array<i32>} : memref<1x2x128xf32, #tpu.memory_space<vmem>>, vector<1x1x128xf32>,
    %10 = arith.mulf %2, %2 : vector<32x128xf32>
    %cst_9 = arith.constant dense<0.000000e+00> : vector<128xf32>
    %11 = vector.multi_reduction <add>, %10, %cst_9 [0] : vector<32x128xf32> to vector<128xf32>
    %12 = vector.shape_cast %11 : vector<128xf32> to vector<1x128xf32>
    %c0_10 = arith.constant 0 : index
    %c1 = arith.constant 1 : index
    %c0_11 = arith.constant 0 : index
    %13 = vector.load %arg4[%c0_10, %c1, %c0_11] : memref<1x2x128xf32, #tpu.memory_space<vmem>>, vector<1x1x128xf32>
    %14 = vector.shape_cast %13 : vector<1x1x128xf32> to vector<1x128xf32>
    %15 = vector.shape_cast %12 : vector<1x128xf32> to vector<1x1x128xf32>
    tpu.vector_store %arg4[%c0_10, %c1, %c0_11], %15 {strides = array<i32>} : memref<1x2x128xf32, #tpu.memory_space<vmem>>, vector<1x1x128xf32>,
    return
  }
  func.func @transform_0(%arg0: i32) -> (i32, i32) {
    %c0_i32 = arith.constant 0 : i32
    %c0_i32_0 = arith.constant 0 : i32
    return %arg0, %c0_i32 : i32, i32
  }
  func.func @transform_1(%arg0: i32) -> (i32, i32) {
    %c0_i32 = arith.constant 0 : i32
    %c0_i32_0 = arith.constant 0 : i32
    %c0_i32_1 = arith.constant 0 : i32
    return %c0_i32, %c0_i32_0 : i32, i32
  }
  func.func @transform_2(%arg0: i32) -> (i32, i32) {
    %c0_i32 = arith.constant 0 : i32
    %c0_i32_0 = arith.constant 0 : i32
    return %arg0, %c0_i32 : i32, i32
  }
  func.func @transform_3(%arg0: i32) -> (i32, i32, i32) {
    %c0_i32 = arith.constant 0 : i32
    %c0_i32_0 = arith.constant 0 : i32
    %c0_i32_1 = arith.constant 0 : i32
    return %arg0, %c0_i32, %c0_i32_0 : i32, i32, i32
  }
}

module attributes {stable_mosaic.version = 11 : i64} {
  func.func @_scale_shift_act_kernel(%arg0: i32, %arg1: memref<32x128xbf16, #tpu.memory_space<vmem>>, %arg2: memref<1x128xf32, #tpu.memory_space<vmem>>, %arg3: memref<1x128xf32, #tpu.memory_space<vmem>>, %arg4: memref<32x128xbf16, #tpu.memory_space<vmem>>) attributes {dimension_semantics = [#tpu.dimension_semantics<parallel>], iteration_bounds = array<i64: 1>, scalar_prefetch = 0 : i64, scratch_operands = 0 : i64, tpu.core_type = #tpu.core_type<tc>, window_params = [{transform_indices = @transform_0, window_bounds = array<i64: 32, 128>}, {pipeline_mode = #tpu.pipeline_mode<synchronous>, transform_indices = @transform_1, window_bounds = array<i64: 1, 128>}, {pipeline_mode = #tpu.pipeline_mode<synchronous>, transform_indices = @transform_2, window_bounds = array<i64: 1, 128>}, {transform_indices = @transform_3, window_bounds = array<i64: 32, 128>}]} {
    %c0 = arith.constant 0 : index
    %c0_0 = arith.constant 0 : index
    %0 = vector.load %arg1[%c0, %c0_0] : memref<32x128xbf16, #tpu.memory_space<vmem>>, vector<32x128xbf16>
    %1 = arith.extf %0 : vector<32x128xbf16> to vector<32x128xf32>
    %c0_1 = arith.constant 0 : index
    %c0_2 = arith.constant 0 : index
    %2 = vector.load %arg2[%c0_1, %c0_2] : memref<1x128xf32, #tpu.memory_space<vmem>>, vector<1x128xf32>
    %3 = vector.broadcast %2 : vector<1x128xf32> to vector<32x128xf32>
    %4 = arith.mulf %1, %3 : vector<32x128xf32>
    %c0_3 = arith.constant 0 : index
    %c0_4 = arith.constant 0 : index
    %5 = vector.load %arg3[%c0_3, %c0_4] : memref<1x128xf32, #tpu.memory_space<vmem>>, vector<1x128xf32>
    %6 = vector.broadcast %5 : vector<1x128xf32> to vector<32x128xf32>
    %7 = arith.addf %4, %6 : vector<32x128xf32>
    %cst = arith.constant 0.000000e+00 : f32
    %8 = vector.broadcast %cst : f32 to vector<32x128xf32>
    %9 = arith.maximumf %7, %8 : vector<32x128xf32>
    %10 = arith.truncf %9 : vector<32x128xf32> to vector<32x128xbf16>
    %c0_5 = arith.constant 0 : index
    %c0_6 = arith.constant 0 : index
    %11 = vector.load %arg4[%c0_5, %c0_6] : memref<32x128xbf16, #tpu.memory_space<vmem>>, vector<32x128xbf16>
    tpu.vector_store %arg4[%c0_5, %c0_6], %10 {strides = array<i32>} : memref<32x128xbf16, #tpu.memory_space<vmem>>, vector<32x128xbf16>,
    return
  }
  func.func @transform_0(%arg0: i32) -> (i32, i32) {
    %c0_i32 = arith.constant 0 : i32
    %c0_i32_0 = arith.constant 0 : i32
    return %arg0, %c0_i32 : i32, i32
  }
  func.func @transform_1(%arg0: i32) -> (i32, i32) {
    %c0_i32 = arith.constant 0 : i32
    %c0_i32_0 = arith.constant 0 : i32
    %c0_i32_1 = arith.constant 0 : i32
    return %c0_i32, %c0_i32_0 : i32, i32
  }
  func.func @transform_2(%arg0: i32) -> (i32, i32) {
    %c0_i32 = arith.constant 0 : i32
    %c0_i32_0 = arith.constant 0 : i32
    %c0_i32_1 = arith.constant 0 : i32
    return %c0_i32, %c0_i32_0 : i32, i32
  }
  func.func @transform_3(%arg0: i32) -> (i32, i32) {
    %c0_i32 = arith.constant 0 : i32
    %c0_i32_0 = arith.constant 0 : i32
    return %arg0, %c0_i32 : i32, i32
  }
}

module attributes {stable_mosaic.version = 11 : i64} {
  func.func @_mm_stats_kernel(%arg0: i32, %arg1: memref<32x576xbf16, #tpu.memory_space<vmem>>, %arg2: memref<576x128xbf16, #tpu.memory_space<vmem>>, %arg3: memref<32x128xbf16, #tpu.memory_space<vmem>>, %arg4: memref<1x2x128xf32, #tpu.memory_space<vmem>>) attributes {dimension_semantics = [#tpu.dimension_semantics<parallel>], iteration_bounds = array<i64: 1>, scalar_prefetch = 0 : i64, scratch_operands = 0 : i64, tpu.core_type = #tpu.core_type<tc>, window_params = [{transform_indices = @transform_0, window_bounds = array<i64: 32, 576>}, {pipeline_mode = #tpu.pipeline_mode<synchronous>, transform_indices = @transform_1, window_bounds = array<i64: 576, 128>}, {transform_indices = @transform_2, window_bounds = array<i64: 32, 128>}, {transform_indices = @transform_3, window_bounds = array<i64: 1, 2, 128>}]} {
    %c0 = arith.constant 0 : index
    %c0_0 = arith.constant 0 : index
    %0 = vector.load %arg1[%c0, %c0_0] : memref<32x576xbf16, #tpu.memory_space<vmem>>, vector<32x576xbf16>
    %c0_1 = arith.constant 0 : index
    %c0_2 = arith.constant 0 : index
    %1 = vector.load %arg2[%c0_1, %c0_2] : memref<576x128xbf16, #tpu.memory_space<vmem>>, vector<576x128xbf16>
    %cst = arith.constant dense<0.000000e+00> : vector<32x128xf32>
    %2 = tpu.matmul %0, %1, %cst {dimension_numbers = #tpu.dot_dimension_numbers<[1], [0], [0], [1], [0, 0, 1, 1], [], []>} : vector<32x576xbf16>, vector<576x128xbf16>, vector<32x128xf32> -> vector<32x128xf32>
    %3 = arith.truncf %2 : vector<32x128xf32> to vector<32x128xbf16>
    %c0_3 = arith.constant 0 : index
    %c0_4 = arith.constant 0 : index
    %4 = vector.load %arg3[%c0_3, %c0_4] : memref<32x128xbf16, #tpu.memory_space<vmem>>, vector<32x128xbf16>
    tpu.vector_store %arg3[%c0_3, %c0_4], %3 {strides = array<i32>} : memref<32x128xbf16, #tpu.memory_space<vmem>>, vector<32x128xbf16>,
    %cst_5 = arith.constant dense<0.000000e+00> : vector<128xf32>
    %5 = vector.multi_reduction <add>, %2, %cst_5 [0] : vector<32x128xf32> to vector<128xf32>
    %6 = vector.shape_cast %5 : vector<128xf32> to vector<1x128xf32>
    %c0_6 = arith.constant 0 : index
    %c0_7 = arith.constant 0 : index
    %c0_8 = arith.constant 0 : index
    %7 = vector.load %arg4[%c0_6, %c0_7, %c0_8] : memref<1x2x128xf32, #tpu.memory_space<vmem>>, vector<1x1x128xf32>
    %8 = vector.shape_cast %7 : vector<1x1x128xf32> to vector<1x128xf32>
    %9 = vector.shape_cast %6 : vector<1x128xf32> to vector<1x1x128xf32>
    tpu.vector_store %arg4[%c0_6, %c0_7, %c0_8], %9 {strides = array<i32>} : memref<1x2x128xf32, #tpu.memory_space<vmem>>, vector<1x1x128xf32>,
    %10 = arith.mulf %2, %2 : vector<32x128xf32>
    %cst_9 = arith.constant dense<0.000000e+00> : vector<128xf32>
    %11 = vector.multi_reduction <add>, %10, %cst_9 [0] : vector<32x128xf32> to vector<128xf32>
    %12 = vector.shape_cast %11 : vector<128xf32> to vector<1x128xf32>
    %c0_10 = arith.constant 0 : index
    %c1 = arith.constant 1 : index
    %c0_11 = arith.constant 0 : index
    %13 = vector.load %arg4[%c0_10, %c1, %c0_11] : memref<1x2x128xf32, #tpu.memory_space<vmem>>, vector<1x1x128xf32>
    %14 = vector.shape_cast %13 : vector<1x1x128xf32> to vector<1x128xf32>
    %15 = vector.shape_cast %12 : vector<1x128xf32> to vector<1x1x128xf32>
    tpu.vector_store %arg4[%c0_10, %c1, %c0_11], %15 {strides = array<i32>} : memref<1x2x128xf32, #tpu.memory_space<vmem>>, vector<1x1x128xf32>,
    return
  }
  func.func @transform_0(%arg0: i32) -> (i32, i32) {
    %c0_i32 = arith.constant 0 : i32
    %c0_i32_0 = arith.constant 0 : i32
    return %arg0, %c0_i32 : i32, i32
  }
  func.func @transform_1(%arg0: i32) -> (i32, i32) {
    %c0_i32 = arith.constant 0 : i32
    %c0_i32_0 = arith.constant 0 : i32
    %c0_i32_1 = arith.constant 0 : i32
    return %c0_i32, %c0_i32_0 : i32, i32
  }
  func.func @transform_2(%arg0: i32) -> (i32, i32) {
    %c0_i32 = arith.constant 0 : i32
    %c0_i32_0 = arith.constant 0 : i32
    return %arg0, %c0_i32 : i32, i32
  }
  func.func @transform_3(%arg0: i32) -> (i32, i32, i32) {
    %c0_i32 = arith.constant 0 : i32
    %c0_i32_0 = arith.constant 0 : i32
    %c0_i32_1 = arith.constant 0 : i32
    return %arg0, %c0_i32, %c0_i32_0 : i32, i32, i32
  }
}

module attributes {stable_mosaic.version = 11 : i64} {
  func.func @_mm_stats_kernel(%arg0: i32, %arg1: memref<128x288xbf16, #tpu.memory_space<vmem>>, %arg2: memref<288x128xbf16, #tpu.memory_space<vmem>>, %arg3: memref<128x128xbf16, #tpu.memory_space<vmem>>, %arg4: memref<1x2x128xf32, #tpu.memory_space<vmem>>) attributes {dimension_semantics = [#tpu.dimension_semantics<parallel>], iteration_bounds = array<i64: 1>, scalar_prefetch = 0 : i64, scratch_operands = 0 : i64, tpu.core_type = #tpu.core_type<tc>, window_params = [{transform_indices = @transform_0, window_bounds = array<i64: 128, 288>}, {pipeline_mode = #tpu.pipeline_mode<synchronous>, transform_indices = @transform_1, window_bounds = array<i64: 288, 128>}, {transform_indices = @transform_2, window_bounds = array<i64: 128, 128>}, {transform_indices = @transform_3, window_bounds = array<i64: 1, 2, 128>}]} {
    %c0 = arith.constant 0 : index
    %c0_0 = arith.constant 0 : index
    %0 = vector.load %arg1[%c0, %c0_0] : memref<128x288xbf16, #tpu.memory_space<vmem>>, vector<128x288xbf16>
    %c0_1 = arith.constant 0 : index
    %c0_2 = arith.constant 0 : index
    %1 = vector.load %arg2[%c0_1, %c0_2] : memref<288x128xbf16, #tpu.memory_space<vmem>>, vector<288x128xbf16>
    %cst = arith.constant dense<0.000000e+00> : vector<128x128xf32>
    %2 = tpu.matmul %0, %1, %cst {dimension_numbers = #tpu.dot_dimension_numbers<[1], [0], [0], [1], [0, 0, 1, 1], [], []>} : vector<128x288xbf16>, vector<288x128xbf16>, vector<128x128xf32> -> vector<128x128xf32>
    %3 = arith.truncf %2 : vector<128x128xf32> to vector<128x128xbf16>
    %c0_3 = arith.constant 0 : index
    %c0_4 = arith.constant 0 : index
    %4 = vector.load %arg3[%c0_3, %c0_4] : memref<128x128xbf16, #tpu.memory_space<vmem>>, vector<128x128xbf16>
    tpu.vector_store %arg3[%c0_3, %c0_4], %3 {strides = array<i32>} : memref<128x128xbf16, #tpu.memory_space<vmem>>, vector<128x128xbf16>,
    %cst_5 = arith.constant dense<0.000000e+00> : vector<128xf32>
    %5 = vector.multi_reduction <add>, %2, %cst_5 [0] : vector<128x128xf32> to vector<128xf32>
    %6 = vector.shape_cast %5 : vector<128xf32> to vector<1x128xf32>
    %c0_6 = arith.constant 0 : index
    %c0_7 = arith.constant 0 : index
    %c0_8 = arith.constant 0 : index
    %7 = vector.load %arg4[%c0_6, %c0_7, %c0_8] : memref<1x2x128xf32, #tpu.memory_space<vmem>>, vector<1x1x128xf32>
    %8 = vector.shape_cast %7 : vector<1x1x128xf32> to vector<1x128xf32>
    %9 = vector.shape_cast %6 : vector<1x128xf32> to vector<1x1x128xf32>
    tpu.vector_store %arg4[%c0_6, %c0_7, %c0_8], %9 {strides = array<i32>} : memref<1x2x128xf32, #tpu.memory_space<vmem>>, vector<1x1x128xf32>,
    %10 = arith.mulf %2, %2 : vector<128x128xf32>
    %cst_9 = arith.constant dense<0.000000e+00> : vector<128xf32>
    %11 = vector.multi_reduction <add>, %10, %cst_9 [0] : vector<128x128xf32> to vector<128xf32>
    %12 = vector.shape_cast %11 : vector<128xf32> to vector<1x128xf32>
    %c0_10 = arith.constant 0 : index
    %c1 = arith.constant 1 : index
    %c0_11 = arith.constant 0 : index
    %13 = vector.load %arg4[%c0_10, %c1, %c0_11] : memref<1x2x128xf32, #tpu.memory_space<vmem>>, vector<1x1x128xf32>
    %14 = vector.shape_cast %13 : vector<1x1x128xf32> to vector<1x128xf32>
    %15 = vector.shape_cast %12 : vector<1x128xf32> to vector<1x1x128xf32>
    tpu.vector_store %arg4[%c0_10, %c1, %c0_11], %15 {strides = array<i32>} : memref<1x2x128xf32, #tpu.memory_space<vmem>>, vector<1x1x128xf32>,
    return
  }
  func.func @transform_0(%arg0: i32) -> (i32, i32) {
    %c0_i32 = arith.constant 0 : i32
    %c0_i32_0 = arith.constant 0 : i32
    return %arg0, %c0_i32 : i32, i32
  }
  func.func @transform_1(%arg0: i32) -> (i32, i32) {
    %c0_i32 = arith.constant 0 : i32
    %c0_i32_0 = arith.constant 0 : i32
    %c0_i32_1 = arith.constant 0 : i32
    return %c0_i32, %c0_i32_0 : i32, i32
  }
  func.func @transform_2(%arg0: i32) -> (i32, i32) {
    %c0_i32 = arith.constant 0 : i32
    %c0_i32_0 = arith.constant 0 : i32
    return %arg0, %c0_i32 : i32, i32
  }
  func.func @transform_3(%arg0: i32) -> (i32, i32, i32) {
    %c0_i32 = arith.constant 0 : i32
    %c0_i32_0 = arith.constant 0 : i32
    %c0_i32_1 = arith.constant 0 : i32
    return %arg0, %c0_i32, %c0_i32_0 : i32, i32, i32
  }
}

module attributes {stable_mosaic.version = 11 : i64} {
  func.func @_scale_shift_act_kernel(%arg0: i32, %arg1: memref<128x128xbf16, #tpu.memory_space<vmem>>, %arg2: memref<1x128xf32, #tpu.memory_space<vmem>>, %arg3: memref<1x128xf32, #tpu.memory_space<vmem>>, %arg4: memref<128x128xbf16, #tpu.memory_space<vmem>>) attributes {dimension_semantics = [#tpu.dimension_semantics<parallel>], iteration_bounds = array<i64: 1>, scalar_prefetch = 0 : i64, scratch_operands = 0 : i64, tpu.core_type = #tpu.core_type<tc>, window_params = [{transform_indices = @transform_0, window_bounds = array<i64: 128, 128>}, {pipeline_mode = #tpu.pipeline_mode<synchronous>, transform_indices = @transform_1, window_bounds = array<i64: 1, 128>}, {pipeline_mode = #tpu.pipeline_mode<synchronous>, transform_indices = @transform_2, window_bounds = array<i64: 1, 128>}, {transform_indices = @transform_3, window_bounds = array<i64: 128, 128>}]} {
    %c0 = arith.constant 0 : index
    %c0_0 = arith.constant 0 : index
    %0 = vector.load %arg1[%c0, %c0_0] : memref<128x128xbf16, #tpu.memory_space<vmem>>, vector<128x128xbf16>
    %1 = arith.extf %0 : vector<128x128xbf16> to vector<128x128xf32>
    %c0_1 = arith.constant 0 : index
    %c0_2 = arith.constant 0 : index
    %2 = vector.load %arg2[%c0_1, %c0_2] : memref<1x128xf32, #tpu.memory_space<vmem>>, vector<1x128xf32>
    %3 = vector.broadcast %2 : vector<1x128xf32> to vector<128x128xf32>
    %4 = arith.mulf %1, %3 : vector<128x128xf32>
    %c0_3 = arith.constant 0 : index
    %c0_4 = arith.constant 0 : index
    %5 = vector.load %arg3[%c0_3, %c0_4] : memref<1x128xf32, #tpu.memory_space<vmem>>, vector<1x128xf32>
    %6 = vector.broadcast %5 : vector<1x128xf32> to vector<128x128xf32>
    %7 = arith.addf %4, %6 : vector<128x128xf32>
    %cst = arith.constant 0.000000e+00 : f32
    %8 = vector.broadcast %cst : f32 to vector<128x128xf32>
    %9 = arith.maximumf %7, %8 : vector<128x128xf32>
    %10 = arith.truncf %9 : vector<128x128xf32> to vector<128x128xbf16>
    %c0_5 = arith.constant 0 : index
    %c0_6 = arith.constant 0 : index
    %11 = vector.load %arg4[%c0_5, %c0_6] : memref<128x128xbf16, #tpu.memory_space<vmem>>, vector<128x128xbf16>
    tpu.vector_store %arg4[%c0_5, %c0_6], %10 {strides = array<i32>} : memref<128x128xbf16, #tpu.memory_space<vmem>>, vector<128x128xbf16>,
    return
  }
  func.func @transform_0(%arg0: i32) -> (i32, i32) {
    %c0_i32 = arith.constant 0 : i32
    %c0_i32_0 = arith.constant 0 : i32
    return %arg0, %c0_i32 : i32, i32
  }
  func.func @transform_1(%arg0: i32) -> (i32, i32) {
    %c0_i32 = arith.constant 0 : i32
    %c0_i32_0 = arith.constant 0 : i32
    %c0_i32_1 = arith.constant 0 : i32
    return %c0_i32, %c0_i32_0 : i32, i32
  }
  func.func @transform_2(%arg0: i32) -> (i32, i32) {
    %c0_i32 = arith.constant 0 : i32
    %c0_i32_0 = arith.constant 0 : i32
    %c0_i32_1 = arith.constant 0 : i32
    return %c0_i32, %c0_i32_0 : i32, i32
  }
  func.func @transform_3(%arg0: i32) -> (i32, i32) {
    %c0_i32 = arith.constant 0 : i32
    %c0_i32_0 = arith.constant 0 : i32
    return %arg0, %c0_i32 : i32, i32
  }
}

module attributes {stable_mosaic.version = 11 : i64} {
  func.func @_mm_stats_kernel(%arg0: i32, %arg1: memref<256x144xbf16, #tpu.memory_space<vmem>>, %arg2: memref<144x128xbf16, #tpu.memory_space<vmem>>, %arg3: memref<256x128xbf16, #tpu.memory_space<vmem>>, %arg4: memref<1x2x128xf32, #tpu.memory_space<vmem>>) attributes {dimension_semantics = [#tpu.dimension_semantics<parallel>], iteration_bounds = array<i64: 2>, scalar_prefetch = 0 : i64, scratch_operands = 0 : i64, tpu.core_type = #tpu.core_type<tc>, window_params = [{transform_indices = @transform_0, window_bounds = array<i64: 256, 144>}, {pipeline_mode = #tpu.pipeline_mode<synchronous>, transform_indices = @transform_1, window_bounds = array<i64: 144, 128>}, {transform_indices = @transform_2, window_bounds = array<i64: 256, 128>}, {transform_indices = @transform_3, window_bounds = array<i64: 1, 2, 128>}]} {
    %c0 = arith.constant 0 : index
    %c0_0 = arith.constant 0 : index
    %0 = vector.load %arg1[%c0, %c0_0] : memref<256x144xbf16, #tpu.memory_space<vmem>>, vector<256x144xbf16>
    %c0_1 = arith.constant 0 : index
    %c0_2 = arith.constant 0 : index
    %1 = vector.load %arg2[%c0_1, %c0_2] : memref<144x128xbf16, #tpu.memory_space<vmem>>, vector<144x128xbf16>
    %cst = arith.constant dense<0.000000e+00> : vector<256x128xf32>
    %2 = tpu.matmul %0, %1, %cst {dimension_numbers = #tpu.dot_dimension_numbers<[1], [0], [0], [1], [0, 0, 1, 1], [], []>} : vector<256x144xbf16>, vector<144x128xbf16>, vector<256x128xf32> -> vector<256x128xf32>
    %3 = arith.truncf %2 : vector<256x128xf32> to vector<256x128xbf16>
    %c0_3 = arith.constant 0 : index
    %c0_4 = arith.constant 0 : index
    %4 = vector.load %arg3[%c0_3, %c0_4] : memref<256x128xbf16, #tpu.memory_space<vmem>>, vector<256x128xbf16>
    tpu.vector_store %arg3[%c0_3, %c0_4], %3 {strides = array<i32>} : memref<256x128xbf16, #tpu.memory_space<vmem>>, vector<256x128xbf16>,
    %cst_5 = arith.constant dense<0.000000e+00> : vector<128xf32>
    %5 = vector.multi_reduction <add>, %2, %cst_5 [0] : vector<256x128xf32> to vector<128xf32>
    %6 = vector.shape_cast %5 : vector<128xf32> to vector<1x128xf32>
    %c0_6 = arith.constant 0 : index
    %c0_7 = arith.constant 0 : index
    %c0_8 = arith.constant 0 : index
    %7 = vector.load %arg4[%c0_6, %c0_7, %c0_8] : memref<1x2x128xf32, #tpu.memory_space<vmem>>, vector<1x1x128xf32>
    %8 = vector.shape_cast %7 : vector<1x1x128xf32> to vector<1x128xf32>
    %9 = vector.shape_cast %6 : vector<1x128xf32> to vector<1x1x128xf32>
    tpu.vector_store %arg4[%c0_6, %c0_7, %c0_8], %9 {strides = array<i32>} : memref<1x2x128xf32, #tpu.memory_space<vmem>>, vector<1x1x128xf32>,
    %10 = arith.mulf %2, %2 : vector<256x128xf32>
    %cst_9 = arith.constant dense<0.000000e+00> : vector<128xf32>
    %11 = vector.multi_reduction <add>, %10, %cst_9 [0] : vector<256x128xf32> to vector<128xf32>
    %12 = vector.shape_cast %11 : vector<128xf32> to vector<1x128xf32>
    %c0_10 = arith.constant 0 : index
    %c1 = arith.constant 1 : index
    %c0_11 = arith.constant 0 : index
    %13 = vector.load %arg4[%c0_10, %c1, %c0_11] : memref<1x2x128xf32, #tpu.memory_space<vmem>>, vector<1x1x128xf32>
    %14 = vector.shape_cast %13 : vector<1x1x128xf32> to vector<1x128xf32>
    %15 = vector.shape_cast %12 : vector<1x128xf32> to vector<1x1x128xf32>
    tpu.vector_store %arg4[%c0_10, %c1, %c0_11], %15 {strides = array<i32>} : memref<1x2x128xf32, #tpu.memory_space<vmem>>, vector<1x1x128xf32>,
    return
  }
  func.func @transform_0(%arg0: i32) -> (i32, i32) {
    %c0_i32 = arith.constant 0 : i32
    %c0_i32_0 = arith.constant 0 : i32
    return %arg0, %c0_i32 : i32, i32
  }
  func.func @transform_1(%arg0: i32) -> (i32, i32) {
    %c0_i32 = arith.constant 0 : i32
    %c0_i32_0 = arith.constant 0 : i32
    %c0_i32_1 = arith.constant 0 : i32
    return %c0_i32, %c0_i32_0 : i32, i32
  }
  func.func @transform_2(%arg0: i32) -> (i32, i32) {
    %c0_i32 = arith.constant 0 : i32
    %c0_i32_0 = arith.constant 0 : i32
    return %arg0, %c0_i32 : i32, i32
  }
  func.func @transform_3(%arg0: i32) -> (i32, i32, i32) {
    %c0_i32 = arith.constant 0 : i32
    %c0_i32_0 = arith.constant 0 : i32
    %c0_i32_1 = arith.constant 0 : i32
    return %arg0, %c0_i32, %c0_i32_0 : i32, i32, i32
  }
}

module attributes {stable_mosaic.version = 11 : i64} {
  func.func @_scale_shift_act_kernel(%arg0: i32, %arg1: memref<256x128xbf16, #tpu.memory_space<vmem>>, %arg2: memref<1x128xf32, #tpu.memory_space<vmem>>, %arg3: memref<1x128xf32, #tpu.memory_space<vmem>>, %arg4: memref<256x128xbf16, #tpu.memory_space<vmem>>) attributes {dimension_semantics = [#tpu.dimension_semantics<parallel>], iteration_bounds = array<i64: 2>, scalar_prefetch = 0 : i64, scratch_operands = 0 : i64, tpu.core_type = #tpu.core_type<tc>, window_params = [{transform_indices = @transform_0, window_bounds = array<i64: 256, 128>}, {pipeline_mode = #tpu.pipeline_mode<synchronous>, transform_indices = @transform_1, window_bounds = array<i64: 1, 128>}, {pipeline_mode = #tpu.pipeline_mode<synchronous>, transform_indices = @transform_2, window_bounds = array<i64: 1, 128>}, {transform_indices = @transform_3, window_bounds = array<i64: 256, 128>}]} {
    %c0 = arith.constant 0 : index
    %c0_0 = arith.constant 0 : index
    %0 = vector.load %arg1[%c0, %c0_0] : memref<256x128xbf16, #tpu.memory_space<vmem>>, vector<256x128xbf16>
    %1 = arith.extf %0 : vector<256x128xbf16> to vector<256x128xf32>
    %c0_1 = arith.constant 0 : index
    %c0_2 = arith.constant 0 : index
    %2 = vector.load %arg2[%c0_1, %c0_2] : memref<1x128xf32, #tpu.memory_space<vmem>>, vector<1x128xf32>
    %3 = vector.broadcast %2 : vector<1x128xf32> to vector<256x128xf32>
    %4 = arith.mulf %1, %3 : vector<256x128xf32>
    %c0_3 = arith.constant 0 : index
    %c0_4 = arith.constant 0 : index
    %5 = vector.load %arg3[%c0_3, %c0_4] : memref<1x128xf32, #tpu.memory_space<vmem>>, vector<1x128xf32>
    %6 = vector.broadcast %5 : vector<1x128xf32> to vector<256x128xf32>
    %7 = arith.addf %4, %6 : vector<256x128xf32>
    %cst = arith.constant 0.000000e+00 : f32
    %8 = vector.broadcast %cst : f32 to vector<256x128xf32>
    %9 = arith.maximumf %7, %8 : vector<256x128xf32>
    %10 = arith.truncf %9 : vector<256x128xf32> to vector<256x128xbf16>
    %c0_5 = arith.constant 0 : index
    %c0_6 = arith.constant 0 : index
    %11 = vector.load %arg4[%c0_5, %c0_6] : memref<256x128xbf16, #tpu.memory_space<vmem>>, vector<256x128xbf16>
    tpu.vector_store %arg4[%c0_5, %c0_6], %10 {strides = array<i32>} : memref<256x128xbf16, #tpu.memory_space<vmem>>, vector<256x128xbf16>,
    return
  }
  func.func @transform_0(%arg0: i32) -> (i32, i32) {
    %c0_i32 = arith.constant 0 : i32
    %c0_i32_0 = arith.constant 0 : i32
    return %arg0, %c0_i32 : i32, i32
  }
  func.func @transform_1(%arg0: i32) -> (i32, i32) {
    %c0_i32 = arith.constant 0 : i32
    %c0_i32_0 = arith.constant 0 : i32
    %c0_i32_1 = arith.constant 0 : i32
    return %c0_i32, %c0_i32_0 : i32, i32
  }
  func.func @transform_2(%arg0: i32) -> (i32, i32) {
    %c0_i32 = arith.constant 0 : i32
    %c0_i32_0 = arith.constant 0 : i32
    %c0_i32_1 = arith.constant 0 : i32
    return %c0_i32, %c0_i32_0 : i32, i32
  }
  func.func @transform_3(%arg0: i32) -> (i32, i32) {
    %c0_i32 = arith.constant 0 : i32
    %c0_i32_0 = arith.constant 0 : i32
    return %arg0, %c0_i32 : i32, i32
  }
}

module attributes {stable_mosaic.version = 11 : i64} {
  func.func @_mm_act_kernel(%arg0: i32, %arg1: memref<512x72xbf16, #tpu.memory_space<vmem>>, %arg2: memref<72x128xbf16, #tpu.memory_space<vmem>>, %arg3: memref<512x128xbf16, #tpu.memory_space<vmem>>) attributes {dimension_semantics = [#tpu.dimension_semantics<parallel>], iteration_bounds = array<i64: 4>, scalar_prefetch = 0 : i64, scratch_operands = 0 : i64, tpu.core_type = #tpu.core_type<tc>, window_params = [{transform_indices = @transform_0, window_bounds = array<i64: 512, 72>}, {pipeline_mode = #tpu.pipeline_mode<synchronous>, transform_indices = @transform_1, window_bounds = array<i64: 72, 128>}, {transform_indices = @transform_2, window_bounds = array<i64: 512, 128>}]} {
    %c0 = arith.constant 0 : index
    %c0_0 = arith.constant 0 : index
    %0 = vector.load %arg1[%c0, %c0_0] : memref<512x72xbf16, #tpu.memory_space<vmem>>, vector<512x72xbf16>
    %c0_1 = arith.constant 0 : index
    %c0_2 = arith.constant 0 : index
    %1 = vector.load %arg2[%c0_1, %c0_2] : memref<72x128xbf16, #tpu.memory_space<vmem>>, vector<72x128xbf16>
    %cst = arith.constant dense<0.000000e+00> : vector<512x128xf32>
    %2 = tpu.matmul %0, %1, %cst {dimension_numbers = #tpu.dot_dimension_numbers<[1], [0], [0], [1], [0, 0, 1, 1], [], []>} : vector<512x72xbf16>, vector<72x128xbf16>, vector<512x128xf32> -> vector<512x128xf32>
    %3 = math.tanh %2 : vector<512x128xf32>
    %4 = arith.truncf %3 : vector<512x128xf32> to vector<512x128xbf16>
    %c0_3 = arith.constant 0 : index
    %c0_4 = arith.constant 0 : index
    %5 = vector.load %arg3[%c0_3, %c0_4] : memref<512x128xbf16, #tpu.memory_space<vmem>>, vector<512x128xbf16>
    tpu.vector_store %arg3[%c0_3, %c0_4], %4 {strides = array<i32>} : memref<512x128xbf16, #tpu.memory_space<vmem>>, vector<512x128xbf16>,
    return
  }
  func.func @transform_0(%arg0: i32) -> (i32, i32) {
    %c0_i32 = arith.constant 0 : i32
    %c0_i32_0 = arith.constant 0 : i32
    return %arg0, %c0_i32 : i32, i32
  }
  func.func @transform_1(%arg0: i32) -> (i32, i32) {
    %c0_i32 = arith.constant 0 : i32
    %c0_i32_0 = arith.constant 0 : i32
    %c0_i32_1 = arith.constant 0 : i32
    return %c0_i32, %c0_i32_0 : i32, i32
  }
  func.func @transform_2(%arg0: i32) -> (i32, i32) {
    %c0_i32 = arith.constant 0 : i32
    %c0_i32_0 = arith.constant 0 : i32
    return %arg0, %c0_i32 : i32, i32
  }
}

</mosaic_0001>

<llo_original>
// kernel: _generator_forward.10
$region0: #{_generator_forward.10}
  #allocation0 [shape = 'u32[]', space=smem, size = 0x4, offset = 0x4, fixed_abs, tag = 'smem constant byte address 0x4 - core index']
  #allocation1 [shape = 'u32[144,128]{1,0:T(1,128)}', space=vmem, size = 0x12000, scoped, tag = 'internal scratch']
  %s0 = inlined_call_operand.vmem [shape: bf16[32,128], index: 0, kind: input, shape index: {}]
  %s1 = inlined_call_operand.vmem [shape: f32[1,128], index: 1, kind: input, shape index: {}]
  %s2 = inlined_call_operand.vmem [shape: f32[1,128], index: 2, kind: input, shape index: {}]
  %s3 = inlined_call_operand.vmem [shape: bf16[32,128], index: 3, kind: output, shape index: {}]
  %s4 = sld [smem:[#allocation0]]
  $region22: #{_generator_forward.10} parent=0
    _
  %s6 = ssub.s32 1, %s4
  %s7 = scalar_select 0, %s6, %s4
  // Predicated region
  $region2: #{_generator_forward.10} parent=0 // pred_check
    _
  $region3: #{_generator_forward.10} parent=0 // pred_check_branch
    %9 = sbr.rel (0) target = $region5
  $region4: #{_generator_forward.10} parent=0 // pred_region
    _
  $region5: #{_generator_forward.10} parent=0 // pred_fallthru
    _
  // Predicated region
  $region6: #{_generator_forward.10} parent=0 // pred_check
    _
  $region7: #{_generator_forward.10} parent=0 // pred_check_branch
    %11 = sbr.rel (0) target = $region9
  $region8: #{_generator_forward.10} parent=0 // pred_region
    _
  $region9: #{_generator_forward.10} parent=0 // pred_fallthru
    _
  // Predicated region
  $region10: #{_generator_forward.10} parent=0 // pred_check
    _
  $region11: #{_generator_forward.10} parent=0 // pred_check_branch
    %13 = sbr.rel (0) target = $region13
  $region12: #{_generator_forward.10} parent=0 // pred_region
    _
  $region13: #{_generator_forward.10} parent=0 // pred_fallthru
    _
  %v14 = vld [vmem:[%s0] sm:$0xf]
  %v15 = vld [vmem:[%s0 + $0x4] sm:$0xf]
  %v16 = vld [vmem:[%s0 + $0x8] sm:$0xf]
  %v17 = vld [vmem:[%s0 + $0xc] sm:$0xf]
  %v18 = vunpack.c.l.bf16 %v14
  %v19 = vunpack.c.l.bf16 %v15
  %v20 = vunpack.c.l.bf16 %v16
  %v21 = vunpack.c.l.bf16 %v17
  %v22 = vld [vmem:[%s1] sm:$0x1]
  %v24 = vlaneseq
  %v25 = vshrl.u32 %v24, 7
  %v26 = vsub.s32 0, %v25
  %v27 = vrot.slane %v22, %v26
  %v29 = vmul.f32 %v18, %v27
  %v30 = vmul.f32 %v19, %v27
  %v31 = vmul.f32 %v20, %v27
  %v32 = vmul.f32 %v21, %v27
  %v33 = vld [vmem:[%s2] sm:$0x1]
  %v35 = vlaneseq
  %v36 = vshrl.u32 %v35, 7
  %v37 = vsub.s32 0, %v36
  %v38 = vrot.slane %v33, %v37
  %v40 = vadd.f32 %v29, %v38
  %v41 = vadd.f32 %v30, %v38
  %v42 = vadd.f32 %v31, %v38
  %v43 = vadd.f32 %v32, %v38
  %v44 = vmax.f32 %v40, 0.0
  %v45 = vmax.f32 %v41, 0.0
  %v46 = vmax.f32 %v42, 0.0
  %v47 = vmax.f32 %v43, 0.0
  %v48 = vpack.c.bf16 %v45, %v44
  %v49 = vpack.c.bf16 %v47, %v46
  %v52 = vunpack.c.l.b16 %v48
  %v53 = vunpack.c.h.b16 %v48
  %v54 = vunpack.c.l.b16 %v49
  %v55 = vunpack.c.h.b16 %v49
  %v56 = vpack.c.b16 %v52, %v52
  %v57 = vpack.c.b16 %v53, %v53
  %v58 = vpack.c.b16 %v54, %v54
  %v59 = vpack.c.b16 %v55, %v55
  %64 = vst [vmem:[%s3] sm:$0xf] %v56
  %65 = vst [vmem:[%s3 + $0x4] sm:$0xf] %v57
  %66 = vst [vmem:[%s3 + $0x8] sm:$0xf] %v58
  %67 = vst [vmem:[%s3 + $0xc] sm:$0xf] %v59
  // Predicated region
  $region14: #{_generator_forward.10} parent=0 // pred_check
    _
  $region15: #{_generator_forward.10} parent=0 // pred_check_branch
    %69 = sbr.rel (0) target = $region17
  $region16: #{_generator_forward.10} parent=0 // pred_region
    _
  $region17: #{_generator_forward.10} parent=0 // pred_fallthru
    _
  // Predicated region
  $region18: #{_generator_forward.10} parent=0 // pred_check
    _
  $region19: #{_generator_forward.10} parent=0 // pred_check_branch
    %71 = sbr.rel (0) target = $region21
  $region20: #{_generator_forward.10} parent=0 // pred_region
    _
  $region21: #{_generator_forward.10} parent=0 // pred_fallthru
    _

// kernel: _generator_forward.9
$region0: #{_generator_forward.9}
  #allocation0 [shape = 'u32[]', space=smem, size = 0x4, offset = 0x4, fixed_abs, tag = 'smem constant byte address 0x4 - core index']
  #allocation1 [shape = 'u32[144,128]{1,0:T(1,128)}', space=vmem, size = 0x12000, scoped, tag = 'internal scratch']
  %s0 = inlined_call_operand.vmem [shape: bf16[32,256], index: 0, kind: input, shape index: {}]
  %s1 = inlined_call_operand.vmem [shape: bf16[256,128], index: 1, kind: input, shape index: {}]
  %s2 = inlined_call_operand.vmem [shape: bf16[32,128], index: 2, kind: output, shape index: {0}]
  %s3 = inlined_call_operand.vmem [shape: f32[1,2,128], index: 3, kind: output, shape index: {1}]
  %4 = xla_tuple %s2, %s3
  %s5 = sld [smem:[#allocation0]]
  $region26: #{_generator_forward.9} parent=0
    _
  %s7 = ssub.s32 1, %s5
  %s8 = scalar_select 0, %s7, %s5
  // Predicated region
  $region2: #{_generator_forward.9} parent=0 // pred_check
    _
  $region3: #{_generator_forward.9} parent=0 // pred_check_branch
    %10 = sbr.rel (0) target = $region5
  $region4: #{_generator_forward.9} parent=0 // pred_region
    _
  $region5: #{_generator_forward.9} parent=0 // pred_fallthru
    _
  // Predicated region
  $region6: #{_generator_forward.9} parent=0 // pred_check
    _
  $region7: #{_generator_forward.9} parent=0 // pred_check_branch
    %12 = sbr.rel (0) target = $region9
  $region8: #{_generator_forward.9} parent=0 // pred_region
    _
  $region9: #{_generator_forward.9} parent=0 // pred_fallthru
    _
  %v14 = vld [vmem:[%s0] sm:$0xff]
  %v15 = vld [vmem:[%s0 + $0x8] sm:$0xff]
  %v16 = vld [vmem:[%s0 + $0x10] sm:$0xff]
  %v17 = vld [vmem:[%s0 + $0x18] sm:$0xff]
  %v18 = vld [vmem:[%s1] sm:$0xf]
  %v19 = vld [vmem:[%s1 + $0x4] sm:$0xf]
  %v20 = vld [vmem:[%s1 + $0x8] sm:$0xf]
  %v21 = vld [vmem:[%s1 + $0xc] sm:$0xf]
  %v22 = vld [vmem:[%s1 + $0x10] sm:$0xf]
  %v23 = vld [vmem:[%s1 + $0x14] sm:$0xf]
  %v24 = vld [vmem:[%s1 + $0x18] sm:$0xf]
  %v25 = vld [vmem:[%s1 + $0x1c] sm:$0xf]
  %v26 = vld [vmem:[%s1 + $0x20] sm:$0xf]
  %v27 = vld [vmem:[%s1 + $0x24] sm:$0xf]
  %v28 = vld [vmem:[%s1 + $0x28] sm:$0xf]
  %v29 = vld [vmem:[%s1 + $0x2c] sm:$0xf]
  %v30 = vld [vmem:[%s1 + $0x30] sm:$0xf]
  %v31 = vld [vmem:[%s1 + $0x34] sm:$0xf]
  %v32 = vld [vmem:[%s1 + $0x38] sm:$0xf]
  %v33 = vld [vmem:[%s1 + $0x3c] sm:$0xf]
  %v34 = vld [vmem:[%s1 + $0x40] sm:$0xf]
  %v35 = vld [vmem:[%s1 + $0x44] sm:$0xf]
  %v36 = vld [vmem:[%s1 + $0x48] sm:$0xf]
  %v37 = vld [vmem:[%s1 + $0x4c] sm:$0xf]
  %v38 = vld [vmem:[%s1 + $0x50] sm:$0xf]
  %v39 = vld [vmem:[%s1 + $0x54] sm:$0xf]
  %v40 = vld [vmem:[%s1 + $0x58] sm:$0xf]
  %v41 = vld [vmem:[%s1 + $0x5c] sm:$0xf]
  %v42 = vld [vmem:[%s1 + $0x60] sm:$0xf]
  %v43 = vld [vmem:[%s1 + $0x64] sm:$0xf]
  %v44 = vld [vmem:[%s1 + $0x68] sm:$0xf]
  %v45 = vld [vmem:[%s1 + $0x6c] sm:$0xf]
  %v46 = vld [vmem:[%s1 + $0x70] sm:$0xf]
  %v47 = vld [vmem:[%s1 + $0x74] sm:$0xf]
  %v48 = vld [vmem:[%s1 + $0x78] sm:$0xf]
  %v49 = vld [vmem:[%s1 + $0x7c] sm:$0xf]
  %v54 = vunpack.c.l.b16 %v14
  %v55 = vunpack.c.h.b16 %v14
  %v56 = vunpack.c.l.b16 %v15
  %v57 = vunpack.c.h.b16 %v15
  %v58 = vunpack.c.l.b16 %v16
  %v59 = vunpack.c.h.b16 %v16
  %v60 = vunpack.c.l.b16 %v17
  %v61 = vunpack.c.h.b16 %v17
  %v62 = vpack.c.b16 %v56, %v54
  %v63 = vpack.c.b16 %v57, %v55
  %v64 = vpack.c.b16 %v60, %v58
  %v65 = vpack.c.b16 %v61, %v59
  %v102 = vunpack.c.l.b16 %v18
  %v103 = vunpack.c.l.b16 %v19
  %v104 = vunpack.c.l.b16 %v20
  %v105 = vunpack.c.l.b16 %v21
  %v106 = vunpack.c.l.b16 %v22
  %v107 = vunpack.c.l.b16 %v23
  %v108 = vunpack.c.l.b16 %v24
  %v109 = vunpack.c.l.b16 %v25
  %v110 = vunpack.c.l.b16 %v26
  %v111 = vunpack.c.l.b16 %v27
  %v112 = vunpack.c.l.b16 %v28
  %v113 = vunpack.c.l.b16 %v29
  %v114 = vunpack.c.l.b16 %v30
  %v115 = vunpack.c.l.b16 %v31
  %v116 = vunpack.c.l.b16 %v32
  %v117 = vunpack.c.l.b16 %v33
  %v118 = vunpack.c.l.b16 %v34
  %v119 = vunpack.c.l.b16 %v35
  %v120 = vunpack.c.l.b16 %v36
  %v121 = vunpack.c.l.b16 %v37
  %v122 = vunpack.c.l.b16 %v38
  %v123 = vunpack.c.l.b16 %v39
  %v124 = vunpack.c.l.b16 %v40
  %v125 = vunpack.c.l.b16 %v41
  %v126 = vunpack.c.l.b16 %v42
  %v127 = vunpack.c.l.b16 %v43
  %v128 = vunpack.c.l.b16 %v44
  %v129 = vunpack.c.l.b16 %v45
  %v130 = vunpack.c.l.b16 %v46
  %v131 = vunpack.c.l.b16 %v47
  %v132 = vunpack.c.l.b16 %v48
  %v133 = vunpack.c.l.b16 %v49
  %v134 = vpack.c.b16 %v103, %v102
  %v135 = vpack.c.b16 %v105, %v104
  %v136 = vpack.c.b16 %v107, %v106
  %v137 = vpack.c.b16 %v109, %v108
  %v138 = vpack.c.b16 %v111, %v110
  %v139 = vpack.c.b16 %v113, %v112
  %v140 = vpack.c.b16 %v115, %v114
  %v141 = vpack.c.b16 %v117, %v116
  %v142 = vpack.c.b16 %v119, %v118
  %v143 = vpack.c.b16 %v121, %v120
  %v144 = vpack.c.b16 %v123, %v122
  %v145 = vpack.c.b16 %v125, %v124
  %v146 = vpack.c.b16 %v127, %v126
  %v147 = vpack.c.b16 %v129, %v128
  %v148 = vpack.c.b16 %v131, %v130
  %v149 = vpack.c.b16 %v133, %v132
  %166 = vmatprep.subr.bf16.mxu0 0
  %167 = vmatpush1.bf16.msra.mxu0 %v134
  %168 = vmatprep.subr.bf16.mxu0 0
  %169 = vmatpush1.bf16.msra.mxu0 %v135
  %170 = vmatprep.subr.bf16.mxu0 0
  %171 = vmatpush1.bf16.msra.mxu0 %v136
  %172 = vmatprep.subr.bf16.mxu0 0
  %173 = vmatpush1.bf16.msra.mxu0 %v137
  %174 = vmatprep.subr.bf16.mxu0 0
  %175 = vmatpush1.bf16.msra.mxu0 %v138
  %176 = vmatprep.subr.bf16.mxu0 0
  %177 = vmatpush1.bf16.msra.mxu0 %v139
  %178 = vmatprep.subr.bf16.mxu0 0
  %179 = vmatpush1.bf16.msra.mxu0 %v140
  %180 = vmatprep.subr.bf16.mxu0 0
  %181 = vmatpush1.bf16.msra.mxu0 %v141
  %182 = vmatprep.subr.bf16.mxu0 0
  %183 = vmatpush1.bf16.msra.mxu0 %v142
  %184 = vmatprep.subr.bf16.mxu0 0
  %185 = vmatpush1.bf16.msra.mxu0 %v143
  %186 = vmatprep.subr.bf16.mxu0 0
  %187 = vmatpush1.bf16.msra.mxu0 %v144
  %188 = vmatprep.subr.bf16.mxu0 0
  %189 = vmatpush1.bf16.msra.mxu0 %v145
  %190 = vmatprep.subr.bf16.mxu0 0
  %191 = vmatpush1.bf16.msra.mxu0 %v146
  %192 = vmatprep.subr.bf16.mxu0 0
  %193 = vmatpush1.bf16.msra.mxu0 %v147
  %194 = vmatprep.subr.bf16.mxu0 0
  %195 = vmatpush1.bf16.msra.mxu0 %v148
  %196 = vmatprep.subr.bf16.mxu0 0
  %197 = vmatpush1.bf16.msra.mxu0 %v149
  %198 = vmatprep.mubr.bf16.mxu0 %v63
  %199 = vmatmul.mubr.bf16.gmra.mrb[0].mxu0 %v62
  %v200 = vpop.f32.mrb[0].mxu0
  %v201 = vadd.f32 0.0, %v200
  %v202 = vpop.f32.mrb[0].mxu0
  %v203 = vpop.f32.mrb[0].mxu0
  %v204 = vadd.f32 0.0, %v203
  %v205 = vpop.f32.mrb[0].mxu0
  %206 = vmatprep.mubr.bf16.mxu0 %v65
  %207 = vmatmul.mubr.bf16.gmra.mrb[0].mxu0 %v64
  %v208 = vpop.f32.mrb[0].mxu0
  %v209 = vadd.f32 0.0, %v208
  %v210 = vpop.f32.mrb[0].mxu0
  %v211 = vpop.f32.mrb[0].mxu0
  %v212 = vadd.f32 0.0, %v211
  %v213 = vpop.f32.mrb[0].mxu0
  %214 = vdwg.mxu0
  %v215 = vpack.c.bf16 %v204, %v201
  %v216 = vpack.c.bf16 %v212, %v209
  %v219 = vunpack.c.l.b16 %v215
  %v220 = vunpack.c.h.b16 %v215
  %v221 = vunpack.c.l.b16 %v216
  %v222 = vunpack.c.h.b16 %v216
  %v223 = vpack.c.b16 %v219, %v219
  %v224 = vpack.c.b16 %v220, %v220
  %v225 = vpack.c.b16 %v221, %v221
  %v226 = vpack.c.b16 %v222, %v222
  %231 = vst [vmem:[%s2] sm:$0xf] %v223
  %232 = vst [vmem:[%s2 + $0x4] sm:$0xf] %v224
  %233 = vst [vmem:[%s2 + $0x8] sm:$0xf] %v225
  %234 = vst [vmem:[%s2 + $0xc] sm:$0xf] %v226
  %v235 = vadd.f32 %v201, %v204
  %v236 = vadd.f32 %v235, %v209
  %v237 = vadd.f32 %v236, %v212
  %v238 = vrot.slane %v237, 4
  %v239 = vadd.f32 %v237, %v238
  %v240 = vrot.slane %v239, 2
  %v241 = vadd.f32 %v239, %v240
  %v242 = vrot.slane %v241, 1
  %v243 = vadd.f32 %v241, %v242
  %244 = vst [vmem:[%s3] sm:$0x1] %v243
  %v245 = vmul.f32 %v201, %v201
  %v246 = vmul.f32 %v204, %v204
  %v247 = vmul.f32 %v209, %v209
  %v248 = vmul.f32 %v212, %v212
  %v249 = vadd.f32 %v245, %v246
  %v250 = vadd.f32 %v249, %v247
  %v251 = vadd.f32 %v250, %v248
  %v252 = vrot.slane %v251, 4
  %v253 = vadd.f32 %v251, %v252
  %v254 = vrot.slane %v253, 2
  %v255 = vadd.f32 %v253, %v254
  %v256 = vrot.slane %v255, 1
  %v257 = vadd.f32 %v255, %v256
  %258 = vst [vmem:[%s3 + $0x1] sm:$0x1] %v257
  // Predicated region
  $region10: #{_generator_forward.9} parent=0 // pred_check
    _
  $region11: #{_generator_forward.9} parent=0 // pred_check_branch
    %260 = sbr.rel (0) target = $region13
  $region12: #{_generator_forward.9} parent=0 // pred_region
    _
  $region13: #{_generator_forward.9} parent=0 // pred_fallthru
    _
  // Predicated region
  $region14: #{_generator_forward.9} parent=0 // pred_check
    _
  $region15: #{_generator_forward.9} parent=0 // pred_check_branch
    %262 = sbr.rel (0) target = $region17
  $region16: #{_generator_forward.9} parent=0 // pred_region
    _
  $region17: #{_generator_forward.9} parent=0 // pred_fallthru
    _
  // Predicated region
  $region18: #{_generator_forward.9} parent=0 // pred_check
    _
  $region19: #{_generator_forward.9} parent=0 // pred_check_branch
    %264 = sbr.rel (0) target = $region21
  $region20: #{_generator_forward.9} parent=0 // pred_region
    _
  $region21: #{_generator_forward.9} parent=0 // pred_fallthru
    _
  // Predicated region
  $region22: #{_generator_forward.9} parent=0 // pred_check
    _
  $region23: #{_generator_forward.9} parent=0 // pred_check_branch
    %266 = sbr.rel (0) target = $region25
  $region24: #{_generator_forward.9} parent=0 // pred_region
    _
  $region25: #{_generator_forward.9} parent=0 // pred_fallthru
    _

// kernel: tile.38
$region0: #{tile.38}
  #allocation0 [shape = 's32[1]{0}', space=sflag, size = 0x4, scoped, tag = 'scoped memory for tile.38']
  %s0 = inlined_call_operand.vmem [shape: f32[32], index: 0, kind: input, shape index: {}]
  %s1 = inlined_call_operand.vmem [shape: f32[4,32], index: 1, kind: output, shape index: {}]
  // Predicated region
  $region2: #{tile.38} parent=0 // pred_check
    _
  $region3: #{tile.38} parent=0 // pred_check_branch
    %3 = sbr.rel (0) target = $region5
  $region4: #{tile.38} parent=0 // pred_region
    _
  $region5: #{tile.38} parent=0 // pred_fallthru
    _
  %v4 = vld [vmem:[%s0] ss:$0 sm:$0xff]
  %5 = vst [vmem:[%s1] sm:$0xf] %v4

// kernel: _generator_forward.11
$region0: #{_generator_forward.11}
  #allocation0 [shape = 'u32[]', space=smem, size = 0x4, offset = 0x4, fixed_abs, tag = 'smem constant byte address 0x4 - core index']
  #allocation1 [shape = 'u32[144,128]{1,0:T(1,128)}', space=vmem, size = 0x12000, scoped, tag = 'internal scratch']
  %s0 = inlined_call_operand.vmem [shape: bf16[32,576], index: 0, kind: input, shape index: {}]
  %s1 = inlined_call_operand.vmem [shape: bf16[576,128], index: 1, kind: input, shape index: {}]
  %s2 = inlined_call_operand.vmem [shape: bf16[32,128], index: 2, kind: output, shape index: {0}]
  %s3 = inlined_call_operand.vmem [shape: f32[1,2,128], index: 3, kind: output, shape index: {1}]
  %4 = xla_tuple %s2, %s3
  %s5 = sld [smem:[#allocation0]]
  $region26: #{_generator_forward.11} parent=0
    _
  %s7 = ssub.s32 1, %s5
  %s8 = scalar_select 0, %s7, %s5
  // Predicated region
  $region2: #{_generator_forward.11} parent=0 // pred_check
    _
  $region3: #{_generator_forward.11} parent=0 // pred_check_branch
    %10 = sbr.rel (0) target = $region5
  $region4: #{_generator_forward.11} parent=0 // pred_region
    _
  $region5: #{_generator_forward.11} parent=0 // pred_fallthru
    _
  // Predicated region
  $region6: #{_generator_forward.11} parent=0 // pred_check
    _
  $region7: #{_generator_forward.11} parent=0 // pred_check_branch
    %12 = sbr.rel (0) target = $region9
  $region8: #{_generator_forward.11} parent=0 // pred_region
    _
  $region9: #{_generator_forward.11} parent=0 // pred_fallthru
    _
  %v14 = vld [vmem:[%s0] sm:$0xff]
  %v15 = vld [vmem:[%s0 + $0x8] sm:$0xff]
  %v16 = vld [vmem:[%s0 + $0x10] sm:$0xf]
  %v17 = vld [vmem:[%s0 + $0x14] sm:$0xff]
  %v18 = vld [vmem:[%s0 + $0x1c] sm:$0xff]
  %v19 = vld [vmem:[%s0 + $0x24] sm:$0xf]
  %v20 = vld [vmem:[%s0 + $0x28] sm:$0xff]
  %v21 = vld [vmem:[%s0 + $0x30] sm:$0xff]
  %v22 = vld [vmem:[%s0 + $0x38] sm:$0xf]
  %v23 = vld [vmem:[%s0 + $0x3c] sm:$0xff]
  %v24 = vld [vmem:[%s0 + $0x44] sm:$0xff]
  %v25 = vld [vmem:[%s0 + $0x4c] sm:$0xf]
  %v26 = vld [vmem:[%s1] sm:$0xf]
  %v27 = vld [vmem:[%s1 + $0x4] sm:$0xf]
  %v28 = vld [vmem:[%s1 + $0x8] sm:$0xf]
  %v29 = vld [vmem:[%s1 + $0xc] sm:$0xf]
  %v30 = vld [vmem:[%s1 + $0x10] sm:$0xf]
  %v31 = vld [vmem:[%s1 + $0x14] sm:$0xf]
  %v32 = vld [vmem:[%s1 + $0x18] sm:$0xf]
  %v33 = vld [vmem:[%s1 + $0x1c] sm:$0xf]
  %v34 = vld [vmem:[%s1 + $0x20] sm:$0xf]
  %v35 = vld [vmem:[%s1 + $0x24] sm:$0xf]
  %v36 = vld [vmem:[%s1 + $0x28] sm:$0xf]
  %v37 = vld [vmem:[%s1 + $0x2c] sm:$0xf]
  %v38 = vld [vmem:[%s1 + $0x30] sm:$0xf]
  %v39 = vld [vmem:[%s1 + $0x34] sm:$0xf]
  %v40 = vld [vmem:[%s1 + $0x38] sm:$0xf]
  %v41 = vld [vmem:[%s1 + $0x3c] sm:$0xf]
  %v42 = vld [vmem:[%s1 + $0x40] sm:$0xf]
  %v43 = vld [vmem:[%s1 + $0x44] sm:$0xf]
  %v44 = vld [vmem:[%s1 + $0x48] sm:$0xf]
  %v45 = vld [vmem:[%s1 + $0x4c] sm:$0xf]
  %v46 = vld [vmem:[%s1 + $0x50] sm:$0xf]
  %v47 = vld [vmem:[%s1 + $0x54] sm:$0xf]
  %v48 = vld [vmem:[%s1 + $0x58] sm:$0xf]
  %v49 = vld [vmem:[%s1 + $0x5c] sm:$0xf]
  %v50 = vld [vmem:[%s1 + $0x60] sm:$0xf]
  %v51 = vld [vmem:[%s1 + $0x64] sm:$0xf]
  %v52 = vld [vmem:[%s1 + $0x68] sm:$0xf]
  %v53 = vld [vmem:[%s1 + $0x6c] sm:$0xf]
  %v54 = vld [vmem:[%s1 + $0x70] sm:$0xf]
  %v55 = vld [vmem:[%s1 + $0x74] sm:$0xf]
  %v56 = vld [vmem:[%s1 + $0x78] sm:$0xf]
  %v57 = vld [vmem:[%s1 + $0x7c] sm:$0xf]
  %v58 = vld [vmem:[%s1 + $0x80] sm:$0xf]
  %v59 = vld [vmem:[%s1 + $0x84] sm:$0xf]
  %v60 = vld [vmem:[%s1 + $0x88] sm:$0xf]
  %v61 = vld [vmem:[%s1 + $0x8c] sm:$0xf]
  %v62 = vld [vmem:[%s1 + $0x90] sm:$0xf]
  %v63 = vld [vmem:[%s1 + $0x94] sm:$0xf]
  %v64 = vld [vmem:[%s1 + $0x98] sm:$0xf]
  %v65 = vld [vmem:[%s1 + $0x9c] sm:$0xf]
  %v66 = vld [vmem:[%s1 + $0xa0] sm:$0xf]
  %v67 = vld [vmem:[%s1 + $0xa4] sm:$0xf]
  %v68 = vld [vmem:[%s1 + $0xa8] sm:$0xf]
  %v69 = vld [vmem:[%s1 + $0xac] sm:$0xf]
  %v70 = vld [vmem:[%s1 + $0xb0] sm:$0xf]
  %v71 = vld [vmem:[%s1 + $0xb4] sm:$0xf]
  %v72 = vld [vmem:[%s1 + $0xb8] sm:$0xf]
  %v73 = vld [vmem:[%s1 + $0xbc] sm:$0xf]
  %v74 = vld [vmem:[%s1 + $0xc0] sm:$0xf]
  %v75 = vld [vmem:[%s1 + $0xc4] sm:$0xf]
  %v76 = vld [vmem:[%s1 + $0xc8] sm:$0xf]
  %v77 = vld [vmem:[%s1 + $0xcc] sm:$0xf]
  %v78 = vld [vmem:[%s1 + $0xd0] sm:$0xf]
  %v79 = vld [vmem:[%s1 + $0xd4] sm:$0xf]
  %v80 = vld [vmem:[%s1 + $0xd8] sm:$0xf]
  %v81 = vld [vmem:[%s1 + $0xdc] sm:$0xf]
  %v82 = vld [vmem:[%s1 + $0xe0] sm:$0xf]
  %v83 = vld [vmem:[%s1 + $0xe4] sm:$0xf]
  %v84 = vld [vmem:[%s1 + $0xe8] sm:$0xf]
  %v85 = vld [vmem:[%s1 + $0xec] sm:$0xf]
  %v86 = vld [vmem:[%s1 + $0xf0] sm:$0xf]
  %v87 = vld [vmem:[%s1 + $0xf4] sm:$0xf]
  %v88 = vld [vmem:[%s1 + $0xf8] sm:$0xf]
  %v89 = vld [vmem:[%s1 + $0xfc] sm:$0xf]
  %v90 = vld [vmem:[%s1 + $0x100] sm:$0xf]
  %v91 = vld [vmem:[%s1 + $0x104] sm:$0xf]
  %v92 = vld [vmem:[%s1 + $0x108] sm:$0xf]
  %v93 = vld [vmem:[%s1 + $0x10c] sm:$0xf]
  %v94 = vld [vmem:[%s1 + $0x110] sm:$0xf]
  %v95 = vld [vmem:[%s1 + $0x114] sm:$0xf]
  %v96 = vld [vmem:[%s1 + $0x118] sm:$0xf]
  %v97 = vld [vmem:[%s1 + $0x11c] sm:$0xf]
  %v110 = vunpack.c.l.b16 %v14
  %v111 = vunpack.c.h.b16 %v14
  %v112 = vunpack.c.l.b16 %v15
  %v113 = vunpack.c.h.b16 %v15
  %v114 = vunpack.c.l.b16 %v16
  %v115 = vunpack.c.l.b16 %v17
  %v116 = vunpack.c.h.b16 %v17
  %v117 = vunpack.c.l.b16 %v18
  %v118 = vunpack.c.h.b16 %v18
  %v119 = vunpack.c.l.b16 %v19
  %v120 = vunpack.c.l.b16 %v20
  %v121 = vunpack.c.h.b16 %v20
  %v122 = vunpack.c.l.b16 %v21
  %v123 = vunpack.c.h.b16 %v21
  %v124 = vunpack.c.l.b16 %v22
  %v125 = vunpack.c.l.b16 %v23
  %v126 = vunpack.c.h.b16 %v23
  %v127 = vunpack.c.l.b16 %v24
  %v128 = vunpack.c.h.b16 %v24
  %v129 = vunpack.c.l.b16 %v25
  %v130 = vpack.c.b16 %v115, %v110
  %v131 = vpack.c.b16 %v116, %v111
  %v132 = vpack.c.b16 %v117, %v112
  %v133 = vpack.c.b16 %v118, %v113
  %v134 = vpack.c.b16 %v119, %v114
  %v135 = vpack.c.b16 %v125, %v120
  %v136 = vpack.c.b16 %v126, %v121
  %v137 = vpack.c.b16 %v127, %v122
  %v138 = vpack.c.b16 %v128, %v123
  %v139 = vpack.c.b16 %v129, %v124
  %v220 = vunpack.c.l.b16 %v26
  %v221 = vunpack.c.l.b16 %v27
  %v222 = vunpack.c.l.b16 %v28
  %v223 = vunpack.c.l.b16 %v29
  %v224 = vunpack.c.l.b16 %v30
  %v225 = vunpack.c.l.b16 %v31
  %v226 = vunpack.c.l.b16 %v32
  %v227 = vunpack.c.l.b16 %v33
  %v228 = vunpack.c.l.b16 %v34
  %v229 = vunpack.c.l.b16 %v35
  %v230 = vunpack.c.l.b16 %v36
  %v231 = vunpack.c.l.b16 %v37
  %v232 = vunpack.c.l.b16 %v38
  %v233 = vunpack.c.l.b16 %v39
  %v234 = vunpack.c.l.b16 %v40
  %v235 = vunpack.c.l.b16 %v41
  %v236 = vunpack.c.l.b16 %v42
  %v237 = vunpack.c.l.b16 %v43
  %v238 = vunpack.c.l.b16 %v44
  %v239 = vunpack.c.l.b16 %v45
  %v240 = vunpack.c.l.b16 %v46
  %v241 = vunpack.c.l.b16 %v47
  %v242 = vunpack.c.l.b16 %v48
  %v243 = vunpack.c.l.b16 %v49
  %v244 = vunpack.c.l.b16 %v50
  %v245 = vunpack.c.l.b16 %v51
  %v246 = vunpack.c.l.b16 %v52
  %v247 = vunpack.c.l.b16 %v53
  %v248 = vunpack.c.l.b16 %v54
  %v249 = vunpack.c.l.b16 %v55
  %v250 = vunpack.c.l.b16 %v56
  %v251 = vunpack.c.l.b16 %v57
  %v252 = vunpack.c.l.b16 %v58
  %v253 = vunpack.c.l.b16 %v59
  %v254 = vunpack.c.l.b16 %v60
  %v255 = vunpack.c.l.b16 %v61
  %v256 = vunpack.c.l.b16 %v62
  %v257 = vunpack.c.l.b16 %v63
  %v258 = vunpack.c.l.b16 %v64
  %v259 = vunpack.c.l.b16 %v65
  %v260 = vunpack.c.l.b16 %v66
  %v261 = vunpack.c.l.b16 %v67
  %v262 = vunpack.c.l.b16 %v68
  %v263 = vunpack.c.l.b16 %v69
  %v264 = vunpack.c.l.b16 %v70
  %v265 = vunpack.c.l.b16 %v71
  %v266 = vunpack.c.l.b16 %v72
  %v267 = vunpack.c.l.b16 %v73
  %v268 = vunpack.c.l.b16 %v74
  %v269 = vunpack.c.l.b16 %v75
  %v270 = vunpack.c.l.b16 %v76
  %v271 = vunpack.c.l.b16 %v77
  %v272 = vunpack.c.l.b16 %v78
  %v273 = vunpack.c.l.b16 %v79
  %v274 = vunpack.c.l.b16 %v80
  %v275 = vunpack.c.l.b16 %v81
  %v276 = vunpack.c.l.b16 %v82
  %v277 = vunpack.c.l.b16 %v83
  %v278 = vunpack.c.l.b16 %v84
  %v279 = vunpack.c.l.b16 %v85
  %v280 = vunpack.c.l.b16 %v86
  %v281 = vunpack.c.l.b16 %v87
  %v282 = vunpack.c.l.b16 %v88
  %v283 = vunpack.c.l.b16 %v89
  %v284 = vunpack.c.l.b16 %v90
  %v285 = vunpack.c.l.b16 %v91
  %v286 = vunpack.c.l.b16 %v92
  %v287 = vunpack.c.l.b16 %v93
  %v288 = vunpack.c.l.b16 %v94
  %v289 = vunpack.c.l.b16 %v95
  %v290 = vunpack.c.l.b16 %v96
  %v291 = vunpack.c.l.b16 %v97
  %v292 = vpack.c.b16 %v221, %v220
  %v293 = vpack.c.b16 %v223, %v222
  %v294 = vpack.c.b16 %v225, %v224
  %v295 = vpack.c.b16 %v227, %v226
  %v296 = vpack.c.b16 %v229, %v228
  %v297 = vpack.c.b16 %v231, %v230
  %v298 = vpack.c.b16 %v233, %v232
  %v299 = vpack.c.b16 %v235, %v234
  %v300 = vpack.c.b16 %v237, %v236
  %v301 = vpack.c.b16 %v239, %v238
  %v302 = vpack.c.b16 %v241, %v240
  %v303 = vpack.c.b16 %v243, %v242
  %v304 = vpack.c.b16 %v245, %v244
  %v305 = vpack.c.b16 %v247, %v246
  %v306 = vpack.c.b16 %v249, %v248
  %v307 = vpack.c.b16 %v251, %v250
  %v308 = vpack.c.b16 %v253, %v252
  %v309 = vpack.c.b16 %v255, %v254
  %v310 = vpack.c.b16 %v257, %v256
  %v311 = vpack.c.b16 %v259, %v258
  %v312 = vpack.c.b16 %v261, %v260
  %v313 = vpack.c.b16 %v263, %v262
  %v314 = vpack.c.b16 %v265, %v264
  %v315 = vpack.c.b16 %v267, %v266
  %v316 = vpack.c.b16 %v269, %v268
  %v317 = vpack.c.b16 %v271, %v270
  %v318 = vpack.c.b16 %v273, %v272
  %v319 = vpack.c.b16 %v275, %v274
  %v320 = vpack.c.b16 %v277, %v276
  %v321 = vpack.c.b16 %v279, %v278
  %v322 = vpack.c.b16 %v281, %v280
  %v323 = vpack.c.b16 %v283, %v282
  %v324 = vpack.c.b16 %v285, %v284
  %v325 = vpack.c.b16 %v287, %v286
  %v326 = vpack.c.b16 %v289, %v288
  %v327 = vpack.c.b16 %v291, %v290
  %vm364 = vcmask 523264
  %v366 = vsel %vm364, %v134, 0
  %v369 = vsel %vm364, %v139, 0
  %371 = vmatprep.subr.bf16.mxu0 0
  %372 = vmatpush1.bf16.msra.mxu0 %v292
  %373 = vmatprep.subr.bf16.mxu0 0
  %374 = vmatpush1.bf16.msra.mxu0 %v293
  %375 = vmatprep.subr.bf16.mxu0 0
  %376 = vmatpush1.bf16.msra.mxu0 %v294
  %377 = vmatprep.subr.bf16.mxu0 0
  %378 = vmatpush1.bf16.msra.mxu0 %v295
  %379 = vmatprep.subr.bf16.mxu0 0
  %380 = vmatpush1.bf16.msra.mxu0 %v296
  %381 = vmatprep.subr.bf16.mxu0 0
  %382 = vmatpush1.bf16.msra.mxu0 %v297
  %383 = vmatprep.subr.bf16.mxu0 0
  %384 = vmatpush1.bf16.msra.mxu0 %v298
  %385 = vmatprep.subr.bf16.mxu0 0
  %386 = vmatpush1.bf16.msra.mxu0 %v299
  %387 = vmatprep.subr.bf16.mxu0 0
  %388 = vmatpush1.bf16.msra.mxu0 %v300
  %389 = vmatprep.subr.bf16.mxu0 0
  %390 = vmatpush1.bf16.msra.mxu0 %v301
  %391 = vmatprep.subr.bf16.mxu0 0
  %392 = vmatpush1.bf16.msra.mxu0 %v302
  %393 = vmatprep.subr.bf16.mxu0 0
  %394 = vmatpush1.bf16.msra.mxu0 %v303
  %395 = vmatprep.subr.bf16.mxu0 0
  %396 = vmatpush1.bf16.msra.mxu0 %v304
  %397 = vmatprep.subr.bf16.mxu0 0
  %398 = vmatpush1.bf16.msra.mxu0 %v305
  %399 = vmatprep.subr.bf16.mxu0 0
  %400 = vmatpush1.bf16.msra.mxu0 %v306
  %401 = vmatprep.subr.bf16.mxu0 0
  %402 = vmatpush1.bf16.msra.mxu0 %v307
  %403 = vmatprep.mubr.bf16.mxu0 %v131
  %404 = vmatmul.mubr.bf16.gmra.mrb[0].mxu0 %v130
  %v405 = vpop.f32.mrb[0].mxu0
  %v406 = vadd.f32 0.0, %v405
  %v407 = vpop.f32.mrb[0].mxu0
  %v408 = vpop.f32.mrb[0].mxu0
  %v409 = vadd.f32 0.0, %v408
  %v410 = vpop.f32.mrb[0].mxu0
  %411 = vmatprep.mubr.bf16.mxu0 %v136
  %412 = vmatmul.mubr.bf16.gmra.mrb[0].mxu0 %v135
  %v413 = vpop.f32.mrb[0].mxu0
  %v414 = vadd.f32 0.0, %v413
  %v415 = vpop.f32.mrb[0].mxu0
  %v416 = vpop.f32.mrb[0].mxu0
  %v417 = vadd.f32 0.0, %v416
  %v418 = vpop.f32.mrb[0].mxu0
  %419 = vdwg.mxu0
  %420 = vmatprep.subr.bf16.mxu0 0
  %421 = vmatpush1.bf16.msra.mxu0 %v308
  %422 = vmatprep.subr.bf16.mxu0 0
  %423 = vmatpush1.bf16.msra.mxu0 %v309
  %424 = vmatprep.subr.bf16.mxu0 0
  %425 = vmatpush1.bf16.msra.mxu0 %v310
  %426 = vmatprep.subr.bf16.mxu0 0
  %427 = vmatpush1.bf16.msra.mxu0 %v311
  %428 = vmatprep.subr.bf16.mxu0 0
  %429 = vmatpush1.bf16.msra.mxu0 %v312
  %430 = vmatprep.subr.bf16.mxu0 0
  %431 = vmatpush1.bf16.msra.mxu0 %v313
  %432 = vmatprep.subr.bf16.mxu0 0
  %433 = vmatpush1.bf16.msra.mxu0 %v314
  %434 = vmatprep.subr.bf16.mxu0 0
  %435 = vmatpush1.bf16.msra.mxu0 %v315
  %436 = vmatprep.subr.bf16.mxu0 0
  %437 = vmatpush1.bf16.msra.mxu0 %v316
  %438 = vmatprep.subr.bf16.mxu0 0
  %439 = vmatpush1.bf16.msra.mxu0 %v317
  %440 = vmatprep.subr.bf16.mxu0 0
  %441 = vmatpush1.bf16.msra.mxu0 %v318
  %442 = vmatprep.subr.bf16.mxu0 0
  %443 = vmatpush1.bf16.msra.mxu0 %v319
  %444 = vmatprep.subr.bf16.mxu0 0
  %445 = vmatpush1.bf16.msra.mxu0 %v320
  %446 = vmatprep.subr.bf16.mxu0 0
  %447 = vmatpush1.bf16.msra.mxu0 %v321
  %448 = vmatprep.subr.bf16.mxu0 0
  %449 = vmatpush1.bf16.msra.mxu0 %v322
  %450 = vmatprep.subr.bf16.mxu0 0
  %451 = vmatpush1.bf16.msra.mxu0 %v323
  %452 = vmatprep.mubr.bf16.mxu0 %v133
  %453 = vmatmul.mubr.bf16.gmra.mrb[0].mxu0 %v132
  %v454 = vpop.f32.mrb[0].mxu0
  %v455 = vadd.f32 %v406, %v454
  %v456 = vpop.f32.mrb[0].mxu0
  %v457 = vpop.f32.mrb[0].mxu0
  %v458 = vadd.f32 %v409, %v457
  %v459 = vpop.f32.mrb[0].mxu0
  %460 = vmatprep.mubr.bf16.mxu0 %v138
  %461 = vmatmul.mubr.bf16.gmra.mrb[0].mxu0 %v137
  %v462 = vpop.f32.mrb[0].mxu0
  %v463 = vadd.f32 %v414, %v462
  %v464 = vpop.f32.mrb[0].mxu0
  %v465 = vpop.f32.mrb[0].mxu0
  %v466 = vadd.f32 %v417, %v465
  %v467 = vpop.f32.mrb[0].mxu0
  %468 = vdwg.mxu0
  %469 = vmatprep.subr.bf16.mxu0 0
  %470 = vmatpush1.bf16.msra.mxu0 %v324
  %471 = vmatprep.subr.bf16.mxu0 0
  %472 = vmatpush1.bf16.msra.mxu0 %v325
  %473 = vmatprep.subr.bf16.mxu0 0
  %474 = vmatpush1.bf16.msra.mxu0 %v326
  %475 = vmatprep.subr.bf16.mxu0 0
  %476 = vmatpush1.bf16.msra.mxu0 %v327
  %477 = vmatprep.subr.bf16.mxu0 0
  %478 = vmatpush1.bf16.msra.mxu0 0
  %479 = vmatprep.subr.bf16.mxu0 0
  %480 = vmatpush1.bf16.msra.mxu0 0
  %481 = vmatprep.subr.bf16.mxu0 0
  %482 = vmatpush1.bf16.msra.mxu0 0
  %483 = vmatprep.subr.bf16.mxu0 0
  %484 = vmatpush1.bf16.msra.mxu0 0
  %485 = vmatprep.subr.bf16.mxu0 0
  %486 = vmatpush1.bf16.msra.mxu0 0
  %487 = vmatprep.subr.bf16.mxu0 0
  %488 = vmatpush1.bf16.msra.mxu0 0
  %489 = vmatprep.subr.bf16.mxu0 0
  %490 = vmatpush1.bf16.msra.mxu0 0
  %491 = vmatprep.subr.bf16.mxu0 0
  %492 = vmatpush1.bf16.msra.mxu0 0
  %493 = vmatprep.subr.bf16.mxu0 0
  %494 = vmatpush1.bf16.msra.mxu0 0
  %495 = vmatprep.subr.bf16.mxu0 0
  %496 = vmatpush1.bf16.msra.mxu0 0
  %497 = vmatprep.subr.bf16.mxu0 0
  %498 = vmatpush1.bf16.msra.mxu0 0
  %499 = vmatprep.subr.bf16.mxu0 0
  %500 = vmatpush1.bf16.msra.mxu0 0
  %501 = vmatprep.mubr.bf16.mxu0 0
  %502 = vmatmul.mubr.bf16.gmra.mrb[0].mxu0 %v366
  %v503 = vpop.f32.mrb[0].mxu0
  %v504 = vadd.f32 %v455, %v503
  %v505 = vpop.f32.mrb[0].mxu0
  %v506 = vpop.f32.mrb[0].mxu0
  %v507 = vadd.f32 %v458, %v506
  %v508 = vpop.f32.mrb[0].mxu0
  %509 = vmatprep.mubr.bf16.mxu0 0
  %510 = vmatmul.mubr.bf16.gmra.mrb[0].mxu0 %v369
  %v511 = vpop.f32.mrb[0].mxu0
  %v512 = vadd.f32 %v463, %v511
  %v513 = vpop.f32.mrb[0].mxu0
  %v514 = vpop.f32.mrb[0].mxu0
  %v515 = vadd.f32 %v466, %v514
  %v516 = vpop.f32.mrb[0].mxu0
  %517 = vdwg.mxu0
  %v518 = vpack.c.bf16 %v507, %v504
  %v519 = vpack.c.bf16 %v515, %v512
  %v522 = vunpack.c.l.b16 %v518
  %v523 = vunpack.c.h.b16 %v518
  %v524 = vunpack.c.l.b16 %v519
  %v525 = vunpack.c.h.b16 %v519
  %v526 = vpack.c.b16 %v522, %v522
  %v527 = vpack.c.b16 %v523, %v523
  %v528 = vpack.c.b16 %v524, %v524
  %v529 = vpack.c.b16 %v525, %v525
  %534 = vst [vmem:[%s2] sm:$0xf] %v526
  %535 = vst [vmem:[%s2 + $0x4] sm:$0xf] %v527
  %536 = vst [vmem:[%s2 + $0x8] sm:$0xf] %v528
  %537 = vst [vmem:[%s2 + $0xc] sm:$0xf] %v529
  %v538 = vadd.f32 %v504, %v507
  %v539 = vadd.f32 %v538, %v512
  %v540 = vadd.f32 %v539, %v515
  %v541 = vrot.slane %v540, 4
  %v542 = vadd.f32 %v540, %v541
  %v543 = vrot.slane %v542, 2
  %v544 = vadd.f32 %v542, %v543
  %v545 = vrot.slane %v544, 1
  %v546 = vadd.f32 %v544, %v545
  %547 = vst [vmem:[%s3] sm:$0x1] %v546
  %v548 = vmul.f32 %v504, %v504
  %v549 = vmul.f32 %v507, %v507
  %v550 = vmul.f32 %v512, %v512
  %v551 = vmul.f32 %v515, %v515
  %v552 = vadd.f32 %v548, %v549
  %v553 = vadd.f32 %v552, %v550
  %v554 = vadd.f32 %v553, %v551
  %v555 = vrot.slane %v554, 4
  %v556 = vadd.f32 %v554, %v555
  %v557 = vrot.slane %v556, 2
  %v558 = vadd.f32 %v556, %v557
  %v559 = vrot.slane %v558, 1
  %v560 = vadd.f32 %v558, %v559
  %561 = vst [vmem:[%s3 + $0x1] sm:$0x1] %v560
  // Predicated region
  $region10: #{_generator_forward.11} parent=0 // pred_check
    _
  $region11: #{_generator_forward.11} parent=0 // pred_check_branch
    %563 = sbr.rel (0) target = $region13
  $region12: #{_generator_forward.11} parent=0 // pred_region
    _
  $region13: #{_generator_forward.11} parent=0 // pred_fallthru
    _
  // Predicated region
  $region14: #{_generator_forward.11} parent=0 // pred_check
    _
  $region15: #{_generator_forward.11} parent=0 // pred_check_branch
    %565 = sbr.rel (0) target = $region17
  $region16: #{_generator_forward.11} parent=0 // pred_region
    _
  $region17: #{_generator_forward.11} parent=0 // pred_fallthru
    _
  // Predicated region
  $region18: #{_generator_forward.11} parent=0 // pred_check
    _
  $region19: #{_generator_forward.11} parent=0 // pred_check_branch
    %567 = sbr.rel (0) target = $region21
  $region20: #{_generator_forward.11} parent=0 // pred_region
    _
  $region21: #{_generator_forward.11} parent=0 // pred_fallthru
    _
  // Predicated region
  $region22: #{_generator_forward.11} parent=0 // pred_check
    _
  $region23: #{_generator_forward.11} parent=0 // pred_check_branch
    %569 = sbr.rel (0) target = $region25
  $region24: #{_generator_forward.11} parent=0 // pred_region
    _
  $region25: #{_generator_forward.11} parent=0 // pred_fallthru
    _

// kernel: _generator_forward.13
$region0: #{_generator_forward.13}
  #allocation0 [shape = 'u32[]', space=smem, size = 0x4, offset = 0x4, fixed_abs, tag = 'smem constant byte address 0x4 - core index']
  #allocation1 [shape = 'u32[144,128]{1,0:T(1,128)}', space=vmem, size = 0x12000, scoped, tag = 'internal scratch']
  %s0 = inlined_call_operand.vmem [shape: bf16[128,288], index: 0, kind: input, shape index: {}]
  %s1 = inlined_call_operand.vmem [shape: bf16[288,128], index: 1, kind: input, shape index: {}]
  %s2 = inlined_call_operand.vmem [shape: bf16[128,128], index: 2, kind: output, shape index: {0}]
  %s3 = inlined_call_operand.vmem [shape: f32[1,2,128], index: 3, kind: output, shape index: {1}]
  %4 = xla_tuple %s2, %s3
  %s5 = sld [smem:[#allocation0]]
  $region26: #{_generator_forward.13} parent=0
    _
  %s7 = ssub.s32 1, %s5
  %s8 = scalar_select 0, %s7, %s5
  // Predicated region
  $region2: #{_generator_forward.13} parent=0 // pred_check
    _
  $region3: #{_generator_forward.13} parent=0 // pred_check_branch
    %10 = sbr.rel (0) target = $region5
  $region4: #{_generator_forward.13} parent=0 // pred_region
    _
  $region5: #{_generator_forward.13} parent=0 // pred_fallthru
    _
  // Predicated region
  $region6: #{_generator_forward.13} parent=0 // pred_check
    _
  $region7: #{_generator_forward.13} parent=0 // pred_check_branch
    %12 = sbr.rel (0) target = $region9
  $region8: #{_generator_forward.13} parent=0 // pred_region
    _
  $region9: #{_generator_forward.13} parent=0 // pred_fallthru
    _
  %v14 = vld [vmem:[%s0] sm:$0xff]
  %v15 = vld [vmem:[%s0 + $0x8] sm:$0xf]
  %v16 = vld [vmem:[%s0 + $0xc] sm:$0xff]
  %v17 = vld [vmem:[%s0 + $0x14] sm:$0xf]
  %v18 = vld [vmem:[%s0 + $0x18] sm:$0xff]
  %v19 = vld [vmem:[%s0 + $0x20] sm:$0xf]
  %v20 = vld [vmem:[%s0 + $0x24] sm:$0xff]
  %v21 = vld [vmem:[%s0 + $0x2c] sm:$0xf]
  %v22 = vld [vmem:[%s0 + $0x30] sm:$0xff]
  %v23 = vld [vmem:[%s0 + $0x38] sm:$0xf]
  %v24 = vld [vmem:[%s0 + $0x3c] sm:$0xff]
  %v25 = vld [vmem:[%s0 + $0x44] sm:$0xf]
  %v26 = vld [vmem:[%s0 + $0x48] sm:$0xff]
  %v27 = vld [vmem:[%s0 + $0x50] sm:$0xf]
  %v28 = vld [vmem:[%s0 + $0x54] sm:$0xff]
  %v29 = vld [vmem:[%s0 + $0x5c] sm:$0xf]
  %v30 = vld [vmem:[%s0 + $0x60] sm:$0xff]
  %v31 = vld [vmem:[%s0 + $0x68] sm:$0xf]
  %v32 = vld [vmem:[%s0 + $0x6c] sm:$0xff]
  %v33 = vld [vmem:[%s0 + $0x74] sm:$0xf]
  %v34 = vld [vmem:[%s0 + $0x78] sm:$0xff]
  %v35 = vld [vmem:[%s0 + $0x80] sm:$0xf]
  %v36 = vld [vmem:[%s0 + $0x84] sm:$0xff]
  %v37 = vld [vmem:[%s0 + $0x8c] sm:$0xf]
  %v38 = vld [vmem:[%s0 + $0x90] sm:$0xff]
  %v39 = vld [vmem:[%s0 + $0x98] sm:$0xf]
  %v40 = vld [vmem:[%s0 + $0x9c] sm:$0xff]
  %v41 = vld [vmem:[%s0 + $0xa4] sm:$0xf]
  %v42 = vld [vmem:[%s0 + $0xa8] sm:$0xff]
  %v43 = vld [vmem:[%s0 + $0xb0] sm:$0xf]
  %v44 = vld [vmem:[%s0 + $0xb4] sm:$0xff]
  %v45 = vld [vmem:[%s0 + $0xbc] sm:$0xf]
  %v46 = vld [vmem:[%s1] sm:$0xf]
  %v47 = vld [vmem:[%s1 + $0x4] sm:$0xf]
  %v48 = vld [vmem:[%s1 + $0x8] sm:$0xf]
  %v49 = vld [vmem:[%s1 + $0xc] sm:$0xf]
  %v50 = vld [vmem:[%s1 + $0x10] sm:$0xf]
  %v51 = vld [vmem:[%s1 + $0x14] sm:$0xf]
  %v52 = vld [vmem:[%s1 + $0x18] sm:$0xf]
  %v53 = vld [vmem:[%s1 + $0x1c] sm:$0xf]
  %v54 = vld [vmem:[%s1 + $0x20] sm:$0xf]
  %v55 = vld [vmem:[%s1 + $0x24] sm:$0xf]
  %v56 = vld [vmem:[%s1 + $0x28] sm:$0xf]
  %v57 = vld [vmem:[%s1 + $0x2c] sm:$0xf]
  %v58 = vld [vmem:[%s1 + $0x30] sm:$0xf]
  %v59 = vld [vmem:[%s1 + $0x34] sm:$0xf]
  %v60 = vld [vmem:[%s1 + $0x38] sm:$0xf]
  %v61 = vld [vmem:[%s1 + $0x3c] sm:$0xf]
  %v62 = vld [vmem:[%s1 + $0x40] sm:$0xf]
  %v63 = vld [vmem:[%s1 + $0x44] sm:$0xf]
  %v64 = vld [vmem:[%s1 + $0x48] sm:$0xf]
  %v65 = vld [vmem:[%s1 + $0x4c] sm:$0xf]
  %v66 = vld [vmem:[%s1 + $0x50] sm:$0xf]
  %v67 = vld [vmem:[%s1 + $0x54] sm:$0xf]
  %v68 = vld [vmem:[%s1 + $0x58] sm:$0xf]
  %v69 = vld [vmem:[%s1 + $0x5c] sm:$0xf]
  %v70 = vld [vmem:[%s1 + $0x60] sm:$0xf]
  %v71 = vld [vmem:[%s1 + $0x64] sm:$0xf]
  %v72 = vld [vmem:[%s1 + $0x68] sm:$0xf]
  %v73 = vld [vmem:[%s1 + $0x6c] sm:$0xf]
  %v74 = vld [vmem:[%s1 + $0x70] sm:$0xf]
  %v75 = vld [vmem:[%s1 + $0x74] sm:$0xf]
  %v76 = vld [vmem:[%s1 + $0x78] sm:$0xf]
  %v77 = vld [vmem:[%s1 + $0x7c] sm:$0xf]
  %v78 = vld [vmem:[%s1 + $0x80] sm:$0xf]
  %v79 = vld [vmem:[%s1 + $0x84] sm:$0xf]
  %v80 = vld [vmem:[%s1 + $0x88] sm:$0xf]
  %v81 = vld [vmem:[%s1 + $0x8c] sm:$0xf]
  %v114 = vunpack.c.l.b16 %v14
  %v115 = vunpack.c.h.b16 %v14
  %v116 = vunpack.c.l.b16 %v15
  %v117 = vunpack.c.l.b16 %v16
  %v118 = vunpack.c.h.b16 %v16
  %v119 = vunpack.c.l.b16 %v17
  %v120 = vunpack.c.l.b16 %v18
  %v121 = vunpack.c.h.b16 %v18
  %v122 = vunpack.c.l.b16 %v19
  %v123 = vunpack.c.l.b16 %v20
  %v124 = vunpack.c.h.b16 %v20
  %v125 = vunpack.c.l.b16 %v21
  %v126 = vunpack.c.l.b16 %v22
  %v127 = vunpack.c.h.b16 %v22
  %v128 = vunpack.c.l.b16 %v23
  %v129 = vunpack.c.l.b16 %v24
  %v130 = vunpack.c.h.b16 %v24
  %v131 = vunpack.c.l.b16 %v25
  %v132 = vunpack.c.l.b16 %v26
  %v133 = vunpack.c.h.b16 %v26
  %v134 = vunpack.c.l.b16 %v27
  %v135 = vunpack.c.l.b16 %v28
  %v136 = vunpack.c.h.b16 %v28
  %v137 = vunpack.c.l.b16 %v29
  %v138 = vunpack.c.l.b16 %v30
  %v139 = vunpack.c.h.b16 %v30
  %v140 = vunpack.c.l.b16 %v31
  %v141 = vunpack.c.l.b16 %v32
  %v142 = vunpack.c.h.b16 %v32
  %v143 = vunpack.c.l.b16 %v33
  %v144 = vunpack.c.l.b16 %v34
  %v145 = vunpack.c.h.b16 %v34
  %v146 = vunpack.c.l.b16 %v35
  %v147 = vunpack.c.l.b16 %v36
  %v148 = vunpack.c.h.b16 %v36
  %v149 = vunpack.c.l.b16 %v37
  %v150 = vunpack.c.l.b16 %v38
  %v151 = vunpack.c.h.b16 %v38
  %v152 = vunpack.c.l.b16 %v39
  %v153 = vunpack.c.l.b16 %v40
  %v154 = vunpack.c.h.b16 %v40
  %v155 = vunpack.c.l.b16 %v41
  %v156 = vunpack.c.l.b16 %v42
  %v157 = vunpack.c.h.b16 %v42
  %v158 = vunpack.c.l.b16 %v43
  %v159 = vunpack.c.l.b16 %v44
  %v160 = vunpack.c.h.b16 %v44
  %v161 = vunpack.c.l.b16 %v45
  %v162 = vpack.c.b16 %v117, %v114
  %v163 = vpack.c.b16 %v118, %v115
  %v164 = vpack.c.b16 %v119, %v116
  %v165 = vpack.c.b16 %v123, %v120
  %v166 = vpack.c.b16 %v124, %v121
  %v167 = vpack.c.b16 %v125, %v122
  %v168 = vpack.c.b16 %v129, %v126
  %v169 = vpack.c.b16 %v130, %v127
  %v170 = vpack.c.b16 %v131, %v128
  %v171 = vpack.c.b16 %v135, %v132
  %v172 = vpack.c.b16 %v136, %v133
  %v173 = vpack.c.b16 %v137, %v134
  %v174 = vpack.c.b16 %v141, %v138
  %v175 = vpack.c.b16 %v142, %v139
  %v176 = vpack.c.b16 %v143, %v140
  %v177 = vpack.c.b16 %v147, %v144
  %v178 = vpack.c.b16 %v148, %v145
  %v179 = vpack.c.b16 %v149, %v146
  %v180 = vpack.c.b16 %v153, %v150
  %v181 = vpack.c.b16 %v154, %v151
  %v182 = vpack.c.b16 %v155, %v152
  %v183 = vpack.c.b16 %v159, %v156
  %v184 = vpack.c.b16 %v160, %v157
  %v185 = vpack.c.b16 %v161, %v158
  %v238 = vunpack.c.l.b16 %v46
  %v239 = vunpack.c.l.b16 %v47
  %v240 = vunpack.c.l.b16 %v48
  %v241 = vunpack.c.l.b16 %v49
  %v242 = vunpack.c.l.b16 %v50
  %v243 = vunpack.c.l.b16 %v51
  %v244 = vunpack.c.l.b16 %v52
  %v245 = vunpack.c.l.b16 %v53
  %v246 = vunpack.c.l.b16 %v54
  %v247 = vunpack.c.l.b16 %v55
  %v248 = vunpack.c.l.b16 %v56
  %v249 = vunpack.c.l.b16 %v57
  %v250 = vunpack.c.l.b16 %v58
  %v251 = vunpack.c.l.b16 %v59
  %v252 = vunpack.c.l.b16 %v60
  %v253 = vunpack.c.l.b16 %v61
  %v254 = vunpack.c.l.b16 %v62
  %v255 = vunpack.c.l.b16 %v63
  %v256 = vunpack.c.l.b16 %v64
  %v257 = vunpack.c.l.b16 %v65
  %v258 = vunpack.c.l.b16 %v66
  %v259 = vunpack.c.l.b16 %v67
  %v260 = vunpack.c.l.b16 %v68
  %v261 = vunpack.c.l.b16 %v69
  %v262 = vunpack.c.l.b16 %v70
  %v263 = vunpack.c.l.b16 %v71
  %v264 = vunpack.c.l.b16 %v72
  %v265 = vunpack.c.l.b16 %v73
  %v266 = vunpack.c.l.b16 %v74
  %v267 = vunpack.c.l.b16 %v75
  %v268 = vunpack.c.l.b16 %v76
  %v269 = vunpack.c.l.b16 %v77
  %v270 = vunpack.c.l.b16 %v78
  %v271 = vunpack.c.l.b16 %v79
  %v272 = vunpack.c.l.b16 %v80
  %v273 = vunpack.c.l.b16 %v81
  %v274 = vpack.c.b16 %v239, %v238
  %v275 = vpack.c.b16 %v241, %v240
  %v276 = vpack.c.b16 %v243, %v242
  %v277 = vpack.c.b16 %v245, %v244
  %v278 = vpack.c.b16 %v247, %v246
  %v279 = vpack.c.b16 %v249, %v248
  %v280 = vpack.c.b16 %v251, %v250
  %v281 = vpack.c.b16 %v253, %v252
  %v282 = vpack.c.b16 %v255, %v254
  %v283 = vpack.c.b16 %v257, %v256
  %v284 = vpack.c.b16 %v259, %v258
  %v285 = vpack.c.b16 %v261, %v260
  %v286 = vpack.c.b16 %v263, %v262
  %v287 = vpack.c.b16 %v265, %v264
  %v288 = vpack.c.b16 %v267, %v266
  %v289 = vpack.c.b16 %v269, %v268
  %v290 = vpack.c.b16 %v271, %v270
  %v291 = vpack.c.b16 %v273, %v272
  %vm310 = vcmask 261120
  %v312 = vsel %vm310, %v164, 0
  %v315 = vsel %vm310, %v167, 0
  %v318 = vsel %vm310, %v170, 0
  %v321 = vsel %vm310, %v173, 0
  %v324 = vsel %vm310, %v176, 0
  %v327 = vsel %vm310, %v179, 0
  %v330 = vsel %vm310, %v182, 0
  %v333 = vsel %vm310, %v185, 0
  %335 = vmatprep.subr.bf16.mxu0 0
  %336 = vmatpush1.bf16.msra.mxu0 %v274
  %337 = vmatprep.subr.bf16.mxu0 0
  %338 = vmatpush1.bf16.msra.mxu0 %v275
  %339 = vmatprep.subr.bf16.mxu0 0
  %340 = vmatpush1.bf16.msra.mxu0 %v276
  %341 = vmatprep.subr.bf16.mxu0 0
  %342 = vmatpush1.bf16.msra.mxu0 %v277
  %343 = vmatprep.subr.bf16.mxu0 0
  %344 = vmatpush1.bf16.msra.mxu0 %v278
  %345 = vmatprep.subr.bf16.mxu0 0
  %346 = vmatpush1.bf16.msra.mxu0 %v279
  %347 = vmatprep.subr.bf16.mxu0 0
  %348 = vmatpush1.bf16.msra.mxu0 %v280
  %349 = vmatprep.subr.bf16.mxu0 0
  %350 = vmatpush1.bf16.msra.mxu0 %v281
  %351 = vmatprep.subr.bf16.mxu0 0
  %352 = vmatpush1.bf16.msra.mxu0 %v282
  %353 = vmatprep.subr.bf16.mxu0 0
  %354 = vmatpush1.bf16.msra.mxu0 %v283
  %355 = vmatprep.subr.bf16.mxu0 0
  %356 = vmatpush1.bf16.msra.mxu0 %v284
  %357 = vmatprep.subr.bf16.mxu0 0
  %358 = vmatpush1.bf16.msra.mxu0 %v285
  %359 = vmatprep.subr.bf16.mxu0 0
  %360 = vmatpush1.bf16.msra.mxu0 %v286
  %361 = vmatprep.subr.bf16.mxu0 0
  %362 = vmatpush1.bf16.msra.mxu0 %v287
  %363 = vmatprep.subr.bf16.mxu0 0
  %364 = vmatpush1.bf16.msra.mxu0 %v288
  %365 = vmatprep.subr.bf16.mxu0 0
  %366 = vmatpush1.bf16.msra.mxu0 %v289
  %367 = vmatprep.mubr.bf16.mxu0 %v163
  %368 = vmatmul.mubr.bf16.gmra.mrb[0].mxu0 %v162
  %v369 = vpop.f32.mrb[0].mxu0
  %v370 = vadd.f32 0.0, %v369
  %v371 = vpop.f32.mrb[0].mxu0
  %v372 = vpop.f32.mrb[0].mxu0
  %v373 = vadd.f32 0.0, %v372
  %v374 = vpop.f32.mrb[0].mxu0
  %375 = vmatprep.mubr.bf16.mxu0 %v166
  %376 = vmatmul.mubr.bf16.gmra.mrb[0].mxu0 %v165
  %v377 = vpop.f32.mrb[0].mxu0
  %v378 = vadd.f32 0.0, %v377
  %v379 = vpop.f32.mrb[0].mxu0
  %v380 = vpop.f32.mrb[0].mxu0
  %v381 = vadd.f32 0.0, %v380
  %v382 = vpop.f32.mrb[0].mxu0
  %383 = vmatprep.mubr.bf16.mxu0 %v169
  %384 = vmatmul.mubr.bf16.gmra.mrb[0].mxu0 %v168
  %v385 = vpop.f32.mrb[0].mxu0
  %v386 = vadd.f32 0.0, %v385
  %v387 = vpop.f32.mrb[0].mxu0
  %v388 = vpop.f32.mrb[0].mxu0
  %v389 = vadd.f32 0.0, %v388
  %v390 = vpop.f32.mrb[0].mxu0
  %391 = vmatprep.mubr.bf16.mxu0 %v172
  %392 = vmatmul.mubr.bf16.gmra.mrb[0].mxu0 %v171
  %v393 = vpop.f32.mrb[0].mxu0
  %v394 = vadd.f32 0.0, %v393
  %v395 = vpop.f32.mrb[0].mxu0
  %v396 = vpop.f32.mrb[0].mxu0
  %v397 = vadd.f32 0.0, %v396
  %v398 = vpop.f32.mrb[0].mxu0
  %399 = vmatprep.mubr.bf16.mxu0 %v175
  %400 = vmatmul.mubr.bf16.gmra.mrb[0].mxu0 %v174
  %v401 = vpop.f32.mrb[0].mxu0
  %v402 = vadd.f32 0.0, %v401
  %v403 = vpop.f32.mrb[0].mxu0
  %v404 = vpop.f32.mrb[0].mxu0
  %v405 = vadd.f32 0.0, %v404
  %v406 = vpop.f32.mrb[0].mxu0
  %407 = vmatprep.mubr.bf16.mxu0 %v178
  %408 = vmatmul.mubr.bf16.gmra.mrb[0].mxu0 %v177
  %v409 = vpop.f32.mrb[0].mxu0
  %v410 = vadd.f32 0.0, %v409
  %v411 = vpop.f32.mrb[0].mxu0
  %v412 = vpop.f32.mrb[0].mxu0
  %v413 = vadd.f32 0.0, %v412
  %v414 = vpop.f32.mrb[0].mxu0
  %415 = vmatprep.mubr.bf16.mxu0 %v181
  %416 = vmatmul.mubr.bf16.gmra.mrb[0].mxu0 %v180
  %v417 = vpop.f32.mrb[0].mxu0
  %v418 = vadd.f32 0.0, %v417
  %v419 = vpop.f32.mrb[0].mxu0
  %v420 = vpop.f32.mrb[0].mxu0
  %v421 = vadd.f32 0.0, %v420
  %v422 = vpop.f32.mrb[0].mxu0
  %423 = vmatprep.mubr.bf16.mxu0 %v184
  %424 = vmatmul.mubr.bf16.gmra.mrb[0].mxu0 %v183
  %v425 = vpop.f32.mrb[0].mxu0
  %v426 = vadd.f32 0.0, %v425
  %v427 = vpop.f32.mrb[0].mxu0
  %v428 = vpop.f32.mrb[0].mxu0
  %v429 = vadd.f32 0.0, %v428
  %v430 = vpop.f32.mrb[0].mxu0
  %431 = vdwg.mxu0
  %432 = vmatprep.subr.bf16.mxu0 0
  %433 = vmatpush1.bf16.msra.mxu0 %v290
  %434 = vmatprep.subr.bf16.mxu0 0
  %435 = vmatpush1.bf16.msra.mxu0 %v291
  %436 = vmatprep.subr.bf16.mxu0 0
  %437 = vmatpush1.bf16.msra.mxu0 0
  %438 = vmatprep.subr.bf16.mxu0 0
  %439 = vmatpush1.bf16.msra.mxu0 0
  %440 = vmatprep.subr.bf16.mxu0 0
  %441 = vmatpush1.bf16.msra.mxu0 0
  %442 = vmatprep.subr.bf16.mxu0 0
  %443 = vmatpush1.bf16.msra.mxu0 0
  %444 = vmatprep.subr.bf16.mxu0 0
  %445 = vmatpush1.bf16.msra.mxu0 0
  %446 = vmatprep.subr.bf16.mxu0 0
  %447 = vmatpush1.bf16.msra.mxu0 0
  %448 = vmatprep.subr.bf16.mxu0 0
  %449 = vmatpush1.bf16.msra.mxu0 0
  %450 = vmatprep.subr.bf16.mxu0 0
  %451 = vmatpush1.bf16.msra.mxu0 0
  %452 = vmatprep.subr.bf16.mxu0 0
  %453 = vmatpush1.bf16.msra.mxu0 0
  %454 = vmatprep.subr.bf16.mxu0 0
  %455 = vmatpush1.bf16.msra.mxu0 0
  %456 = vmatprep.subr.bf16.mxu0 0
  %457 = vmatpush1.bf16.msra.mxu0 0
  %458 = vmatprep.subr.bf16.mxu0 0
  %459 = vmatpush1.bf16.msra.mxu0 0
  %460 = vmatprep.subr.bf16.mxu0 0
  %461 = vmatpush1.bf16.msra.mxu0 0
  %462 = vmatprep.subr.bf16.mxu0 0
  %463 = vmatpush1.bf16.msra.mxu0 0
  %464 = vmatprep.mubr.bf16.mxu0 0
  %465 = vmatmul.mubr.bf16.gmra.mrb[0].mxu0 %v312
  %v466 = vpop.f32.mrb[0].mxu0
  %v467 = vadd.f32 %v370, %v466
  %v468 = vpop.f32.mrb[0].mxu0
  %v469 = vpop.f32.mrb[0].mxu0
  %v470 = vadd.f32 %v373, %v469
  %v471 = vpop.f32.mrb[0].mxu0
  %472 = vmatprep.mubr.bf16.mxu0 0
  %473 = vmatmul.mubr.bf16.gmra.mrb[0].mxu0 %v315
  %v474 = vpop.f32.mrb[0].mxu0
  %v475 = vadd.f32 %v378, %v474
  %v476 = vpop.f32.mrb[0].mxu0
  %v477 = vpop.f32.mrb[0].mxu0
  %v478 = vadd.f32 %v381, %v477
  %v479 = vpop.f32.mrb[0].mxu0
  %480 = vmatprep.mubr.bf16.mxu0 0
  %481 = vmatmul.mubr.bf16.gmra.mrb[0].mxu0 %v318
  %v482 = vpop.f32.mrb[0].mxu0
  %v483 = vadd.f32 %v386, %v482
  %v484 = vpop.f32.mrb[0].mxu0
  %v485 = vpop.f32.mrb[0].mxu0
  %v486 = vadd.f32 %v389, %v485
  %v487 = vpop.f32.mrb[0].mxu0
  %488 = vmatprep.mubr.bf16.mxu0 0
  %489 = vmatmul.mubr.bf16.gmra.mrb[0].mxu0 %v321
  %v490 = vpop.f32.mrb[0].mxu0
  %v491 = vadd.f32 %v394, %v490
  %v492 = vpop.f32.mrb[0].mxu0
  %v493 = vpop.f32.mrb[0].mxu0
  %v494 = vadd.f32 %v397, %v493
  %v495 = vpop.f32.mrb[0].mxu0
  %496 = vmatprep.mubr.bf16.mxu0 0
  %497 = vmatmul.mubr.bf16.gmra.mrb[0].mxu0 %v324
  %v498 = vpop.f32.mrb[0].mxu0
  %v499 = vadd.f32 %v402, %v498
  %v500 = vpop.f32.mrb[0].mxu0
  %v501 = vpop.f32.mrb[0].mxu0
  %v502 = vadd.f32 %v405, %v501
  %v503 = vpop.f32.mrb[0].mxu0
  %504 = vmatprep.mubr.bf16.mxu0 0
  %505 = vmatmul.mubr.bf16.gmra.mrb[0].mxu0 %v327
  %v506 = vpop.f32.mrb[0].mxu0
  %v507 = vadd.f32 %v410, %v506
  %v508 = vpop.f32.mrb[0].mxu0
  %v509 = vpop.f32.mrb[0].mxu0
  %v510 = vadd.f32 %v413, %v509
  %v511 = vpop.f32.mrb[0].mxu0
  %512 = vmatprep.mubr.bf16.mxu0 0
  %513 = vmatmul.mubr.bf16.gmra.mrb[0].mxu0 %v330
  %v514 = vpop.f32.mrb[0].mxu0
  %v515 = vadd.f32 %v418, %v514
  %v516 = vpop.f32.mrb[0].mxu0
  %v517 = vpop.f32.mrb[0].mxu0
  %v518 = vadd.f32 %v421, %v517
  %v519 = vpop.f32.mrb[0].mxu0
  %520 = vmatprep.mubr.bf16.mxu0 0
  %521 = vmatmul.mubr.bf16.gmra.mrb[0].mxu0 %v333
  %v522 = vpop.f32.mrb[0].mxu0
  %v523 = vadd.f32 %v426, %v522
  %v524 = vpop.f32.mrb[0].mxu0
  %v525 = vpop.f32.mrb[0].mxu0
  %v526 = vadd.f32 %v429, %v525
  %v527 = vpop.f32.mrb[0].mxu0
  %528 = vdwg.mxu0
  %v529 = vpack.c.bf16 %v470, %v467
  %v530 = vpack.c.bf16 %v478, %v475
  %v531 = vpack.c.bf16 %v486, %v483
  %v532 = vpack.c.bf16 %v494, %v491
  %v533 = vpack.c.bf16 %v502, %v499
  %v534 = vpack.c.bf16 %v510, %v507
  %v535 = vpack.c.bf16 %v518, %v515
  %v536 = vpack.c.bf16 %v526, %v523
  %v545 = vunpack.c.l.b16 %v529
  %v546 = vunpack.c.h.b16 %v529
  %v547 = vunpack.c.l.b16 %v530
  %v548 = vunpack.c.h.b16 %v530
  %v549 = vunpack.c.l.b16 %v531
  %v550 = vunpack.c.h.b16 %v531
  %v551 = vunpack.c.l.b16 %v532
  %v552 = vunpack.c.h.b16 %v532
  %v553 = vunpack.c.l.b16 %v533
  %v554 = vunpack.c.h.b16 %v533
  %v555 = vunpack.c.l.b16 %v534
  %v556 = vunpack.c.h.b16 %v534
  %v557 = vunpack.c.l.b16 %v535
  %v558 = vunpack.c.h.b16 %v535
  %v559 = vunpack.c.l.b16 %v536
  %v560 = vunpack.c.h.b16 %v536
  %v561 = vpack.c.b16 %v545, %v545
  %v562 = vpack.c.b16 %v546, %v546
  %v563 = vpack.c.b16 %v547, %v547
  %v564 = vpack.c.b16 %v548, %v548
  %v565 = vpack.c.b16 %v549, %v549
  %v566 = vpack.c.b16 %v550, %v550
  %v567 = vpack.c.b16 %v551, %v551
  %v568 = vpack.c.b16 %v552, %v552
  %v569 = vpack.c.b16 %v553, %v553
  %v570 = vpack.c.b16 %v554, %v554
  %v571 = vpack.c.b16 %v555, %v555
  %v572 = vpack.c.b16 %v556, %v556
  %v573 = vpack.c.b16 %v557, %v557
  %v574 = vpack.c.b16 %v558, %v558
  %v575 = vpack.c.b16 %v559, %v559
  %v576 = vpack.c.b16 %v560, %v560
  %593 = vst [vmem:[%s2] sm:$0xf] %v561
  %594 = vst [vmem:[%s2 + $0x4] sm:$0xf] %v562
  %595 = vst [vmem:[%s2 + $0x8] sm:$0xf] %v563
  %596 = vst [vmem:[%s2 + $0xc] sm:$0xf] %v564
  %597 = vst [vmem:[%s2 + $0x10] sm:$0xf] %v565
  %598 = vst [vmem:[%s2 + $0x14] sm:$0xf] %v566
  %599 = vst [vmem:[%s2 + $0x18] sm:$0xf] %v567
  %600 = vst [vmem:[%s2 + $0x1c] sm:$0xf] %v568
  %601 = vst [vmem:[%s2 + $0x20] sm:$0xf] %v569
  %602 = vst [vmem:[%s2 + $0x24] sm:$0xf] %v570
  %603 = vst [vmem:[%s2 + $0x28] sm:$0xf] %v571
  %604 = vst [vmem:[%s2 + $0x2c] sm:$0xf] %v572
  %605 = vst [vmem:[%s2 + $0x30] sm:$0xf] %v573
  %606 = vst [vmem:[%s2 + $0x34] sm:$0xf] %v574
  %607 = vst [vmem:[%s2 + $0x38] sm:$0xf] %v575
  %608 = vst [vmem:[%s2 + $0x3c] sm:$0xf] %v576
  %v609 = vadd.f32 %v467, %v470
  %v610 = vadd.f32 %v609, %v475
  %v611 = vadd.f32 %v610, %v478
  %v612 = vadd.f32 %v611, %v483
  %v613 = vadd.f32 %v612, %v486
  %v614 = vadd.f32 %v613, %v491
  %v615 = vadd.f32 %v614, %v494
  %v616 = vadd.f32 %v615, %v499
  %v617 = vadd.f32 %v616, %v502
  %v618 = vadd.f32 %v617, %v507
  %v619 = vadd.f32 %v618, %v510
  %v620 = vadd.f32 %v619, %v515
  %v621 = vadd.f32 %v620, %v518
  %v622 = vadd.f32 %v621, %v523
  %v623 = vadd.f32 %v622, %v526
  %v624 = vrot.slane %v623, 4
  %v625 = vadd.f32 %v623, %v624
  %v626 = vrot.slane %v625, 2
  %v627 = vadd.f32 %v625, %v626
  %v628 = vrot.slane %v627, 1
  %v629 = vadd.f32 %v627, %v628
  %630 = vst [vmem:[%s3] sm:$0x1] %v629
  %v631 = vmul.f32 %v467, %v467
  %v632 = vmul.f32 %v470, %v470
  %v633 = vmul.f32 %v475, %v475
  %v634 = vmul.f32 %v478, %v478
  %v635 = vmul.f32 %v483, %v483
  %v636 = vmul.f32 %v486, %v486
  %v637 = vmul.f32 %v491, %v491
  %v638 = vmul.f32 %v494, %v494
  %v639 = vmul.f32 %v499, %v499
  %v640 = vmul.f32 %v502, %v502
  %v641 = vmul.f32 %v507, %v507
  %v642 = vmul.f32 %v510, %v510
  %v643 = vmul.f32 %v515, %v515
  %v644 = vmul.f32 %v518, %v518
  %v645 = vmul.f32 %v523, %v523
  %v646 = vmul.f32 %v526, %v526
  %v647 = vadd.f32 %v631, %v632
  %v648 = vadd.f32 %v647, %v633
  %v649 = vadd.f32 %v648, %v634
  %v650 = vadd.f32 %v649, %v635
  %v651 = vadd.f32 %v650, %v636
  %v652 = vadd.f32 %v651, %v637
  %v653 = vadd.f32 %v652, %v638
  %v654 = vadd.f32 %v653, %v639
  %v655 = vadd.f32 %v654, %v640
  %v656 = vadd.f32 %v655, %v641
  %v657 = vadd.f32 %v656, %v642
  %v658 = vadd.f32 %v657, %v643
  %v659 = vadd.f32 %v658, %v644
  %v660 = vadd.f32 %v659, %v645
  %v661 = vadd.f32 %v660, %v646
  %v662 = vrot.slane %v661, 4
  %v663 = vadd.f32 %v661, %v662
  %v664 = vrot.slane %v663, 2
  %v665 = vadd.f32 %v663, %v664
  %v666 = vrot.slane %v665, 1
  %v667 = vadd.f32 %v665, %v666
  %668 = vst [vmem:[%s3 + $0x1] sm:$0x1] %v667
  // Predicated region
  $region10: #{_generator_forward.13} parent=0 // pred_check
    _
  $region11: #{_generator_forward.13} parent=0 // pred_check_branch
    %670 = sbr.rel (0) target = $region13
  $region12: #{_generator_forward.13} parent=0 // pred_region
    _
  $region13: #{_generator_forward.13} parent=0 // pred_fallthru
    _
  // Predicated region
  $region14: #{_generator_forward.13} parent=0 // pred_check
    _
  $region15: #{_generator_forward.13} parent=0 // pred_check_branch
    %672 = sbr.rel (0) target = $region17
  $region16: #{_generator_forward.13} parent=0 // pred_region
    _
  $region17: #{_generator_forward.13} parent=0 // pred_fallthru
    _
  // Predicated region
  $region18: #{_generator_forward.13} parent=0 // pred_check
    _
  $region19: #{_generator_forward.13} parent=0 // pred_check_branch
    %674 = sbr.rel (0) target = $region21
  $region20: #{_generator_forward.13} parent=0 // pred_region
    _
  $region21: #{_generator_forward.13} parent=0 // pred_fallthru
    _
  // Predicated region
  $region22: #{_generator_forward.13} parent=0 // pred_check
    _
  $region23: #{_generator_forward.13} parent=0 // pred_check_branch
    %676 = sbr.rel (0) target = $region25
  $region24: #{_generator_forward.13} parent=0 // pred_region
    _
  $region25: #{_generator_forward.13} parent=0 // pred_fallthru
    _

// kernel: tile.48
$region0: #{tile.48}
  #allocation0 [shape = 's32[1]{0}', space=sflag, size = 0x4, scoped, tag = 'scoped memory for tile.48']
  %s0 = inlined_call_operand.vmem [shape: f32[16], index: 0, kind: input, shape index: {}]
  %s1 = inlined_call_operand.vmem [shape: f32[4,16], index: 1, kind: output, shape index: {}]
  // Predicated region
  $region2: #{tile.48} parent=0 // pred_check
    _
  $region3: #{tile.48} parent=0 // pred_check_branch
    %3 = sbr.rel (0) target = $region5
  $region4: #{tile.48} parent=0 // pred_region
    _
  $region5: #{tile.48} parent=0 // pred_fallthru
    _
  %v4 = vld [vmem:[%s0] ss:$0 sm:$0xff]
  %5 = vst [vmem:[%s1] sm:$0xf] %v4

// kernel: tile.49
$region0: #{tile.49}
  %s0 = inlined_call_operand.vmem [shape: f32[4,16], index: 0, kind: input, shape index: {}]
  %s1 = inlined_call_operand.vmem [shape: f32[64], index: 1, kind: output, shape index: {}]
  $region1: #{tile.49} parent=0
    #allocation0 [shape = 'u8[4096]{0}', space=vmem, size = 0x1000, scoped, tag = 'scoped mem for output reshape']
    #allocation1 [shape = 'u8[4096]{0}', space=vmem, size = 0x1000, scoped, tag = 'scoped mem for input reshape']
    %s3 = sshllo.u32 0, 4
    %v4 = vld [vmem:[%s0] sm:%s3]
    %5 = vst [vmem:[#allocation1] sm:%s3] %v4
    %v6 = vld [vmem:[#allocation1] sm:$0x1]
    %vm7 = vcmask 130048
    %8 = vst.msk [vmem:[#allocation0] sm:$0x1] %vm7, %v6
    %s9 = scalar_lea.vmem [#allocation1], 3
    %v10 = vld [vmem:[%s9] sm:$0x1]
    %11 = vrot.lane.b32.xlu0 %v10, 48
    %v12 = vpop.permute.xlu0 %11
    %vm13 = vcmask 523648
    %14 = vst.msk [vmem:[#allocation0] sm:$0x1] %vm13, %v12
    %s15 = scalar_lea.vmem [#allocation1], 2
    %v16 = vld [vmem:[%s15] sm:$0x1]
    %17 = vrot.lane.b32.xlu0 %v16, 32
    %v18 = vpop.permute.xlu0 %17
    %vm19 = vcmask 392448
    %20 = vst.msk [vmem:[#allocation0] sm:$0x1] %vm19, %v18
    %s21 = scalar_lea.vmem [#allocation1], 1
    %v22 = vld [vmem:[%s21] sm:$0x1]
    %23 = vrot.lane.b32.xlu0 %v22, 16
    %v24 = vpop.permute.xlu0 %23
    %vm25 = vcmask 261248
    %26 = vst.msk [vmem:[#allocation0] sm:$0x1] %vm25, %v24
    %s28 = sshllo.u32 0, 1
    %v30 = vld [vmem:[#allocation0] sm:%s28]
    %s31 = sshllo.u32 0, 1
    %32 = vst [vmem:[%s1] sm:%s31] %v30

// kernel: _generator_forward.14
$region0: #{_generator_forward.14}
  #allocation0 [shape = 'u32[]', space=smem, size = 0x4, offset = 0x4, fixed_abs, tag = 'smem constant byte address 0x4 - core index']
  #allocation1 [shape = 'u32[144,128]{1,0:T(1,128)}', space=vmem, size = 0x12000, scoped, tag = 'internal scratch']
  %s0 = inlined_call_operand.vmem [shape: bf16[128,128], index: 0, kind: input, shape index: {}]
  %s1 = inlined_call_operand.vmem [shape: f32[1,128], index: 1, kind: input, shape index: {}]
  %s2 = inlined_call_operand.vmem [shape: f32[1,128], index: 2, kind: input, shape index: {}]
  %s3 = inlined_call_operand.vmem [shape: bf16[128,128], index: 3, kind: output, shape index: {}]
  %s4 = sld [smem:[#allocation0]]
  $region22: #{_generator_forward.14} parent=0
    _
  %s6 = ssub.s32 1, %s4
  %s7 = scalar_select 0, %s6, %s4
  // Predicated region
  $region2: #{_generator_forward.14} parent=0 // pred_check
    _
  $region3: #{_generator_forward.14} parent=0 // pred_check_branch
    %9 = sbr.rel (0) target = $region5
  $region4: #{_generator_forward.14} parent=0 // pred_region
    _
  $region5: #{_generator_forward.14} parent=0 // pred_fallthru
    _
  // Predicated region
  $region6: #{_generator_forward.14} parent=0 // pred_check
    _
  $region7: #{_generator_forward.14} parent=0 // pred_check_branch
    %11 = sbr.rel (0) target = $region9
  $region8: #{_generator_forward.14} parent=0 // pred_region
    _
  $region9: #{_generator_forward.14} parent=0 // pred_fallthru
    _
  // Predicated region
  $region10: #{_generator_forward.14} parent=0 // pred_check
    _
  $region11: #{_generator_forward.14} parent=0 // pred_check_branch
    %13 = sbr.rel (0) target = $region13
  $region12: #{_generator_forward.14} parent=0 // pred_region
    _
  $region13: #{_generator_forward.14} parent=0 // pred_fallthru
    _
  %v14 = vld [vmem:[%s0] sm:$0xf]
  %v15 = vld [vmem:[%s0 + $0x4] sm:$0xf]
  %v16 = vld [vmem:[%s0 + $0x8] sm:$0xf]
  %v17 = vld [vmem:[%s0 + $0xc] sm:$0xf]
  %v18 = vld [vmem:[%s0 + $0x10] sm:$0xf]
  %v19 = vld [vmem:[%s0 + $0x14] sm:$0xf]
  %v20 = vld [vmem:[%s0 + $0x18] sm:$0xf]
  %v21 = vld [vmem:[%s0 + $0x1c] sm:$0xf]
  %v22 = vld [vmem:[%s0 + $0x20] sm:$0xf]
  %v23 = vld [vmem:[%s0 + $0x24] sm:$0xf]
  %v24 = vld [vmem:[%s0 + $0x28] sm:$0xf]
  %v25 = vld [vmem:[%s0 + $0x2c] sm:$0xf]
  %v26 = vld [vmem:[%s0 + $0x30] sm:$0xf]
  %v27 = vld [vmem:[%s0 + $0x34] sm:$0xf]
  %v28 = vld [vmem:[%s0 + $0x38] sm:$0xf]
  %v29 = vld [vmem:[%s0 + $0x3c] sm:$0xf]
  %v30 = vunpack.c.l.bf16 %v14
  %v31 = vunpack.c.l.bf16 %v15
  %v32 = vunpack.c.l.bf16 %v16
  %v33 = vunpack.c.l.bf16 %v17
  %v34 = vunpack.c.l.bf16 %v18
  %v35 = vunpack.c.l.bf16 %v19
  %v36 = vunpack.c.l.bf16 %v20
  %v37 = vunpack.c.l.bf16 %v21
  %v38 = vunpack.c.l.bf16 %v22
  %v39 = vunpack.c.l.bf16 %v23
  %v40 = vunpack.c.l.bf16 %v24
  %v41 = vunpack.c.l.bf16 %v25
  %v42 = vunpack.c.l.bf16 %v26
  %v43 = vunpack.c.l.bf16 %v27
  %v44 = vunpack.c.l.bf16 %v28
  %v45 = vunpack.c.l.bf16 %v29
  %v46 = vld [vmem:[%s1] sm:$0x1]
  %v48 = vlaneseq
  %v49 = vshrl.u32 %v48, 7
  %v50 = vsub.s32 0, %v49
  %v51 = vrot.slane %v46, %v50
  %v53 = vmul.f32 %v30, %v51
  %v54 = vmul.f32 %v31, %v51
  %v55 = vmul.f32 %v32, %v51
  %v56 = vmul.f32 %v33, %v51
  %v57 = vmul.f32 %v34, %v51
  %v58 = vmul.f32 %v35, %v51
  %v59 = vmul.f32 %v36, %v51
  %v60 = vmul.f32 %v37, %v51
  %v61 = vmul.f32 %v38, %v51
  %v62 = vmul.f32 %v39, %v51
  %v63 = vmul.f32 %v40, %v51
  %v64 = vmul.f32 %v41, %v51
  %v65 = vmul.f32 %v42, %v51
  %v66 = vmul.f32 %v43, %v51
  %v67 = vmul.f32 %v44, %v51
  %v68 = vmul.f32 %v45, %v51
  %v69 = vld [vmem:[%s2] sm:$0x1]
  %v71 = vlaneseq
  %v72 = vshrl.u32 %v71, 7
  %v73 = vsub.s32 0, %v72
  %v74 = vrot.slane %v69, %v73
  %v76 = vadd.f32 %v53, %v74
  %v77 = vadd.f32 %v54, %v74
  %v78 = vadd.f32 %v55, %v74
  %v79 = vadd.f32 %v56, %v74
  %v80 = vadd.f32 %v57, %v74
  %v81 = vadd.f32 %v58, %v74
  %v82 = vadd.f32 %v59, %v74
  %v83 = vadd.f32 %v60, %v74
  %v84 = vadd.f32 %v61, %v74
  %v85 = vadd.f32 %v62, %v74
  %v86 = vadd.f32 %v63, %v74
  %v87 = vadd.f32 %v64, %v74
  %v88 = vadd.f32 %v65, %v74
  %v89 = vadd.f32 %v66, %v74
  %v90 = vadd.f32 %v67, %v74
  %v91 = vadd.f32 %v68, %v74
  %v92 = vmax.f32 %v76, 0.0
  %v93 = vmax.f32 %v77, 0.0
  %v94 = vmax.f32 %v78, 0.0
  %v95 = vmax.f32 %v79, 0.0
  %v96 = vmax.f32 %v80, 0.0
  %v97 = vmax.f32 %v81, 0.0
  %v98 = vmax.f32 %v82, 0.0
  %v99 = vmax.f32 %v83, 0.0
  %v100 = vmax.f32 %v84, 0.0
  %v101 = vmax.f32 %v85, 0.0
  %v102 = vmax.f32 %v86, 0.0
  %v103 = vmax.f32 %v87, 0.0
  %v104 = vmax.f32 %v88, 0.0
  %v105 = vmax.f32 %v89, 0.0
  %v106 = vmax.f32 %v90, 0.0
  %v107 = vmax.f32 %v91, 0.0
  %v108 = vpack.c.bf16 %v93, %v92
  %v109 = vpack.c.bf16 %v95, %v94
  %v110 = vpack.c.bf16 %v97, %v96
  %v111 = vpack.c.bf16 %v99, %v98
  %v112 = vpack.c.bf16 %v101, %v100
  %v113 = vpack.c.bf16 %v103, %v102
  %v114 = vpack.c.bf16 %v105, %v104
  %v115 = vpack.c.bf16 %v107, %v106
  %v124 = vunpack.c.l.b16 %v108
  %v125 = vunpack.c.h.b16 %v108
  %v126 = vunpack.c.l.b16 %v109
  %v127 = vunpack.c.h.b16 %v109
  %v128 = vunpack.c.l.b16 %v110
  %v129 = vunpack.c.h.b16 %v110
  %v130 = vunpack.c.l.b16 %v111
  %v131 = vunpack.c.h.b16 %v111
  %v132 = vunpack.c.l.b16 %v112
  %v133 = vunpack.c.h.b16 %v112
  %v134 = vunpack.c.l.b16 %v113
  %v135 = vunpack.c.h.b16 %v113
  %v136 = vunpack.c.l.b16 %v114
  %v137 = vunpack.c.h.b16 %v114
  %v138 = vunpack.c.l.b16 %v115
  %v139 = vunpack.c.h.b16 %v115
  %v140 = vpack.c.b16 %v124, %v124
  %v141 = vpack.c.b16 %v125, %v125
  %v142 = vpack.c.b16 %v126, %v126
  %v143 = vpack.c.b16 %v127, %v127
  %v144 = vpack.c.b16 %v128, %v128
  %v145 = vpack.c.b16 %v129, %v129
  %v146 = vpack.c.b16 %v130, %v130
  %v147 = vpack.c.b16 %v131, %v131
  %v148 = vpack.c.b16 %v132, %v132
  %v149 = vpack.c.b16 %v133, %v133
  %v150 = vpack.c.b16 %v134, %v134
  %v151 = vpack.c.b16 %v135, %v135
  %v152 = vpack.c.b16 %v136, %v136
  %v153 = vpack.c.b16 %v137, %v137
  %v154 = vpack.c.b16 %v138, %v138
  %v155 = vpack.c.b16 %v139, %v139
  %172 = vst [vmem:[%s3] sm:$0xf] %v140
  %173 = vst [vmem:[%s3 + $0x4] sm:$0xf] %v141
  %174 = vst [vmem:[%s3 + $0x8] sm:$0xf] %v142
  %175 = vst [vmem:[%s3 + $0xc] sm:$0xf] %v143
  %176 = vst [vmem:[%s3 + $0x10] sm:$0xf] %v144
  %177 = vst [vmem:[%s3 + $0x14] sm:$0xf] %v145
  %178 = vst [vmem:[%s3 + $0x18] sm:$0xf] %v146
  %179 = vst [vmem:[%s3 + $0x1c] sm:$0xf] %v147
  %180 = vst [vmem:[%s3 + $0x20] sm:$0xf] %v148
  %181 = vst [vmem:[%s3 + $0x24] sm:$0xf] %v149
  %182 = vst [vmem:[%s3 + $0x28] sm:$0xf] %v150
  %183 = vst [vmem:[%s3 + $0x2c] sm:$0xf] %v151
  %184 = vst [vmem:[%s3 + $0x30] sm:$0xf] %v152
  %185 = vst [vmem:[%s3 + $0x34] sm:$0xf] %v153
  %186 = vst [vmem:[%s3 + $0x38] sm:$0xf] %v154
  %187 = vst [vmem:[%s3 + $0x3c] sm:$0xf] %v155
  // Predicated region
  $region14: #{_generator_forward.14} parent=0 // pred_check
    _
  $region15: #{_generator_forward.14} parent=0 // pred_check_branch
    %189 = sbr.rel (0) target = $region17
  $region16: #{_generator_forward.14} parent=0 // pred_region
    _
  $region17: #{_generator_forward.14} parent=0 // pred_fallthru
    _
  // Predicated region
  $region18: #{_generator_forward.14} parent=0 // pred_check
    _
  $region19: #{_generator_forward.14} parent=0 // pred_check_branch
    %191 = sbr.rel (0) target = $region21
  $region20: #{_generator_forward.14} parent=0 // pred_region
    _
  $region21: #{_generator_forward.14} parent=0 // pred_fallthru
    _

// kernel: _generator_forward.15
$region0: #{_generator_forward.15}
  #allocation0 [shape = 'u32[]', space=smem, size = 0x4, offset = 0x4, fixed_abs, tag = 'smem constant byte address 0x4 - core index']
  #allocation1 [shape = 'u32[144,128]{1,0:T(1,128)}', space=vmem, size = 0x12000, scoped, tag = 'internal scratch']
  %s0 = inlined_call_operand.vmem [shape: bf16[512,144], index: 0, kind: input, shape index: {}]
  %s1 = inlined_call_operand.vmem [shape: bf16[144,128], index: 1, kind: input, shape index: {}]
  %s2 = inlined_call_operand.vmem [shape: bf16[512,128], index: 2, kind: output, shape index: {0}]
  %s3 = inlined_call_operand.vmem [shape: f32[2,2,128], index: 3, kind: output, shape index: {1}]
  %4 = xla_tuple %s2, %s3
  %s5 = sld [smem:[#allocation0]]
  $region49: #{_generator_forward.15} parent=0
    _
  %s7 = ssub.s32 1, %s5
  %s8 = scalar_select 0, %s7, %s5
  loop: start=0, step=1, limit=4
  $region2: #{_generator_forward.15} parent=0 // loop_pre_header
    _
  $region3: #{_generator_forward.15} parent=0 // loop_header
    %s10 = sphi 0, %s14
    %p11 = scmp.ge.s32.totalorder %s10, 4
    %s20 = sphi 0, %s22
    %s23 = sphi 0, %s20
    %s24 = sphi 0, %s23
    %s40 = sphi 0, %s24
    %s44 = sphi 0, %s44
    %s46 = sphi 0, %s44
    %s47 = sphi 0, %s46
    %s61 = sphi 0, %s47
    %s67 = sphi 0, %s69
    %s70 = sphi 0, %s67
    %s71 = sphi 0, %s70
    %s87 = sphi 0, %s71
    %s93 = sphi 0, %s95
    %s96 = sphi 0, %s93
    %s97 = sphi 0, %s96
    %s113 = sphi 0, %s97
  $region4: #{_generator_forward.15} parent=0 // loop_header_branch
    %13 = sbr.rel (%p11) target = $region8
  $region5: #{_generator_forward.15} parent=0 // loop_body
    %s15 = ssub.s32 %s10, 1
    %s16 = ssub.s32 %s10, 2
    %s17 = sadd.s32 %s10, 1
    %s18 = ssub.s32 %s10, %s17
    %p19 = scmp.eq.s32.totalorder %s18, 0
    %s21 = sadd.s32 %s20, 1
    %s22 = scalar_select %p19, %s20, %s21
    %p25 = pneg %p19
    %p26 = scmp.eq.s32.totalorder %s10, 1
    %p27 = por %p25, %p26
    %p28 = scmp.ne.s32.totalorder %s20, %s23
    %p29 = scmp.eq.s32.totalorder %s10, 0
    %p30 = por %p28, %p29
    %p31 = scmp.ne.s32.totalorder %s20, %s23
    %p32 = scmp.eq.s32.totalorder %s15, 1
    %p33 = por %p31, %p32
    %p34 = scmp.ne.s32.totalorder %s23, %s24
    %p35 = scmp.eq.s32.totalorder %s15, 0
    %p36 = por %p34, %p35
    %p37 = scmp.ne.s32.totalorder %s23, %s24
    %p38 = scmp.eq.s32.totalorder %s16, 1
    %p39 = por %p37, %p38
    %p41 = scmp.ne.s32.totalorder %s24, %s40
    %p42 = scmp.eq.s32.totalorder %s16, 0
    %p43 = por %p41, %p42
    %s45 = sadd.s32 %s44, 1
    %p48 = scmp.eq.s32.totalorder %s10, 1
    %p49 = scmp.ne.s32.totalorder %s44, %s46
    %p50 = scmp.eq.s32.totalorder %s10, 0
    %p51 = por %p49, %p50
    %p52 = scmp.ne.s32.totalorder %s44, %s46
    %p53 = scmp.eq.s32.totalorder %s15, 1
    %p54 = por %p52, %p53
    %p55 = scmp.ne.s32.totalorder %s46, %s47
    %p56 = scmp.eq.s32.totalorder %s15, 0
    %p57 = por %p55, %p56
    %p58 = scmp.ne.s32.totalorder %s46, %s47
    %p59 = scmp.eq.s32.totalorder %s16, 1
    %p60 = por %p58, %p59
    %p62 = scmp.ne.s32.totalorder %s47, %s61
    %p63 = scmp.eq.s32.totalorder %s16, 0
    %p64 = por %p62, %p63
    %s65 = ssub.s32 %s10, %s17
    %p66 = scmp.eq.s32.totalorder %s65, 0
    %s68 = sadd.s32 %s67, 1
    %s69 = scalar_select %p66, %s67, %s68
    %p72 = pneg %p66
    %p73 = scmp.eq.s32.totalorder %s10, 1
    %p74 = por %p72, %p73
    %p75 = scmp.ne.s32.totalorder %s67, %s70
    %p76 = scmp.eq.s32.totalorder %s10, 0
    %p77 = por %p75, %p76
    %p78 = scmp.ne.s32.totalorder %s67, %s70
    %p79 = scmp.eq.s32.totalorder %s15, 1
    %p80 = por %p78, %p79
    %p81 = scmp.ne.s32.totalorder %s70, %s71
    %p82 = scmp.eq.s32.totalorder %s15, 0
    %p83 = por %p81, %p82
    %p84 = scmp.ne.s32.totalorder %s70, %s71
    %p85 = scmp.eq.s32.totalorder %s16, 1
    %p86 = por %p84, %p85
    %p88 = scmp.ne.s32.totalorder %s71, %s87
    %p89 = scmp.eq.s32.totalorder %s16, 0
    %p90 = por %p88, %p89
    %s91 = ssub.s32 %s10, %s17
    %p92 = scmp.eq.s32.totalorder %s91, 0
    %s94 = sadd.s32 %s93, 1
    %s95 = scalar_select %p92, %s93, %s94
    %p98 = pneg %p92
    %p99 = scmp.eq.s32.totalorder %s10, 1
    %p100 = por %p98, %p99
    %p101 = scmp.ne.s32.totalorder %s93, %s96
    %p102 = scmp.eq.s32.totalorder %s10, 0
    %p103 = por %p101, %p102
    %p104 = scmp.ne.s32.totalorder %s93, %s96
    %p105 = scmp.eq.s32.totalorder %s15, 1
    %p106 = por %p104, %p105
    %p107 = scmp.ne.s32.totalorder %s96, %s97
    %p108 = scmp.eq.s32.totalorder %s15, 0
    %p109 = por %p107, %p108
    %p110 = scmp.ne.s32.totalorder %s96, %s97
    %p111 = scmp.eq.s32.totalorder %s16, 1
    %p112 = por %p110, %p111
    %p114 = scmp.ne.s32.totalorder %s97, %s113
    %p115 = scmp.eq.s32.totalorder %s16, 0
    %p116 = por %p114, %p115
    %p117 = scmp.le.s32.totalorder 1, %s10
    %p118 = scmp.lt.s32.totalorder %s10, 3
    %p119 = pnand %p117, %p118
    %p120 = pneg %p119
    // Predicated region
    $region9: #{_generator_forward.15} parent=5 // pred_check
      _
    $region10: #{_generator_forward.15} parent=5 // pred_check_branch
      %122 = sbr.rel (%p119) target = $region12
    $region11: #{_generator_forward.15} parent=5 // pred_region
      %s123 = ssub.s32 %s10, 1
      // Predicated region
      $region13: #{_generator_forward.15} parent=11 // pred_check
        %p124 = pneg %p57
      $region14: #{_generator_forward.15} parent=11 // pred_check_branch
        %126 = sbr.rel (%p124) target = $region16
      $region15: #{_generator_forward.15} parent=11 // pred_region
        _
      $region16: #{_generator_forward.15} parent=11 // pred_fallthru
        _
    $region12: #{_generator_forward.15} parent=5 // pred_fallthru
      _
    %p127 = scmp.lt.s32.totalorder %s10, 2
    // Predicated region
    $region17: #{_generator_forward.15} parent=5 // pred_check
      %p128 = pneg %p127
    $region18: #{_generator_forward.15} parent=5 // pred_check_branch
      %130 = sbr.rel (%p128) target = $region20
    $region19: #{_generator_forward.15} parent=5 // pred_region
      // Predicated region
      $region21: #{_generator_forward.15} parent=19 // pred_check
        %p131 = pneg %p30
      $region22: #{_generator_forward.15} parent=19 // pred_check_branch
        %133 = sbr.rel (%p131) target = $region24
      $region23: #{_generator_forward.15} parent=19 // pred_region
        %s134 = smul.u32 32, %s10
        %p135 = scmp.lt.s32.totalorder %s134, 63
        %s136 = scalar_select %p135, %s134, 63
        %s137 = smul.addr %s136, 2
        %s138 = smul.addr %s137, 4
        %s139 = scalar_lea.vmem %s0, %s138
        %s140 = smul.u32 32, %s10
      $region24: #{_generator_forward.15} parent=19 // pred_fallthru
        _
    $region20: #{_generator_forward.15} parent=5 // pred_fallthru
      _
    %p141 = scmp.le.s32.totalorder 1, %s10
    %p142 = scmp.lt.s32.totalorder %s10, 3
    %p143 = pnand %p141, %p142
    %p144 = pneg %p143
    // Predicated region
    $region25: #{_generator_forward.15} parent=5 // pred_check
      _
    $region26: #{_generator_forward.15} parent=5 // pred_check_branch
      %146 = sbr.rel (%p143) target = $region28
    $region27: #{_generator_forward.15} parent=5 // pred_region
      %s147 = ssub.s32 %s10, 1
      %s148 = smul.u32 32, %s15
      %p149 = scmp.lt.s32.totalorder %s148, 63
      %s150 = scalar_select %p149, %s148, 63
      %s151 = smul.addr %s150, 2
      %s152 = smul.addr %s151, 4
      %s153 = scalar_lea.vmem %s0, %s152
      %p154 = pneg %p36
      %p155 = pneg %p33
      %p156 = pneg %p57
      %p157 = pneg %p54
      %p158 = pneg %p83
      %p159 = pneg %p80
      %s160 = smul.u32 32, %s15
      %p161 = scmp.lt.s32.totalorder %s160, 63
      %s162 = scalar_select %p161, %s160, 63
      %s163 = smul.addr %s162, 4
      %s164 = scalar_lea.vmem %s2, %s163
      %p165 = pneg %p109
      %p166 = pneg %p106
      %p167 = scmp.lt.s32.totalorder %s15, 1
      %s168 = scalar_select %p167, %s15, 1
      %s169 = smul.addr %s168, 2
      %s170 = scalar_lea.vmem %s3, %s169
      %s171 = smul.u32 32, %s15
      %p172 = scmp.lt.s32.totalorder %s171, 63
      %s173 = scalar_select %p172, %s171, 63
      %s174 = smul.addr %s173, 2
      %s175 = smul.addr %s174, 4
      %s176 = scalar_lea.vmem %s0, %s175
      %s177 = smul.u32 32, %s15
      %s178 = smul.u32 32, %s15
      %p179 = scmp.lt.s32.totalorder %s178, 63
      %s180 = scalar_select %p179, %s178, 63
      %s181 = smul.addr %s180, 4
      %s182 = scalar_lea.vmem %s2, %s181
      %s183 = smul.u32 32, %s15
      %p184 = scmp.lt.s32.totalorder %s15, 1
      %s185 = scalar_select %p184, %s15, 1
      %s186 = smul.addr %s185, 2
      %s187 = scalar_lea.vmem %s3, %s186
      %v189 = vld [vmem:[%s176] sm:$0xff]
      %v190 = vld [vmem:[%s176 + $0x8] sm:$0xff]
      %v191 = vld [vmem:[%s176 + $0x10] sm:$0xff]
      %v192 = vld [vmem:[%s176 + $0x18] sm:$0xff]
      %v193 = vld [vmem:[%s176 + $0x20] sm:$0xff]
      %v194 = vld [vmem:[%s176 + $0x28] sm:$0xff]
      %v195 = vld [vmem:[%s176 + $0x30] sm:$0xff]
      %v196 = vld [vmem:[%s176 + $0x38] sm:$0xff]
      %v197 = vld [vmem:[%s176 + $0x40] sm:$0xff]
      %v198 = vld [vmem:[%s176 + $0x48] sm:$0xff]
      %v199 = vld [vmem:[%s176 + $0x50] sm:$0xff]
      %v200 = vld [vmem:[%s176 + $0x58] sm:$0xff]
      %v201 = vld [vmem:[%s176 + $0x60] sm:$0xff]
      %v202 = vld [vmem:[%s176 + $0x68] sm:$0xff]
      %v203 = vld [vmem:[%s176 + $0x70] sm:$0xff]
      %v204 = vld [vmem:[%s176 + $0x78] sm:$0xff]
      %v205 = vld [vmem:[%s176 + $0x80] sm:$0xff]
      %v206 = vld [vmem:[%s176 + $0x88] sm:$0xff]
      %v207 = vld [vmem:[%s176 + $0x90] sm:$0xff]
      %v208 = vld [vmem:[%s176 + $0x98] sm:$0xff]
      %v209 = vld [vmem:[%s176 + $0xa0] sm:$0xff]
      %v210 = vld [vmem:[%s176 + $0xa8] sm:$0xff]
      %v211 = vld [vmem:[%s176 + $0xb0] sm:$0xff]
      %v212 = vld [vmem:[%s176 + $0xb8] sm:$0xff]
      %v213 = vld [vmem:[%s176 + $0xc0] sm:$0xff]
      %v214 = vld [vmem:[%s176 + $0xc8] sm:$0xff]
      %v215 = vld [vmem:[%s176 + $0xd0] sm:$0xff]
      %v216 = vld [vmem:[%s176 + $0xd8] sm:$0xff]
      %v217 = vld [vmem:[%s176 + $0xe0] sm:$0xff]
      %v218 = vld [vmem:[%s176 + $0xe8] sm:$0xff]
      %v219 = vld [vmem:[%s176 + $0xf0] sm:$0xff]
      %v220 = vld [vmem:[%s176 + $0xf8] sm:$0xff]
      %v221 = vld [vmem:[%s1] sm:$0xf]
      %v222 = vld [vmem:[%s1 + $0x4] sm:$0xf]
      %v223 = vld [vmem:[%s1 + $0x8] sm:$0xf]
      %v224 = vld [vmem:[%s1 + $0xc] sm:$0xf]
      %v225 = vld [vmem:[%s1 + $0x10] sm:$0xf]
      %v226 = vld [vmem:[%s1 + $0x14] sm:$0xf]
      %v227 = vld [vmem:[%s1 + $0x18] sm:$0xf]
      %v228 = vld [vmem:[%s1 + $0x1c] sm:$0xf]
      %v229 = vld [vmem:[%s1 + $0x20] sm:$0xf]
      %v230 = vld [vmem:[%s1 + $0x24] sm:$0xf]
      %v231 = vld [vmem:[%s1 + $0x28] sm:$0xf]
      %v232 = vld [vmem:[%s1 + $0x2c] sm:$0xf]
      %v233 = vld [vmem:[%s1 + $0x30] sm:$0xf]
      %v234 = vld [vmem:[%s1 + $0x34] sm:$0xf]
      %v235 = vld [vmem:[%s1 + $0x38] sm:$0xf]
      %v236 = vld [vmem:[%s1 + $0x3c] sm:$0xf]
      %v237 = vld [vmem:[%s1 + $0x40] sm:$0xf]
      %v238 = vld [vmem:[%s1 + $0x44] sm:$0xf]
      %v271 = vunpack.c.l.b16 %v189
      %v272 = vunpack.c.h.b16 %v189
      %v273 = vunpack.c.l.b16 %v190
      %v274 = vunpack.c.h.b16 %v190
      %v275 = vunpack.c.l.b16 %v191
      %v276 = vunpack.c.h.b16 %v191
      %v277 = vunpack.c.l.b16 %v192
      %v278 = vunpack.c.h.b16 %v192
      %v279 = vunpack.c.l.b16 %v193
      %v280 = vunpack.c.h.b16 %v193
      %v281 = vunpack.c.l.b16 %v194
      %v282 = vunpack.c.h.b16 %v194
      %v283 = vunpack.c.l.b16 %v195
      %v284 = vunpack.c.h.b16 %v195
      %v285 = vunpack.c.l.b16 %v196
      %v286 = vunpack.c.h.b16 %v196
      %v287 = vunpack.c.l.b16 %v197
      %v288 = vunpack.c.h.b16 %v197
      %v289 = vunpack.c.l.b16 %v198
      %v290 = vunpack.c.h.b16 %v198
      %v291 = vunpack.c.l.b16 %v199
      %v292 = vunpack.c.h.b16 %v199
      %v293 = vunpack.c.l.b16 %v200
      %v294 = vunpack.c.h.b16 %v200
      %v295 = vunpack.c.l.b16 %v201
      %v296 = vunpack.c.h.b16 %v201
      %v297 = vunpack.c.l.b16 %v202
      %v298 = vunpack.c.h.b16 %v202
      %v299 = vunpack.c.l.b16 %v203
      %v300 = vunpack.c.h.b16 %v203
      %v301 = vunpack.c.l.b16 %v204
      %v302 = vunpack.c.h.b16 %v204
      %v303 = vunpack.c.l.b16 %v205
      %v304 = vunpack.c.h.b16 %v205
      %v305 = vunpack.c.l.b16 %v206
      %v306 = vunpack.c.h.b16 %v206
      %v307 = vunpack.c.l.b16 %v207
      %v308 = vunpack.c.h.b16 %v207
      %v309 = vunpack.c.l.b16 %v208
      %v310 = vunpack.c.h.b16 %v208
      %v311 = vunpack.c.l.b16 %v209
      %v312 = vunpack.c.h.b16 %v209
      %v313 = vunpack.c.l.b16 %v210
      %v314 = vunpack.c.h.b16 %v210
      %v315 = vunpack.c.l.b16 %v211
      %v316 = vunpack.c.h.b16 %v211
      %v317 = vunpack.c.l.b16 %v212
      %v318 = vunpack.c.h.b16 %v212
      %v319 = vunpack.c.l.b16 %v213
      %v320 = vunpack.c.h.b16 %v213
      %v321 = vunpack.c.l.b16 %v214
      %v322 = vunpack.c.h.b16 %v214
      %v323 = vunpack.c.l.b16 %v215
      %v324 = vunpack.c.h.b16 %v215
      %v325 = vunpack.c.l.b16 %v216
      %v326 = vunpack.c.h.b16 %v216
      %v327 = vunpack.c.l.b16 %v217
      %v328 = vunpack.c.h.b16 %v217
      %v329 = vunpack.c.l.b16 %v218
      %v330 = vunpack.c.h.b16 %v218
      %v331 = vunpack.c.l.b16 %v219
      %v332 = vunpack.c.h.b16 %v219
      %v333 = vunpack.c.l.b16 %v220
      %v334 = vunpack.c.h.b16 %v220
      %v335 = vpack.c.b16 %v273, %v271
      %v336 = vpack.c.b16 %v274, %v272
      %v337 = vpack.c.b16 %v277, %v275
      %v338 = vpack.c.b16 %v278, %v276
      %v339 = vpack.c.b16 %v281, %v279
      %v340 = vpack.c.b16 %v282, %v280
      %v341 = vpack.c.b16 %v285, %v283
      %v342 = vpack.c.b16 %v286, %v284
      %v343 = vpack.c.b16 %v289, %v287
      %v344 = vpack.c.b16 %v290, %v288
      %v345 = vpack.c.b16 %v293, %v291
      %v346 = vpack.c.b16 %v294, %v292
      %v347 = vpack.c.b16 %v297, %v295
      %v348 = vpack.c.b16 %v298, %v296
      %v349 = vpack.c.b16 %v301, %v299
      %v350 = vpack.c.b16 %v302, %v300
      %v351 = vpack.c.b16 %v305, %v303
      %v352 = vpack.c.b16 %v306, %v304
      %v353 = vpack.c.b16 %v309, %v307
      %v354 = vpack.c.b16 %v310, %v308
      %v355 = vpack.c.b16 %v313, %v311
      %v356 = vpack.c.b16 %v314, %v312
      %v357 = vpack.c.b16 %v317, %v315
      %v358 = vpack.c.b16 %v318, %v316
      %v359 = vpack.c.b16 %v321, %v319
      %v360 = vpack.c.b16 %v322, %v320
      %v361 = vpack.c.b16 %v325, %v323
      %v362 = vpack.c.b16 %v326, %v324
      %v363 = vpack.c.b16 %v329, %v327
      %v364 = vpack.c.b16 %v330, %v328
      %v365 = vpack.c.b16 %v333, %v331
      %v366 = vpack.c.b16 %v334, %v332
      %v401 = vunpack.c.l.b16 %v221
      %v402 = vunpack.c.l.b16 %v222
      %v403 = vunpack.c.l.b16 %v223
      %v404 = vunpack.c.l.b16 %v224
      %v405 = vunpack.c.l.b16 %v225
      %v406 = vunpack.c.l.b16 %v226
      %v407 = vunpack.c.l.b16 %v227
      %v408 = vunpack.c.l.b16 %v228
      %v409 = vunpack.c.l.b16 %v229
      %v410 = vunpack.c.l.b16 %v230
      %v411 = vunpack.c.l.b16 %v231
      %v412 = vunpack.c.l.b16 %v232
      %v413 = vunpack.c.l.b16 %v233
      %v414 = vunpack.c.l.b16 %v234
      %v415 = vunpack.c.l.b16 %v235
      %v416 = vunpack.c.l.b16 %v236
      %v417 = vunpack.c.l.b16 %v237
      %v418 = vunpack.c.l.b16 %v238
      %v419 = vpack.c.b16 %v402, %v401
      %v420 = vpack.c.b16 %v404, %v403
      %v421 = vpack.c.b16 %v406, %v405
      %v422 = vpack.c.b16 %v408, %v407
      %v423 = vpack.c.b16 %v410, %v409
      %v424 = vpack.c.b16 %v412, %v411
      %v425 = vpack.c.b16 %v414, %v413
      %v426 = vpack.c.b16 %v416, %v415
      %v427 = vpack.c.b16 %v418, %v417
      %vm437 = vcmask 130048
      %v439 = vsel %vm437, %v336, 0
      %v442 = vsel %vm437, %v338, 0
      %v445 = vsel %vm437, %v340, 0
      %v448 = vsel %vm437, %v342, 0
      %v451 = vsel %vm437, %v344, 0
      %v454 = vsel %vm437, %v346, 0
      %v457 = vsel %vm437, %v348, 0
      %v460 = vsel %vm437, %v350, 0
      %v463 = vsel %vm437, %v352, 0
      %v466 = vsel %vm437, %v354, 0
      %v469 = vsel %vm437, %v356, 0
      %v472 = vsel %vm437, %v358, 0
      %v475 = vsel %vm437, %v360, 0
      %v478 = vsel %vm437, %v362, 0
      %v481 = vsel %vm437, %v364, 0
      %v484 = vsel %vm437, %v366, 0
      %486 = vmatprep.subr.bf16.mxu0 0
      %487 = vmatpush1.bf16.msra.mxu0 %v419
      %488 = vmatprep.subr.bf16.mxu0 0
      %489 = vmatpush1.bf16.msra.mxu0 %v420
      %490 = vmatprep.subr.bf16.mxu0 0
      %491 = vmatpush1.bf16.msra.mxu0 %v421
      %492 = vmatprep.subr.bf16.mxu0 0
      %493 = vmatpush1.bf16.msra.mxu0 %v422
      %494 = vmatprep.subr.bf16.mxu0 0
      %495 = vmatpush1.bf16.msra.mxu0 %v423
      %496 = vmatprep.subr.bf16.mxu0 0
      %497 = vmatpush1.bf16.msra.mxu0 %v424
      %498 = vmatprep.subr.bf16.mxu0 0
      %499 = vmatpush1.bf16.msra.mxu0 %v425
      %500 = vmatprep.subr.bf16.mxu0 0
      %501 = vmatpush1.bf16.msra.mxu0 %v426
      %502 = vmatprep.subr.bf16.mxu0 0
      %503 = vmatpush1.bf16.msra.mxu0 %v427
      %504 = vmatprep.subr.bf16.mxu0 0
      %505 = vmatpush1.bf16.msra.mxu0 0
      %506 = vmatprep.subr.bf16.mxu0 0
      %507 = vmatpush1.bf16.msra.mxu0 0
      %508 = vmatprep.subr.bf16.mxu0 0
      %509 = vmatpush1.bf16.msra.mxu0 0
      %510 = vmatprep.subr.bf16.mxu0 0
      %511 = vmatpush1.bf16.msra.mxu0 0
      %512 = vmatprep.subr.bf16.mxu0 0
      %513 = vmatpush1.bf16.msra.mxu0 0
      %514 = vmatprep.subr.bf16.mxu0 0
      %515 = vmatpush1.bf16.msra.mxu0 0
      %516 = vmatprep.subr.bf16.mxu0 0
      %517 = vmatpush1.bf16.msra.mxu0 0
      %518 = vmatprep.mubr.bf16.mxu0 %v439
      %519 = vmatmul.mubr.bf16.gmra.mrb[0].mxu0 %v335
      %v520 = vpop.f32.mrb[0].mxu0
      %v521 = vadd.f32 0.0, %v520
      %v522 = vpop.f32.mrb[0].mxu0
      %v523 = vpop.f32.mrb[0].mxu0
      %v524 = vadd.f32 0.0, %v523
      %v525 = vpop.f32.mrb[0].mxu0
      %526 = vmatprep.mubr.bf16.mxu0 %v442
      %527 = vmatmul.mubr.bf16.gmra.mrb[0].mxu0 %v337
      %v528 = vpop.f32.mrb[0].mxu0
      %v529 = vadd.f32 0.0, %v528
      %v530 = vpop.f32.mrb[0].mxu0
      %v531 = vpop.f32.mrb[0].mxu0
      %v532 = vadd.f32 0.0, %v531
      %v533 = vpop.f32.mrb[0].mxu0
      %534 = vmatprep.mubr.bf16.mxu0 %v445
      %535 = vmatmul.mubr.bf16.gmra.mrb[0].mxu0 %v339
      %v536 = vpop.f32.mrb[0].mxu0
      %v537 = vadd.f32 0.0, %v536
      %v538 = vpop.f32.mrb[0].mxu0
      %v539 = vpop.f32.mrb[0].mxu0
      %v540 = vadd.f32 0.0, %v539
      %v541 = vpop.f32.mrb[0].mxu0
      %542 = vmatprep.mubr.bf16.mxu0 %v448
      %543 = vmatmul.mubr.bf16.gmra.mrb[0].mxu0 %v341
      %v544 = vpop.f32.mrb[0].mxu0
      %v545 = vadd.f32 0.0, %v544
      %v546 = vpop.f32.mrb[0].mxu0
      %v547 = vpop.f32.mrb[0].mxu0
      %v548 = vadd.f32 0.0, %v547
      %v549 = vpop.f32.mrb[0].mxu0
      %550 = vmatprep.mubr.bf16.mxu0 %v451
      %551 = vmatmul.mubr.bf16.gmra.mrb[0].mxu0 %v343
      %v552 = vpop.f32.mrb[0].mxu0
      %v553 = vadd.f32 0.0, %v552
      %v554 = vpop.f32.mrb[0].mxu0
      %v555 = vpop.f32.mrb[0].mxu0
      %v556 = vadd.f32 0.0, %v555
      %v557 = vpop.f32.mrb[0].mxu0
      %558 = vmatprep.mubr.bf16.mxu0 %v454
      %559 = vmatmul.mubr.bf16.gmra.mrb[0].mxu0 %v345
      %v560 = vpop.f32.mrb[0].mxu0
      %v561 = vadd.f32 0.0, %v560
      %v562 = vpop.f32.mrb[0].mxu0
      %v563 = vpop.f32.mrb[0].mxu0
      %v564 = vadd.f32 0.0, %v563
      %v565 = vpop.f32.mrb[0].mxu0
      %566 = vmatprep.mubr.bf16.mxu0 %v457
      %567 = vmatmul.mubr.bf16.gmra.mrb[0].mxu0 %v347
      %v568 = vpop.f32.mrb[0].mxu0
      %v569 = vadd.f32 0.0, %v568
      %v570 = vpop.f32.mrb[0].mxu0
      %v571 = vpop.f32.mrb[0].mxu0
      %v572 = vadd.f32 0.0, %v571
      %v573 = vpop.f32.mrb[0].mxu0
      %574 = vmatprep.mubr.bf16.mxu0 %v460
      %575 = vmatmul.mubr.bf16.gmra.mrb[0].mxu0 %v349
      %v576 = vpop.f32.mrb[0].mxu0
      %v577 = vadd.f32 0.0, %v576
      %v578 = vpop.f32.mrb[0].mxu0
      %v579 = vpop.f32.mrb[0].mxu0
      %v580 = vadd.f32 0.0, %v579
      %v581 = vpop.f32.mrb[0].mxu0
      %582 = vmatprep.mubr.bf16.mxu0 %v463
      %583 = vmatmul.mubr.bf16.gmra.mrb[0].mxu0 %v351
      %v584 = vpop.f32.mrb[0].mxu0
      %v585 = vadd.f32 0.0, %v584
      %v586 = vpop.f32.mrb[0].mxu0
      %v587 = vpop.f32.mrb[0].mxu0
      %v588 = vadd.f32 0.0, %v587
      %v589 = vpop.f32.mrb[0].mxu0
      %590 = vmatprep.mubr.bf16.mxu0 %v466
      %591 = vmatmul.mubr.bf16.gmra.mrb[0].mxu0 %v353
      %v592 = vpop.f32.mrb[0].mxu0
      %v593 = vadd.f32 0.0, %v592
      %v594 = vpop.f32.mrb[0].mxu0
      %v595 = vpop.f32.mrb[0].mxu0
      %v596 = vadd.f32 0.0, %v595
      %v597 = vpop.f32.mrb[0].mxu0
      %598 = vmatprep.mubr.bf16.mxu0 %v469
      %599 = vmatmul.mubr.bf16.gmra.mrb[0].mxu0 %v355
      %v600 = vpop.f32.mrb[0].mxu0
      %v601 = vadd.f32 0.0, %v600
      %v602 = vpop.f32.mrb[0].mxu0
      %v603 = vpop.f32.mrb[0].mxu0
      %v604 = vadd.f32 0.0, %v603
      %v605 = vpop.f32.mrb[0].mxu0
      %606 = vmatprep.mubr.bf16.mxu0 %v472
      %607 = vmatmul.mubr.bf16.gmra.mrb[0].mxu0 %v357
      %v608 = vpop.f32.mrb[0].mxu0
      %v609 = vadd.f32 0.0, %v608
      %v610 = vpop.f32.mrb[0].mxu0
      %v611 = vpop.f32.mrb[0].mxu0
      %v612 = vadd.f32 0.0, %v611
      %v613 = vpop.f32.mrb[0].mxu0
      %614 = vmatprep.mubr.bf16.mxu0 %v475
      %615 = vmatmul.mubr.bf16.gmra.mrb[0].mxu0 %v359
      %v616 = vpop.f32.mrb[0].mxu0
      %v617 = vadd.f32 0.0, %v616
      %v618 = vpop.f32.mrb[0].mxu0
      %v619 = vpop.f32.mrb[0].mxu0
      %v620 = vadd.f32 0.0, %v619
      %v621 = vpop.f32.mrb[0].mxu0
      %622 = vmatprep.mubr.bf16.mxu0 %v478
      %623 = vmatmul.mubr.bf16.gmra.mrb[0].mxu0 %v361
      %v624 = vpop.f32.mrb[0].mxu0
      %v625 = vadd.f32 0.0, %v624
      %v626 = vpop.f32.mrb[0].mxu0
      %v627 = vpop.f32.mrb[0].mxu0
      %v628 = vadd.f32 0.0, %v627
      %v629 = vpop.f32.mrb[0].mxu0
      %630 = vmatprep.mubr.bf16.mxu0 %v481
      %631 = vmatmul.mubr.bf16.gmra.mrb[0].mxu0 %v363
      %v632 = vpop.f32.mrb[0].mxu0
      %v633 = vadd.f32 0.0, %v632
      %v634 = vpop.f32.mrb[0].mxu0
      %v635 = vpop.f32.mrb[0].mxu0
      %v636 = vadd.f32 0.0, %v635
      %v637 = vpop.f32.mrb[0].mxu0
      %638 = vmatprep.mubr.bf16.mxu0 %v484
      %639 = vmatmul.mubr.bf16.gmra.mrb[0].mxu0 %v365
      %v640 = vpop.f32.mrb[0].mxu0
      %v641 = vadd.f32 0.0, %v640
      %v642 = vpop.f32.mrb[0].mxu0
      %v643 = vpop.f32.mrb[0].mxu0
      %v644 = vadd.f32 0.0, %v643
      %v645 = vpop.f32.mrb[0].mxu0
      %646 = vdwg.mxu0
      %v647 = vpack.c.bf16 %v524, %v521
      %v648 = vpack.c.bf16 %v532, %v529
      %v649 = vpack.c.bf16 %v540, %v537
      %v650 = vpack.c.bf16 %v548, %v545
      %v651 = vpack.c.bf16 %v556, %v553
      %v652 = vpack.c.bf16 %v564, %v561
      %v653 = vpack.c.bf16 %v572, %v569
      %v654 = vpack.c.bf16 %v580, %v577
      %v655 = vpack.c.bf16 %v588, %v585
      %v656 = vpack.c.bf16 %v596, %v593
      %v657 = vpack.c.bf16 %v604, %v601
      %v658 = vpack.c.bf16 %v612, %v609
      %v659 = vpack.c.bf16 %v620, %v617
      %v660 = vpack.c.bf16 %v628, %v625
      %v661 = vpack.c.bf16 %v636, %v633
      %v662 = vpack.c.bf16 %v644, %v641
      %v679 = vunpack.c.l.b16 %v647
      %v680 = vunpack.c.h.b16 %v647
      %v681 = vunpack.c.l.b16 %v648
      %v682 = vunpack.c.h.b16 %v648
      %v683 = vunpack.c.l.b16 %v649
      %v684 = vunpack.c.h.b16 %v649
      %v685 = vunpack.c.l.b16 %v650
      %v686 = vunpack.c.h.b16 %v650
      %v687 = vunpack.c.l.b16 %v651
      %v688 = vunpack.c.h.b16 %v651
      %v689 = vunpack.c.l.b16 %v652
      %v690 = vunpack.c.h.b16 %v652
      %v691 = vunpack.c.l.b16 %v653
      %v692 = vunpack.c.h.b16 %v653
      %v693 = vunpack.c.l.b16 %v654
      %v694 = vunpack.c.h.b16 %v654
      %v695 = vunpack.c.l.b16 %v655
      %v696 = vunpack.c.h.b16 %v655
      %v697 = vunpack.c.l.b16 %v656
      %v698 = vunpack.c.h.b16 %v656
      %v699 = vunpack.c.l.b16 %v657
      %v700 = vunpack.c.h.b16 %v657
      %v701 = vunpack.c.l.b16 %v658
      %v702 = vunpack.c.h.b16 %v658
      %v703 = vunpack.c.l.b16 %v659
      %v704 = vunpack.c.h.b16 %v659
      %v705 = vunpack.c.l.b16 %v660
      %v706 = vunpack.c.h.b16 %v660
      %v707 = vunpack.c.l.b16 %v661
      %v708 = vunpack.c.h.b16 %v661
      %v709 = vunpack.c.l.b16 %v662
      %v710 = vunpack.c.h.b16 %v662
      %v711 = vpack.c.b16 %v679, %v679
      %v712 = vpack.c.b16 %v680, %v680
      %v713 = vpack.c.b16 %v681, %v681
      %v714 = vpack.c.b16 %v682, %v682
      %v715 = vpack.c.b16 %v683, %v683
      %v716 = vpack.c.b16 %v684, %v684
      %v717 = vpack.c.b16 %v685, %v685
      %v718 = vpack.c.b16 %v686, %v686
      %v719 = vpack.c.b16 %v687, %v687
      %v720 = vpack.c.b16 %v688, %v688
      %v721 = vpack.c.b16 %v689, %v689
      %v722 = vpack.c.b16 %v690, %v690
      %v723 = vpack.c.b16 %v691, %v691
      %v724 = vpack.c.b16 %v692, %v692
      %v725 = vpack.c.b16 %v693, %v693
      %v726 = vpack.c.b16 %v694, %v694
      %v727 = vpack.c.b16 %v695, %v695
      %v728 = vpack.c.b16 %v696, %v696
      %v729 = vpack.c.b16 %v697, %v697
      %v730 = vpack.c.b16 %v698, %v698
      %v731 = vpack.c.b16 %v699, %v699
      %v732 = vpack.c.b16 %v700, %v700
      %v733 = vpack.c.b16 %v701, %v701
      %v734 = vpack.c.b16 %v702, %v702
      %v735 = vpack.c.b16 %v703, %v703
      %v736 = vpack.c.b16 %v704, %v704
      %v737 = vpack.c.b16 %v705, %v705
      %v738 = vpack.c.b16 %v706, %v706
      %v739 = vpack.c.b16 %v707, %v707
      %v740 = vpack.c.b16 %v708, %v708
      %v741 = vpack.c.b16 %v709, %v709
      %v742 = vpack.c.b16 %v710, %v710
      %775 = vst [vmem:[%s182] sm:$0xf] %v711
      %776 = vst [vmem:[%s182 + $0x4] sm:$0xf] %v712
      %777 = vst [vmem:[%s182 + $0x8] sm:$0xf] %v713
      %778 = vst [vmem:[%s182 + $0xc] sm:$0xf] %v714
      %779 = vst [vmem:[%s182 + $0x10] sm:$0xf] %v715
      %780 = vst [vmem:[%s182 + $0x14] sm:$0xf] %v716
      %781 = vst [vmem:[%s182 + $0x18] sm:$0xf] %v717
      %782 = vst [vmem:[%s182 + $0x1c] sm:$0xf] %v718
      %783 = vst [vmem:[%s182 + $0x20] sm:$0xf] %v719
      %784 = vst [vmem:[%s182 + $0x24] sm:$0xf] %v720
      %785 = vst [vmem:[%s182 + $0x28] sm:$0xf] %v721
      %786 = vst [vmem:[%s182 + $0x2c] sm:$0xf] %v722
      %787 = vst [vmem:[%s182 + $0x30] sm:$0xf] %v723
      %788 = vst [vmem:[%s182 + $0x34] sm:$0xf] %v724
      %789 = vst [vmem:[%s182 + $0x38] sm:$0xf] %v725
      %790 = vst [vmem:[%s182 + $0x3c] sm:$0xf] %v726
      %791 = vst [vmem:[%s182 + $0x40] sm:$0xf] %v727
      %792 = vst [vmem:[%s182 + $0x44] sm:$0xf] %v728
      %793 = vst [vmem:[%s182 + $0x48] sm:$0xf] %v729
      %794 = vst [vmem:[%s182 + $0x4c] sm:$0xf] %v730
      %795 = vst [vmem:[%s182 + $0x50] sm:$0xf] %v731
      %796 = vst [vmem:[%s182 + $0x54] sm:$0xf] %v732
      %797 = vst [vmem:[%s182 + $0x58] sm:$0xf] %v733
      %798 = vst [vmem:[%s182 + $0x5c] sm:$0xf] %v734
      %799 = vst [vmem:[%s182 + $0x60] sm:$0xf] %v735
      %800 = vst [vmem:[%s182 + $0x64] sm:$0xf] %v736
      %801 = vst [vmem:[%s182 + $0x68] sm:$0xf] %v737
      %802 = vst [vmem:[%s182 + $0x6c] sm:$0xf] %v738
      %803 = vst [vmem:[%s182 + $0x70] sm:$0xf] %v739
      %804 = vst [vmem:[%s182 + $0x74] sm:$0xf] %v740
      %805 = vst [vmem:[%s182 + $0x78] sm:$0xf] %v741
      %806 = vst [vmem:[%s182 + $0x7c] sm:$0xf] %v742
      %v807 = vadd.f32 %v521, %v524
      %v808 = vadd.f32 %v807, %v529
      %v809 = vadd.f32 %v808, %v532
      %v810 = vadd.f32 %v809, %v537
      %v811 = vadd.f32 %v810, %v540
      %v812 = vadd.f32 %v811, %v545
      %v813 = vadd.f32 %v812, %v548
      %v814 = vadd.f32 %v813, %v553
      %v815 = vadd.f32 %v814, %v556
      %v816 = vadd.f32 %v815, %v561
      %v817 = vadd.f32 %v816, %v564
      %v818 = vadd.f32 %v817, %v569
      %v819 = vadd.f32 %v818, %v572
      %v820 = vadd.f32 %v819, %v577
      %v821 = vadd.f32 %v820, %v580
      %v822 = vadd.f32 %v821, %v585
      %v823 = vadd.f32 %v822, %v588
      %v824 = vadd.f32 %v823, %v593
      %v825 = vadd.f32 %v824, %v596
      %v826 = vadd.f32 %v825, %v601
      %v827 = vadd.f32 %v826, %v604
      %v828 = vadd.f32 %v827, %v609
      %v829 = vadd.f32 %v828, %v612
      %v830 = vadd.f32 %v829, %v617
      %v831 = vadd.f32 %v830, %v620
      %v832 = vadd.f32 %v831, %v625
      %v833 = vadd.f32 %v832, %v628
      %v834 = vadd.f32 %v833, %v633
      %v835 = vadd.f32 %v834, %v636
      %v836 = vadd.f32 %v835, %v641
      %v837 = vadd.f32 %v836, %v644
      %v838 = vrot.slane %v837, 4
      %v839 = vadd.f32 %v837, %v838
      %v840 = vrot.slane %v839, 2
      %v841 = vadd.f32 %v839, %v840
      %v842 = vrot.slane %v841, 1
      %v843 = vadd.f32 %v841, %v842
      %844 = vst [vmem:[%s187] sm:$0x1] %v843
      %v845 = vmul.f32 %v521, %v521
      %v846 = vmul.f32 %v524, %v524
      %v847 = vmul.f32 %v529, %v529
      %v848 = vmul.f32 %v532, %v532
      %v849 = vmul.f32 %v537, %v537
      %v850 = vmul.f32 %v540, %v540
      %v851 = vmul.f32 %v545, %v545
      %v852 = vmul.f32 %v548, %v548
      %v853 = vmul.f32 %v553, %v553
      %v854 = vmul.f32 %v556, %v556
      %v855 = vmul.f32 %v561, %v561
      %v856 = vmul.f32 %v564, %v564
      %v857 = vmul.f32 %v569, %v569
      %v858 = vmul.f32 %v572, %v572
      %v859 = vmul.f32 %v577, %v577
      %v860 = vmul.f32 %v580, %v580
      %v861 = vmul.f32 %v585, %v585
      %v862 = vmul.f32 %v588, %v588
      %v863 = vmul.f32 %v593, %v593
      %v864 = vmul.f32 %v596, %v596
      %v865 = vmul.f32 %v601, %v601
      %v866 = vmul.f32 %v604, %v604
      %v867 = vmul.f32 %v609, %v609
      %v868 = vmul.f32 %v612, %v612
      %v869 = vmul.f32 %v617, %v617
      %v870 = vmul.f32 %v620, %v620
      %v871 = vmul.f32 %v625, %v625
      %v872 = vmul.f32 %v628, %v628
      %v873 = vmul.f32 %v633, %v633
      %v874 = vmul.f32 %v636, %v636
      %v875 = vmul.f32 %v641, %v641
      %v876 = vmul.f32 %v644, %v644
      %v877 = vadd.f32 %v845, %v846
      %v878 = vadd.f32 %v877, %v847
      %v879 = vadd.f32 %v878, %v848
      %v880 = vadd.f32 %v879, %v849
      %v881 = vadd.f32 %v880, %v850
      %v882 = vadd.f32 %v881, %v851
      %v883 = vadd.f32 %v882, %v852
      %v884 = vadd.f32 %v883, %v853
      %v885 = vadd.f32 %v884, %v854
      %v886 = vadd.f32 %v885, %v855
      %v887 = vadd.f32 %v886, %v856
      %v888 = vadd.f32 %v887, %v857
      %v889 = vadd.f32 %v888, %v858
      %v890 = vadd.f32 %v889, %v859
      %v891 = vadd.f32 %v890, %v860
      %v892 = vadd.f32 %v891, %v861
      %v893 = vadd.f32 %v892, %v862
      %v894 = vadd.f32 %v893, %v863
      %v895 = vadd.f32 %v894, %v864
      %v896 = vadd.f32 %v895, %v865
      %v897 = vadd.f32 %v896, %v866
      %v898 = vadd.f32 %v897, %v867
      %v899 = vadd.f32 %v898, %v868
      %v900 = vadd.f32 %v899, %v869
      %v901 = vadd.f32 %v900, %v870
      %v902 = vadd.f32 %v901, %v871
      %v903 = vadd.f32 %v902, %v872
      %v904 = vadd.f32 %v903, %v873
      %v905 = vadd.f32 %v904, %v874
      %v906 = vadd.f32 %v905, %v875
      %v907 = vadd.f32 %v906, %v876
      %v908 = vrot.slane %v907, 4
      %v909 = vadd.f32 %v907, %v908
      %v910 = vrot.slane %v909, 2
      %v911 = vadd.f32 %v909, %v910
      %v912 = vrot.slane %v911, 1
      %v913 = vadd.f32 %v911, %v912
      %914 = vst [vmem:[%s187 + $0x1] sm:$0x1] %v913
      %s915 = smul.u32 32, %s15
      %p916 = scmp.lt.s32.totalorder %s915, 63
      %s917 = scalar_select %p916, %s915, 63
      %s918 = smul.addr %s917, 4
      %s919 = scalar_lea.vmem %s2, %s918
      %p920 = scmp.lt.s32.totalorder %s15, 1
      %s921 = scalar_select %p920, %s15, 1
      %s922 = smul.addr %s921, 2
      %s923 = scalar_lea.vmem %s3, %s922
      // Predicated region
      $region29: #{_generator_forward.15} parent=27 // pred_check
        %p924 = pneg %p80
      $region30: #{_generator_forward.15} parent=27 // pred_check_branch
        %926 = sbr.rel (%p924) target = $region32
      $region31: #{_generator_forward.15} parent=27 // pred_region
        %s927 = smul.u32 32, %s15
      $region32: #{_generator_forward.15} parent=27 // pred_fallthru
        _
      // Predicated region
      $region33: #{_generator_forward.15} parent=27 // pred_check
        %p928 = pneg %p106
      $region34: #{_generator_forward.15} parent=27 // pred_check_branch
        %930 = sbr.rel (%p928) target = $region36
      $region35: #{_generator_forward.15} parent=27 // pred_region
        _
      $region36: #{_generator_forward.15} parent=27 // pred_fallthru
        _
    $region28: #{_generator_forward.15} parent=5 // pred_fallthru
      _
    %p931 = scmp.le.s32.totalorder 2, %s10
    // Predicated region
    $region37: #{_generator_forward.15} parent=5 // pred_check
      %p932 = pneg %p931
    $region38: #{_generator_forward.15} parent=5 // pred_check_branch
      %934 = sbr.rel (%p932) target = $region40
    $region39: #{_generator_forward.15} parent=5 // pred_region
      %s935 = ssub.s32 %s10, 2
      // Predicated region
      $region41: #{_generator_forward.15} parent=39 // pred_check
        %p936 = pneg %p86
      $region42: #{_generator_forward.15} parent=39 // pred_check_branch
        %938 = sbr.rel (%p936) target = $region44
      $region43: #{_generator_forward.15} parent=39 // pred_region
        %s939 = smul.u32 32, %s16
        %p940 = scmp.lt.s32.totalorder %s939, 63
        %s941 = scalar_select %p940, %s939, 63
        %s942 = smul.addr %s941, 4
        %s943 = scalar_lea.vmem %s2, %s942
      $region44: #{_generator_forward.15} parent=39 // pred_fallthru
        _
      // Predicated region
      $region45: #{_generator_forward.15} parent=39 // pred_check
        %p944 = pneg %p112
      $region46: #{_generator_forward.15} parent=39 // pred_check_branch
        %946 = sbr.rel (%p944) target = $region48
      $region47: #{_generator_forward.15} parent=39 // pred_region
        %p947 = scmp.lt.s32.totalorder %s16, 1
        %s948 = scalar_select %p947, %s16, 1
        %s949 = smul.addr %s948, 2
        %s950 = scalar_lea.vmem %s3, %s949
      $region48: #{_generator_forward.15} parent=39 // pred_fallthru
        _
    $region40: #{_generator_forward.15} parent=5 // pred_fallthru
      _
  $region6: #{_generator_forward.15} parent=0 // loop_footer
    %s14 = sadd.s32 1, %s10
  $region7: #{_generator_forward.15} parent=0 // loop_footer_branch
    %9 = sbr.rel target = $region3
  $region8: #{_generator_forward.15} parent=0 // loop_exit
    _

// kernel: tile.58
$region0: #{tile.58}
  #allocation0 [shape = 's32[1]{0}', space=sflag, size = 0x4, scoped, tag = 'scoped memory for tile.58']
  %s0 = inlined_call_operand.vmem [shape: f32[8], index: 0, kind: input, shape index: {}]
  %s1 = inlined_call_operand.vmem [shape: f32[4,8], index: 1, kind: output, shape index: {}]
  // Predicated region
  $region2: #{tile.58} parent=0 // pred_check
    _
  $region3: #{tile.58} parent=0 // pred_check_branch
    %3 = sbr.rel (0) target = $region5
  $region4: #{tile.58} parent=0 // pred_region
    _
  $region5: #{tile.58} parent=0 // pred_fallthru
    _
  %v4 = vld [vmem:[%s0] ss:$0 sm:$0xff]
  %5 = vst [vmem:[%s1] sm:$0xf] %v4

// kernel: tile.59
$region0: #{tile.59}
  %s0 = inlined_call_operand.vmem [shape: f32[4,8], index: 0, kind: input, shape index: {}]
  %s1 = inlined_call_operand.vmem [shape: f32[32], index: 1, kind: output, shape index: {}]
  $region1: #{tile.59} parent=0
    #allocation0 [shape = 'u8[4096]{0}', space=vmem, size = 0x1000, scoped, tag = 'scoped mem for output reshape']
    #allocation1 [shape = 'u8[4096]{0}', space=vmem, size = 0x1000, scoped, tag = 'scoped mem for input reshape']
    %s3 = sshllo.u32 0, 4
    %v4 = vld [vmem:[%s0] sm:%s3]
    %5 = vst [vmem:[#allocation1] sm:%s3] %v4
    %v6 = vld [vmem:[#allocation1] sm:$0x1]
    %vm7 = vcmask 64512
    %8 = vst.msk [vmem:[#allocation0] sm:$0x1] %vm7, %v6
    %s9 = scalar_lea.vmem [#allocation1], 3
    %v10 = vld [vmem:[%s9] sm:$0x1]
    %11 = vrot.lane.b32.xlu0 %v10, 24
    %v12 = vpop.permute.xlu0 %11
    %vm13 = vcmask 261312
    %14 = vst.msk [vmem:[#allocation0] sm:$0x1] %vm13, %v12
    %s15 = scalar_lea.vmem [#allocation1], 2
    %v16 = vld [vmem:[%s15] sm:$0x1]
    %17 = vrot.lane.b32.xlu0 %v16, 16
    %v18 = vpop.permute.xlu0 %17
    %vm19 = vcmask 195712
    %20 = vst.msk [vmem:[#allocation0] sm:$0x1] %vm19, %v18
    %s21 = scalar_lea.vmem [#allocation1], 1
    %v22 = vld [vmem:[%s21] sm:$0x1]
    %23 = vrot.lane.b32.xlu0 %v22, 8
    %v24 = vpop.permute.xlu0 %23
    %vm25 = vcmask 130112
    %26 = vst.msk [vmem:[#allocation0] sm:$0x1] %vm25, %v24
    %s28 = sshllo.u32 0, 1
    %v30 = vld [vmem:[#allocation0] sm:%s28]
    %s31 = sshllo.u32 0, 1
    %32 = vst [vmem:[%s1] sm:%s31] %v30

// kernel: _generator_forward.16
$region0: #{_generator_forward.16}
  #allocation0 [shape = 'u32[]', space=smem, size = 0x4, offset = 0x4, fixed_abs, tag = 'smem constant byte address 0x4 - core index']
  #allocation1 [shape = 'u32[144,128]{1,0:T(1,128)}', space=vmem, size = 0x12000, scoped, tag = 'internal scratch']
  %s0 = inlined_call_operand.vmem [shape: bf16[512,128], index: 0, kind: input, shape index: {}]
  %s1 = inlined_call_operand.vmem [shape: f32[1,128], index: 1, kind: input, shape index: {}]
  %s2 = inlined_call_operand.vmem [shape: f32[1,128], index: 2, kind: input, shape index: {}]
  %s3 = inlined_call_operand.vmem [shape: bf16[512,128], index: 3, kind: output, shape index: {}]
  %s4 = sld [smem:[#allocation0]]
  $region45: #{_generator_forward.16} parent=0
    _
  %s6 = ssub.s32 1, %s4
  %s7 = scalar_select 0, %s6, %s4
  loop: start=0, step=1, limit=4
  $region2: #{_generator_forward.16} parent=0 // loop_pre_header
    _
  $region3: #{_generator_forward.16} parent=0 // loop_header
    %s9 = sphi 0, %s13
    %p10 = scmp.ge.s32.totalorder %s9, 4
    %s19 = sphi 0, %s21
    %s22 = sphi 0, %s19
    %s23 = sphi 0, %s22
    %s39 = sphi 0, %s23
    %s43 = sphi 0, %s43
    %s45 = sphi 0, %s43
    %s46 = sphi 0, %s45
    %s60 = sphi 0, %s46
    %s64 = sphi 0, %s64
    %s66 = sphi 0, %s64
    %s67 = sphi 0, %s66
    %s81 = sphi 0, %s67
    %s87 = sphi 0, %s89
    %s90 = sphi 0, %s87
    %s91 = sphi 0, %s90
    %s107 = sphi 0, %s91
  $region4: #{_generator_forward.16} parent=0 // loop_header_branch
    %12 = sbr.rel (%p10) target = $region8
  $region5: #{_generator_forward.16} parent=0 // loop_body
    %s14 = ssub.s32 %s9, 1
    %s15 = ssub.s32 %s9, 2
    %s16 = sadd.s32 %s9, 1
    %s17 = ssub.s32 %s9, %s16
    %p18 = scmp.eq.s32.totalorder %s17, 0
    %s20 = sadd.s32 %s19, 1
    %s21 = scalar_select %p18, %s19, %s20
    %p24 = pneg %p18
    %p25 = scmp.eq.s32.totalorder %s9, 1
    %p26 = por %p24, %p25
    %p27 = scmp.ne.s32.totalorder %s19, %s22
    %p28 = scmp.eq.s32.totalorder %s9, 0
    %p29 = por %p27, %p28
    %p30 = scmp.ne.s32.totalorder %s19, %s22
    %p31 = scmp.eq.s32.totalorder %s14, 1
    %p32 = por %p30, %p31
    %p33 = scmp.ne.s32.totalorder %s22, %s23
    %p34 = scmp.eq.s32.totalorder %s14, 0
    %p35 = por %p33, %p34
    %p36 = scmp.ne.s32.totalorder %s22, %s23
    %p37 = scmp.eq.s32.totalorder %s15, 1
    %p38 = por %p36, %p37
    %p40 = scmp.ne.s32.totalorder %s23, %s39
    %p41 = scmp.eq.s32.totalorder %s15, 0
    %p42 = por %p40, %p41
    %s44 = sadd.s32 %s43, 1
    %p47 = scmp.eq.s32.totalorder %s9, 1
    %p48 = scmp.ne.s32.totalorder %s43, %s45
    %p49 = scmp.eq.s32.totalorder %s9, 0
    %p50 = por %p48, %p49
    %p51 = scmp.ne.s32.totalorder %s43, %s45
    %p52 = scmp.eq.s32.totalorder %s14, 1
    %p53 = por %p51, %p52
    %p54 = scmp.ne.s32.totalorder %s45, %s46
    %p55 = scmp.eq.s32.totalorder %s14, 0
    %p56 = por %p54, %p55
    %p57 = scmp.ne.s32.totalorder %s45, %s46
    %p58 = scmp.eq.s32.totalorder %s15, 1
    %p59 = por %p57, %p58
    %p61 = scmp.ne.s32.totalorder %s46, %s60
    %p62 = scmp.eq.s32.totalorder %s15, 0
    %p63 = por %p61, %p62
    %s65 = sadd.s32 %s64, 1
    %p68 = scmp.eq.s32.totalorder %s9, 1
    %p69 = scmp.ne.s32.totalorder %s64, %s66
    %p70 = scmp.eq.s32.totalorder %s9, 0
    %p71 = por %p69, %p70
    %p72 = scmp.ne.s32.totalorder %s64, %s66
    %p73 = scmp.eq.s32.totalorder %s14, 1
    %p74 = por %p72, %p73
    %p75 = scmp.ne.s32.totalorder %s66, %s67
    %p76 = scmp.eq.s32.totalorder %s14, 0
    %p77 = por %p75, %p76
    %p78 = scmp.ne.s32.totalorder %s66, %s67
    %p79 = scmp.eq.s32.totalorder %s15, 1
    %p80 = por %p78, %p79
    %p82 = scmp.ne.s32.totalorder %s67, %s81
    %p83 = scmp.eq.s32.totalorder %s15, 0
    %p84 = por %p82, %p83
    %s85 = ssub.s32 %s9, %s16
    %p86 = scmp.eq.s32.totalorder %s85, 0
    %s88 = sadd.s32 %s87, 1
    %s89 = scalar_select %p86, %s87, %s88
    %p92 = pneg %p86
    %p93 = scmp.eq.s32.totalorder %s9, 1
    %p94 = por %p92, %p93
    %p95 = scmp.ne.s32.totalorder %s87, %s90
    %p96 = scmp.eq.s32.totalorder %s9, 0
    %p97 = por %p95, %p96
    %p98 = scmp.ne.s32.totalorder %s87, %s90
    %p99 = scmp.eq.s32.totalorder %s14, 1
    %p100 = por %p98, %p99
    %p101 = scmp.ne.s32.totalorder %s90, %s91
    %p102 = scmp.eq.s32.totalorder %s14, 0
    %p103 = por %p101, %p102
    %p104 = scmp.ne.s32.totalorder %s90, %s91
    %p105 = scmp.eq.s32.totalorder %s15, 1
    %p106 = por %p104, %p105
    %p108 = scmp.ne.s32.totalorder %s91, %s107
    %p109 = scmp.eq.s32.totalorder %s15, 0
    %p110 = por %p108, %p109
    %p111 = scmp.le.s32.totalorder 1, %s9
    %p112 = scmp.lt.s32.totalorder %s9, 3
    %p113 = pnand %p111, %p112
    %p114 = pneg %p113
    // Predicated region
    $region9: #{_generator_forward.16} parent=5 // pred_check
      _
    $region10: #{_generator_forward.16} parent=5 // pred_check_branch
      %116 = sbr.rel (%p113) target = $region12
    $region11: #{_generator_forward.16} parent=5 // pred_region
      %s117 = ssub.s32 %s9, 1
      // Predicated region
      $region13: #{_generator_forward.16} parent=11 // pred_check
        %p118 = pneg %p56
      $region14: #{_generator_forward.16} parent=11 // pred_check_branch
        %120 = sbr.rel (%p118) target = $region16
      $region15: #{_generator_forward.16} parent=11 // pred_region
        _
      $region16: #{_generator_forward.16} parent=11 // pred_fallthru
        _
      // Predicated region
      $region17: #{_generator_forward.16} parent=11 // pred_check
        %p121 = pneg %p77
      $region18: #{_generator_forward.16} parent=11 // pred_check_branch
        %123 = sbr.rel (%p121) target = $region20
      $region19: #{_generator_forward.16} parent=11 // pred_region
        _
      $region20: #{_generator_forward.16} parent=11 // pred_fallthru
        _
    $region12: #{_generator_forward.16} parent=5 // pred_fallthru
      _
    %p124 = scmp.lt.s32.totalorder %s9, 2
    // Predicated region
    $region21: #{_generator_forward.16} parent=5 // pred_check
      %p125 = pneg %p124
    $region22: #{_generator_forward.16} parent=5 // pred_check_branch
      %127 = sbr.rel (%p125) target = $region24
    $region23: #{_generator_forward.16} parent=5 // pred_region
      // Predicated region
      $region25: #{_generator_forward.16} parent=23 // pred_check
        %p128 = pneg %p29
      $region26: #{_generator_forward.16} parent=23 // pred_check_branch
        %130 = sbr.rel (%p128) target = $region28
      $region27: #{_generator_forward.16} parent=23 // pred_region
        %s131 = smul.u32 32, %s9
        %p132 = scmp.lt.s32.totalorder %s131, 63
        %s133 = scalar_select %p132, %s131, 63
        %s134 = smul.addr %s133, 4
        %s135 = scalar_lea.vmem %s0, %s134
        %s136 = smul.u32 32, %s9
      $region28: #{_generator_forward.16} parent=23 // pred_fallthru
        _
    $region24: #{_generator_forward.16} parent=5 // pred_fallthru
      _
    %p137 = scmp.le.s32.totalorder 1, %s9
    %p138 = scmp.lt.s32.totalorder %s9, 3
    %p139 = pnand %p137, %p138
    %p140 = pneg %p139
    // Predicated region
    $region29: #{_generator_forward.16} parent=5 // pred_check
      _
    $region30: #{_generator_forward.16} parent=5 // pred_check_branch
      %142 = sbr.rel (%p139) target = $region32
    $region31: #{_generator_forward.16} parent=5 // pred_region
      %s143 = ssub.s32 %s9, 1
      %s144 = smul.u32 32, %s14
      %p145 = scmp.lt.s32.totalorder %s144, 63
      %s146 = scalar_select %p145, %s144, 63
      %s147 = smul.addr %s146, 4
      %s148 = scalar_lea.vmem %s0, %s147
      %p149 = pneg %p35
      %p150 = pneg %p32
      %p151 = pneg %p56
      %p152 = pneg %p53
      %p153 = pneg %p77
      %p154 = pneg %p74
      %p155 = pneg %p103
      %p156 = pneg %p100
      %s157 = smul.u32 32, %s14
      %p158 = scmp.lt.s32.totalorder %s157, 63
      %s159 = scalar_select %p158, %s157, 63
      %s160 = smul.addr %s159, 4
      %s161 = scalar_lea.vmem %s3, %s160
      %s162 = smul.u32 32, %s14
      %p163 = scmp.lt.s32.totalorder %s162, 63
      %s164 = scalar_select %p163, %s162, 63
      %s165 = smul.addr %s164, 4
      %s166 = scalar_lea.vmem %s0, %s165
      %s167 = smul.u32 32, %s14
      %s168 = smul.u32 32, %s14
      %p169 = scmp.lt.s32.totalorder %s168, 63
      %s170 = scalar_select %p169, %s168, 63
      %s171 = smul.addr %s170, 4
      %s172 = scalar_lea.vmem %s3, %s171
      %s173 = smul.u32 32, %s14
      %v174 = vld [vmem:[%s166] sm:$0xf]
      %v175 = vld [vmem:[%s166 + $0x4] sm:$0xf]
      %v176 = vld [vmem:[%s166 + $0x8] sm:$0xf]
      %v177 = vld [vmem:[%s166 + $0xc] sm:$0xf]
      %v178 = vld [vmem:[%s166 + $0x10] sm:$0xf]
      %v179 = vld [vmem:[%s166 + $0x14] sm:$0xf]
      %v180 = vld [vmem:[%s166 + $0x18] sm:$0xf]
      %v181 = vld [vmem:[%s166 + $0x1c] sm:$0xf]
      %v182 = vld [vmem:[%s166 + $0x20] sm:$0xf]
      %v183 = vld [vmem:[%s166 + $0x24] sm:$0xf]
      %v184 = vld [vmem:[%s166 + $0x28] sm:$0xf]
      %v185 = vld [vmem:[%s166 + $0x2c] sm:$0xf]
      %v186 = vld [vmem:[%s166 + $0x30] sm:$0xf]
      %v187 = vld [vmem:[%s166 + $0x34] sm:$0xf]
      %v188 = vld [vmem:[%s166 + $0x38] sm:$0xf]
      %v189 = vld [vmem:[%s166 + $0x3c] sm:$0xf]
      %v190 = vld [vmem:[%s166 + $0x40] sm:$0xf]
      %v191 = vld [vmem:[%s166 + $0x44] sm:$0xf]
      %v192 = vld [vmem:[%s166 + $0x48] sm:$0xf]
      %v193 = vld [vmem:[%s166 + $0x4c] sm:$0xf]
      %v194 = vld [vmem:[%s166 + $0x50] sm:$0xf]
      %v195 = vld [vmem:[%s166 + $0x54] sm:$0xf]
      %v196 = vld [vmem:[%s166 + $0x58] sm:$0xf]
      %v197 = vld [vmem:[%s166 + $0x5c] sm:$0xf]
      %v198 = vld [vmem:[%s166 + $0x60] sm:$0xf]
      %v199 = vld [vmem:[%s166 + $0x64] sm:$0xf]
      %v200 = vld [vmem:[%s166 + $0x68] sm:$0xf]
      %v201 = vld [vmem:[%s166 + $0x6c] sm:$0xf]
      %v202 = vld [vmem:[%s166 + $0x70] sm:$0xf]
      %v203 = vld [vmem:[%s166 + $0x74] sm:$0xf]
      %v204 = vld [vmem:[%s166 + $0x78] sm:$0xf]
      %v205 = vld [vmem:[%s166 + $0x7c] sm:$0xf]
      %v206 = vunpack.c.l.bf16 %v174
      %v207 = vunpack.c.l.bf16 %v175
      %v208 = vunpack.c.l.bf16 %v176
      %v209 = vunpack.c.l.bf16 %v177
      %v210 = vunpack.c.l.bf16 %v178
      %v211 = vunpack.c.l.bf16 %v179
      %v212 = vunpack.c.l.bf16 %v180
      %v213 = vunpack.c.l.bf16 %v181
      %v214 = vunpack.c.l.bf16 %v182
      %v215 = vunpack.c.l.bf16 %v183
      %v216 = vunpack.c.l.bf16 %v184
      %v217 = vunpack.c.l.bf16 %v185
      %v218 = vunpack.c.l.bf16 %v186
      %v219 = vunpack.c.l.bf16 %v187
      %v220 = vunpack.c.l.bf16 %v188
      %v221 = vunpack.c.l.bf16 %v189
      %v222 = vunpack.c.l.bf16 %v190
      %v223 = vunpack.c.l.bf16 %v191
      %v224 = vunpack.c.l.bf16 %v192
      %v225 = vunpack.c.l.bf16 %v193
      %v226 = vunpack.c.l.bf16 %v194
      %v227 = vunpack.c.l.bf16 %v195
      %v228 = vunpack.c.l.bf16 %v196
      %v229 = vunpack.c.l.bf16 %v197
      %v230 = vunpack.c.l.bf16 %v198
      %v231 = vunpack.c.l.bf16 %v199
      %v232 = vunpack.c.l.bf16 %v200
      %v233 = vunpack.c.l.bf16 %v201
      %v234 = vunpack.c.l.bf16 %v202
      %v235 = vunpack.c.l.bf16 %v203
      %v236 = vunpack.c.l.bf16 %v204
      %v237 = vunpack.c.l.bf16 %v205
      %v238 = vld [vmem:[%s1] sm:$0x1]
      %v240 = vlaneseq
      %v241 = vshrl.u32 %v240, 7
      %v242 = vsub.s32 0, %v241
      %v243 = vrot.slane %v238, %v242
      %v245 = vmul.f32 %v206, %v243
      %v246 = vmul.f32 %v207, %v243
      %v247 = vmul.f32 %v208, %v243
      %v248 = vmul.f32 %v209, %v243
      %v249 = vmul.f32 %v210, %v243
      %v250 = vmul.f32 %v211, %v243
      %v251 = vmul.f32 %v212, %v243
      %v252 = vmul.f32 %v213, %v243
      %v253 = vmul.f32 %v214, %v243
      %v254 = vmul.f32 %v215, %v243
      %v255 = vmul.f32 %v216, %v243
      %v256 = vmul.f32 %v217, %v243
      %v257 = vmul.f32 %v218, %v243
      %v258 = vmul.f32 %v219, %v243
      %v259 = vmul.f32 %v220, %v243
      %v260 = vmul.f32 %v221, %v243
      %v261 = vmul.f32 %v222, %v243
      %v262 = vmul.f32 %v223, %v243
      %v263 = vmul.f32 %v224, %v243
      %v264 = vmul.f32 %v225, %v243
      %v265 = vmul.f32 %v226, %v243
      %v266 = vmul.f32 %v227, %v243
      %v267 = vmul.f32 %v228, %v243
      %v268 = vmul.f32 %v229, %v243
      %v269 = vmul.f32 %v230, %v243
      %v270 = vmul.f32 %v231, %v243
      %v271 = vmul.f32 %v232, %v243
      %v272 = vmul.f32 %v233, %v243
      %v273 = vmul.f32 %v234, %v243
      %v274 = vmul.f32 %v235, %v243
      %v275 = vmul.f32 %v236, %v243
      %v276 = vmul.f32 %v237, %v243
      %v277 = vld [vmem:[%s2] sm:$0x1]
      %v279 = vlaneseq
      %v280 = vshrl.u32 %v279, 7
      %v281 = vsub.s32 0, %v280
      %v282 = vrot.slane %v277, %v281
      %v284 = vadd.f32 %v245, %v282
      %v285 = vadd.f32 %v246, %v282
      %v286 = vadd.f32 %v247, %v282
      %v287 = vadd.f32 %v248, %v282
      %v288 = vadd.f32 %v249, %v282
      %v289 = vadd.f32 %v250, %v282
      %v290 = vadd.f32 %v251, %v282
      %v291 = vadd.f32 %v252, %v282
      %v292 = vadd.f32 %v253, %v282
      %v293 = vadd.f32 %v254, %v282
      %v294 = vadd.f32 %v255, %v282
      %v295 = vadd.f32 %v256, %v282
      %v296 = vadd.f32 %v257, %v282
      %v297 = vadd.f32 %v258, %v282
      %v298 = vadd.f32 %v259, %v282
      %v299 = vadd.f32 %v260, %v282
      %v300 = vadd.f32 %v261, %v282
      %v301 = vadd.f32 %v262, %v282
      %v302 = vadd.f32 %v263, %v282
      %v303 = vadd.f32 %v264, %v282
      %v304 = vadd.f32 %v265, %v282
      %v305 = vadd.f32 %v266, %v282
      %v306 = vadd.f32 %v267, %v282
      %v307 = vadd.f32 %v268, %v282
      %v308 = vadd.f32 %v269, %v282
      %v309 = vadd.f32 %v270, %v282
      %v310 = vadd.f32 %v271, %v282
      %v311 = vadd.f32 %v272, %v282
      %v312 = vadd.f32 %v273, %v282
      %v313 = vadd.f32 %v274, %v282
      %v314 = vadd.f32 %v275, %v282
      %v315 = vadd.f32 %v276, %v282
      %v316 = vmax.f32 %v284, 0.0
      %v317 = vmax.f32 %v285, 0.0
      %v318 = vmax.f32 %v286, 0.0
      %v319 = vmax.f32 %v287, 0.0
      %v320 = vmax.f32 %v288, 0.0
      %v321 = vmax.f32 %v289, 0.0
      %v322 = vmax.f32 %v290, 0.0
      %v323 = vmax.f32 %v291, 0.0
      %v324 = vmax.f32 %v292, 0.0
      %v325 = vmax.f32 %v293, 0.0
      %v326 = vmax.f32 %v294, 0.0
      %v327 = vmax.f32 %v295, 0.0
      %v328 = vmax.f32 %v296, 0.0
      %v329 = vmax.f32 %v297, 0.0
      %v330 = vmax.f32 %v298, 0.0
      %v331 = vmax.f32 %v299, 0.0
      %v332 = vmax.f32 %v300, 0.0
      %v333 = vmax.f32 %v301, 0.0
      %v334 = vmax.f32 %v302, 0.0
      %v335 = vmax.f32 %v303, 0.0
      %v336 = vmax.f32 %v304, 0.0
      %v337 = vmax.f32 %v305, 0.0
      %v338 = vmax.f32 %v306, 0.0
      %v339 = vmax.f32 %v307, 0.0
      %v340 = vmax.f32 %v308, 0.0
      %v341 = vmax.f32 %v309, 0.0
      %v342 = vmax.f32 %v310, 0.0
      %v343 = vmax.f32 %v311, 0.0
      %v344 = vmax.f32 %v312, 0.0
      %v345 = vmax.f32 %v313, 0.0
      %v346 = vmax.f32 %v314, 0.0
      %v347 = vmax.f32 %v315, 0.0
      %v348 = vpack.c.bf16 %v317, %v316
      %v349 = vpack.c.bf16 %v319, %v318
      %v350 = vpack.c.bf16 %v321, %v320
      %v351 = vpack.c.bf16 %v323, %v322
      %v352 = vpack.c.bf16 %v325, %v324
      %v353 = vpack.c.bf16 %v327, %v326
      %v354 = vpack.c.bf16 %v329, %v328
      %v355 = vpack.c.bf16 %v331, %v330
      %v356 = vpack.c.bf16 %v333, %v332
      %v357 = vpack.c.bf16 %v335, %v334
      %v358 = vpack.c.bf16 %v337, %v336
      %v359 = vpack.c.bf16 %v339, %v338
      %v360 = vpack.c.bf16 %v341, %v340
      %v361 = vpack.c.bf16 %v343, %v342
      %v362 = vpack.c.bf16 %v345, %v344
      %v363 = vpack.c.bf16 %v347, %v346
      %v380 = vunpack.c.l.b16 %v348
      %v381 = vunpack.c.h.b16 %v348
      %v382 = vunpack.c.l.b16 %v349
      %v383 = vunpack.c.h.b16 %v349
      %v384 = vunpack.c.l.b16 %v350
      %v385 = vunpack.c.h.b16 %v350
      %v386 = vunpack.c.l.b16 %v351
      %v387 = vunpack.c.h.b16 %v351
      %v388 = vunpack.c.l.b16 %v352
      %v389 = vunpack.c.h.b16 %v352
      %v390 = vunpack.c.l.b16 %v353
      %v391 = vunpack.c.h.b16 %v353
      %v392 = vunpack.c.l.b16 %v354
      %v393 = vunpack.c.h.b16 %v354
      %v394 = vunpack.c.l.b16 %v355
      %v395 = vunpack.c.h.b16 %v355
      %v396 = vunpack.c.l.b16 %v356
      %v397 = vunpack.c.h.b16 %v356
      %v398 = vunpack.c.l.b16 %v357
      %v399 = vunpack.c.h.b16 %v357
      %v400 = vunpack.c.l.b16 %v358
      %v401 = vunpack.c.h.b16 %v358
      %v402 = vunpack.c.l.b16 %v359
      %v403 = vunpack.c.h.b16 %v359
      %v404 = vunpack.c.l.b16 %v360
      %v405 = vunpack.c.h.b16 %v360
      %v406 = vunpack.c.l.b16 %v361
      %v407 = vunpack.c.h.b16 %v361
      %v408 = vunpack.c.l.b16 %v362
      %v409 = vunpack.c.h.b16 %v362
      %v410 = vunpack.c.l.b16 %v363
      %v411 = vunpack.c.h.b16 %v363
      %v412 = vpack.c.b16 %v380, %v380
      %v413 = vpack.c.b16 %v381, %v381
      %v414 = vpack.c.b16 %v382, %v382
      %v415 = vpack.c.b16 %v383, %v383
      %v416 = vpack.c.b16 %v384, %v384
      %v417 = vpack.c.b16 %v385, %v385
      %v418 = vpack.c.b16 %v386, %v386
      %v419 = vpack.c.b16 %v387, %v387
      %v420 = vpack.c.b16 %v388, %v388
      %v421 = vpack.c.b16 %v389, %v389
      %v422 = vpack.c.b16 %v390, %v390
      %v423 = vpack.c.b16 %v391, %v391
      %v424 = vpack.c.b16 %v392, %v392
      %v425 = vpack.c.b16 %v393, %v393
      %v426 = vpack.c.b16 %v394, %v394
      %v427 = vpack.c.b16 %v395, %v395
      %v428 = vpack.c.b16 %v396, %v396
      %v429 = vpack.c.b16 %v397, %v397
      %v430 = vpack.c.b16 %v398, %v398
      %v431 = vpack.c.b16 %v399, %v399
      %v432 = vpack.c.b16 %v400, %v400
      %v433 = vpack.c.b16 %v401, %v401
      %v434 = vpack.c.b16 %v402, %v402
      %v435 = vpack.c.b16 %v403, %v403
      %v436 = vpack.c.b16 %v404, %v404
      %v437 = vpack.c.b16 %v405, %v405
      %v438 = vpack.c.b16 %v406, %v406
      %v439 = vpack.c.b16 %v407, %v407
      %v440 = vpack.c.b16 %v408, %v408
      %v441 = vpack.c.b16 %v409, %v409
      %v442 = vpack.c.b16 %v410, %v410
      %v443 = vpack.c.b16 %v411, %v411
      %476 = vst [vmem:[%s172] sm:$0xf] %v412
      %477 = vst [vmem:[%s172 + $0x4] sm:$0xf] %v413
      %478 = vst [vmem:[%s172 + $0x8] sm:$0xf] %v414
      %479 = vst [vmem:[%s172 + $0xc] sm:$0xf] %v415
      %480 = vst [vmem:[%s172 + $0x10] sm:$0xf] %v416
      %481 = vst [vmem:[%s172 + $0x14] sm:$0xf] %v417
      %482 = vst [vmem:[%s172 + $0x18] sm:$0xf] %v418
      %483 = vst [vmem:[%s172 + $0x1c] sm:$0xf] %v419
      %484 = vst [vmem:[%s172 + $0x20] sm:$0xf] %v420
      %485 = vst [vmem:[%s172 + $0x24] sm:$0xf] %v421
      %486 = vst [vmem:[%s172 + $0x28] sm:$0xf] %v422
      %487 = vst [vmem:[%s172 + $0x2c] sm:$0xf] %v423
      %488 = vst [vmem:[%s172 + $0x30] sm:$0xf] %v424
      %489 = vst [vmem:[%s172 + $0x34] sm:$0xf] %v425
      %490 = vst [vmem:[%s172 + $0x38] sm:$0xf] %v426
      %491 = vst [vmem:[%s172 + $0x3c] sm:$0xf] %v427
      %492 = vst [vmem:[%s172 + $0x40] sm:$0xf] %v428
      %493 = vst [vmem:[%s172 + $0x44] sm:$0xf] %v429
      %494 = vst [vmem:[%s172 + $0x48] sm:$0xf] %v430
      %495 = vst [vmem:[%s172 + $0x4c] sm:$0xf] %v431
      %496 = vst [vmem:[%s172 + $0x50] sm:$0xf] %v432
      %497 = vst [vmem:[%s172 + $0x54] sm:$0xf] %v433
      %498 = vst [vmem:[%s172 + $0x58] sm:$0xf] %v434
      %499 = vst [vmem:[%s172 + $0x5c] sm:$0xf] %v435
      %500 = vst [vmem:[%s172 + $0x60] sm:$0xf] %v436
      %501 = vst [vmem:[%s172 + $0x64] sm:$0xf] %v437
      %502 = vst [vmem:[%s172 + $0x68] sm:$0xf] %v438
      %503 = vst [vmem:[%s172 + $0x6c] sm:$0xf] %v439
      %504 = vst [vmem:[%s172 + $0x70] sm:$0xf] %v440
      %505 = vst [vmem:[%s172 + $0x74] sm:$0xf] %v441
      %506 = vst [vmem:[%s172 + $0x78] sm:$0xf] %v442
      %507 = vst [vmem:[%s172 + $0x7c] sm:$0xf] %v443
      %s508 = smul.u32 32, %s14
      %p509 = scmp.lt.s32.totalorder %s508, 63
      %s510 = scalar_select %p509, %s508, 63
      %s511 = smul.addr %s510, 4
      %s512 = scalar_lea.vmem %s3, %s511
      // Predicated region
      $region33: #{_generator_forward.16} parent=31 // pred_check
        %p513 = pneg %p100
      $region34: #{_generator_forward.16} parent=31 // pred_check_branch
        %515 = sbr.rel (%p513) target = $region36
      $region35: #{_generator_forward.16} parent=31 // pred_region
        %s516 = smul.u32 32, %s14
      $region36: #{_generator_forward.16} parent=31 // pred_fallthru
        _
    $region32: #{_generator_forward.16} parent=5 // pred_fallthru
      _
    %p517 = scmp.le.s32.totalorder 2, %s9
    // Predicated region
    $region37: #{_generator_forward.16} parent=5 // pred_check
      %p518 = pneg %p517
    $region38: #{_generator_forward.16} parent=5 // pred_check_branch
      %520 = sbr.rel (%p518) target = $region40
    $region39: #{_generator_forward.16} parent=5 // pred_region
      %s521 = ssub.s32 %s9, 2
      // Predicated region
      $region41: #{_generator_forward.16} parent=39 // pred_check
        %p522 = pneg %p106
      $region42: #{_generator_forward.16} parent=39 // pred_check_branch
        %524 = sbr.rel (%p522) target = $region44
      $region43: #{_generator_forward.16} parent=39 // pred_region
        %s525 = smul.u32 32, %s15
        %p526 = scmp.lt.s32.totalorder %s525, 63
        %s527 = scalar_select %p526, %s525, 63
        %s528 = smul.addr %s527, 4
        %s529 = scalar_lea.vmem %s3, %s528
      $region44: #{_generator_forward.16} parent=39 // pred_fallthru
        _
    $region40: #{_generator_forward.16} parent=5 // pred_fallthru
      _
  $region6: #{_generator_forward.16} parent=0 // loop_footer
    %s13 = sadd.s32 1, %s9
  $region7: #{_generator_forward.16} parent=0 // loop_footer_branch
    %8 = sbr.rel target = $region3
  $region8: #{_generator_forward.16} parent=0 // loop_exit
    _

// kernel: _generator_forward.17
$region0: #{_generator_forward.17}
  #allocation0 [shape = 'u32[]', space=smem, size = 0x4, offset = 0x4, fixed_abs, tag = 'smem constant byte address 0x4 - core index']
  #allocation1 [shape = 'u32[144,128]{1,0:T(1,128)}', space=vmem, size = 0x12000, scoped, tag = 'internal scratch']
  %s0 = inlined_call_operand.vmem [shape: bf16[2048,72], index: 0, kind: input, shape index: {}]
  %s1 = inlined_call_operand.vmem [shape: bf16[72,128], index: 1, kind: input, shape index: {}]
  %s2 = inlined_call_operand.vmem [shape: bf16[2048,128], index: 2, kind: output, shape index: {}]
  %s3 = sld [smem:[#allocation0]]
  $region41: #{_generator_forward.17} parent=0
    _
  %s5 = ssub.s32 1, %s3
  %s6 = scalar_select 0, %s5, %s3
  loop: start=0, step=1, limit=6
  $region2: #{_generator_forward.17} parent=0 // loop_pre_header
    _
  $region3: #{_generator_forward.17} parent=0 // loop_header
    %s8 = sphi 0, %s12
    %p9 = scmp.ge.s32.totalorder %s8, 6
    %s18 = sphi 0, %s20
    %s21 = sphi 0, %s18
    %s22 = sphi 0, %s21
    %s38 = sphi 0, %s22
    %s42 = sphi 0, %s42
    %s44 = sphi 0, %s42
    %s45 = sphi 0, %s44
    %s59 = sphi 0, %s45
    %s65 = sphi 0, %s67
    %s68 = sphi 0, %s65
    %s69 = sphi 0, %s68
    %s85 = sphi 0, %s69
  $region4: #{_generator_forward.17} parent=0 // loop_header_branch
    %11 = sbr.rel (%p9) target = $region8
  $region5: #{_generator_forward.17} parent=0 // loop_body
    %s13 = ssub.s32 %s8, 1
    %s14 = ssub.s32 %s8, 2
    %s15 = sadd.s32 %s8, 1
    %s16 = ssub.s32 %s8, %s15
    %p17 = scmp.eq.s32.totalorder %s16, 0
    %s19 = sadd.s32 %s18, 1
    %s20 = scalar_select %p17, %s18, %s19
    %p23 = pneg %p17
    %p24 = scmp.eq.s32.totalorder %s8, 3
    %p25 = por %p23, %p24
    %p26 = scmp.ne.s32.totalorder %s18, %s21
    %p27 = scmp.eq.s32.totalorder %s8, 0
    %p28 = por %p26, %p27
    %p29 = scmp.ne.s32.totalorder %s18, %s21
    %p30 = scmp.eq.s32.totalorder %s13, 3
    %p31 = por %p29, %p30
    %p32 = scmp.ne.s32.totalorder %s21, %s22
    %p33 = scmp.eq.s32.totalorder %s13, 0
    %p34 = por %p32, %p33
    %p35 = scmp.ne.s32.totalorder %s21, %s22
    %p36 = scmp.eq.s32.totalorder %s14, 3
    %p37 = por %p35, %p36
    %p39 = scmp.ne.s32.totalorder %s22, %s38
    %p40 = scmp.eq.s32.totalorder %s14, 0
    %p41 = por %p39, %p40
    %s43 = sadd.s32 %s42, 1
    %p46 = scmp.eq.s32.totalorder %s8, 3
    %p47 = scmp.ne.s32.totalorder %s42, %s44
    %p48 = scmp.eq.s32.totalorder %s8, 0
    %p49 = por %p47, %p48
    %p50 = scmp.ne.s32.totalorder %s42, %s44
    %p51 = scmp.eq.s32.totalorder %s13, 3
    %p52 = por %p50, %p51
    %p53 = scmp.ne.s32.totalorder %s44, %s45
    %p54 = scmp.eq.s32.totalorder %s13, 0
    %p55 = por %p53, %p54
    %p56 = scmp.ne.s32.totalorder %s44, %s45
    %p57 = scmp.eq.s32.totalorder %s14, 3
    %p58 = por %p56, %p57
    %p60 = scmp.ne.s32.totalorder %s45, %s59
    %p61 = scmp.eq.s32.totalorder %s14, 0
    %p62 = por %p60, %p61
    %s63 = ssub.s32 %s8, %s15
    %p64 = scmp.eq.s32.totalorder %s63, 0
    %s66 = sadd.s32 %s65, 1
    %s67 = scalar_select %p64, %s65, %s66
    %p70 = pneg %p64
    %p71 = scmp.eq.s32.totalorder %s8, 3
    %p72 = por %p70, %p71
    %p73 = scmp.ne.s32.totalorder %s65, %s68
    %p74 = scmp.eq.s32.totalorder %s8, 0
    %p75 = por %p73, %p74
    %p76 = scmp.ne.s32.totalorder %s65, %s68
    %p77 = scmp.eq.s32.totalorder %s13, 3
    %p78 = por %p76, %p77
    %p79 = scmp.ne.s32.totalorder %s68, %s69
    %p80 = scmp.eq.s32.totalorder %s13, 0
    %p81 = por %p79, %p80
    %p82 = scmp.ne.s32.totalorder %s68, %s69
    %p83 = scmp.eq.s32.totalorder %s14, 3
    %p84 = por %p82, %p83
    %p86 = scmp.ne.s32.totalorder %s69, %s85
    %p87 = scmp.eq.s32.totalorder %s14, 0
    %p88 = por %p86, %p87
    %p89 = scmp.le.s32.totalorder 1, %s8
    %p90 = scmp.lt.s32.totalorder %s8, 5
    %p91 = pnand %p89, %p90
    %p92 = pneg %p91
    // Predicated region
    $region9: #{_generator_forward.17} parent=5 // pred_check
      _
    $region10: #{_generator_forward.17} parent=5 // pred_check_branch
      %94 = sbr.rel (%p91) target = $region12
    $region11: #{_generator_forward.17} parent=5 // pred_region
      %s95 = ssub.s32 %s8, 1
      // Predicated region
      $region13: #{_generator_forward.17} parent=11 // pred_check
        %p96 = pneg %p55
      $region14: #{_generator_forward.17} parent=11 // pred_check_branch
        %98 = sbr.rel (%p96) target = $region16
      $region15: #{_generator_forward.17} parent=11 // pred_region
        _
      $region16: #{_generator_forward.17} parent=11 // pred_fallthru
        _
    $region12: #{_generator_forward.17} parent=5 // pred_fallthru
      _
    %p99 = scmp.lt.s32.totalorder %s8, 4
    // Predicated region
    $region17: #{_generator_forward.17} parent=5 // pred_check
      %p100 = pneg %p99
    $region18: #{_generator_forward.17} parent=5 // pred_check_branch
      %102 = sbr.rel (%p100) target = $region20
    $region19: #{_generator_forward.17} parent=5 // pred_region
      // Predicated region
      $region21: #{_generator_forward.17} parent=19 // pred_check
        %p103 = pneg %p28
      $region22: #{_generator_forward.17} parent=19 // pred_check_branch
        %105 = sbr.rel (%p103) target = $region24
      $region23: #{_generator_forward.17} parent=19 // pred_region
        %s106 = smul.u32 64, %s8
        %p107 = scmp.lt.s32.totalorder %s106, 255
        %s108 = scalar_select %p107, %s106, 255
        %s109 = smul.addr %s108, 4
        %s110 = scalar_lea.vmem %s0, %s109
        %s111 = smul.u32 64, %s8
      $region24: #{_generator_forward.17} parent=19 // pred_fallthru
        _
    $region20: #{_generator_forward.17} parent=5 // pred_fallthru
      _
    %p112 = scmp.le.s32.totalorder 1, %s8
    %p113 = scmp.lt.s32.totalorder %s8, 5
    %p114 = pnand %p112, %p113
    %p115 = pneg %p114
    // Predicated region
    $region25: #{_generator_forward.17} parent=5 // pred_check
      _
    $region26: #{_generator_forward.17} parent=5 // pred_check_branch
      %117 = sbr.rel (%p114) target = $region28
    $region27: #{_generator_forward.17} parent=5 // pred_region
      %s118 = ssub.s32 %s8, 1
      %s119 = smul.u32 64, %s13
      %p120 = scmp.lt.s32.totalorder %s119, 255
      %s121 = scalar_select %p120, %s119, 255
      %s122 = smul.addr %s121, 4
      %s123 = scalar_lea.vmem %s0, %s122
      %p124 = pneg %p34
      %p125 = pneg %p31
      %p126 = pneg %p55
      %p127 = pneg %p52
      %p128 = pneg %p81
      %p129 = pneg %p78
      %s130 = smul.u32 64, %s13
      %p131 = scmp.lt.s32.totalorder %s130, 255
      %s132 = scalar_select %p131, %s130, 255
      %s133 = smul.addr %s132, 4
      %s134 = scalar_lea.vmem %s2, %s133
      %s135 = smul.u32 64, %s13
      %p136 = scmp.lt.s32.totalorder %s135, 255
      %s137 = scalar_select %p136, %s135, 255
      %s138 = smul.addr %s137, 4
      %s139 = scalar_lea.vmem %s0, %s138
      %s140 = smul.u32 64, %s13
      %s141 = smul.u32 64, %s13
      %p142 = scmp.lt.s32.totalorder %s141, 255
      %s143 = scalar_select %p142, %s141, 255
      %s144 = smul.addr %s143, 4
      %s145 = scalar_lea.vmem %s2, %s144
      %s146 = smul.u32 64, %s13
      %v148 = vld [vmem:[%s139] sm:$0xf]
      %v149 = vld [vmem:[%s139 + $0x4] sm:$0xf]
      %v150 = vld [vmem:[%s139 + $0x8] sm:$0xf]
      %v151 = vld [vmem:[%s139 + $0xc] sm:$0xf]
      %v152 = vld [vmem:[%s139 + $0x10] sm:$0xf]
      %v153 = vld [vmem:[%s139 + $0x14] sm:$0xf]
      %v154 = vld [vmem:[%s139 + $0x18] sm:$0xf]
      %v155 = vld [vmem:[%s139 + $0x1c] sm:$0xf]
      %v156 = vld [vmem:[%s139 + $0x20] sm:$0xf]
      %v157 = vld [vmem:[%s139 + $0x24] sm:$0xf]
      %v158 = vld [vmem:[%s139 + $0x28] sm:$0xf]
      %v159 = vld [vmem:[%s139 + $0x2c] sm:$0xf]
      %v160 = vld [vmem:[%s139 + $0x30] sm:$0xf]
      %v161 = vld [vmem:[%s139 + $0x34] sm:$0xf]
      %v162 = vld [vmem:[%s139 + $0x38] sm:$0xf]
      %v163 = vld [vmem:[%s139 + $0x3c] sm:$0xf]
      %v164 = vld [vmem:[%s139 + $0x40] sm:$0xf]
      %v165 = vld [vmem:[%s139 + $0x44] sm:$0xf]
      %v166 = vld [vmem:[%s139 + $0x48] sm:$0xf]
      %v167 = vld [vmem:[%s139 + $0x4c] sm:$0xf]
      %v168 = vld [vmem:[%s139 + $0x50] sm:$0xf]
      %v169 = vld [vmem:[%s139 + $0x54] sm:$0xf]
      %v170 = vld [vmem:[%s139 + $0x58] sm:$0xf]
      %v171 = vld [vmem:[%s139 + $0x5c] sm:$0xf]
      %v172 = vld [vmem:[%s139 + $0x60] sm:$0xf]
      %v173 = vld [vmem:[%s139 + $0x64] sm:$0xf]
      %v174 = vld [vmem:[%s139 + $0x68] sm:$0xf]
      %v175 = vld [vmem:[%s139 + $0x6c] sm:$0xf]
      %v176 = vld [vmem:[%s139 + $0x70] sm:$0xf]
      %v177 = vld [vmem:[%s139 + $0x74] sm:$0xf]
      %v178 = vld [vmem:[%s139 + $0x78] sm:$0xf]
      %v179 = vld [vmem:[%s139 + $0x7c] sm:$0xf]
      %v180 = vld [vmem:[%s139 + $0x80] sm:$0xf]
      %v181 = vld [vmem:[%s139 + $0x84] sm:$0xf]
      %v182 = vld [vmem:[%s139 + $0x88] sm:$0xf]
      %v183 = vld [vmem:[%s139 + $0x8c] sm:$0xf]
      %v184 = vld [vmem:[%s139 + $0x90] sm:$0xf]
      %v185 = vld [vmem:[%s139 + $0x94] sm:$0xf]
      %v186 = vld [vmem:[%s139 + $0x98] sm:$0xf]
      %v187 = vld [vmem:[%s139 + $0x9c] sm:$0xf]
      %v188 = vld [vmem:[%s139 + $0xa0] sm:$0xf]
      %v189 = vld [vmem:[%s139 + $0xa4] sm:$0xf]
      %v190 = vld [vmem:[%s139 + $0xa8] sm:$0xf]
      %v191 = vld [vmem:[%s139 + $0xac] sm:$0xf]
      %v192 = vld [vmem:[%s139 + $0xb0] sm:$0xf]
      %v193 = vld [vmem:[%s139 + $0xb4] sm:$0xf]
      %v194 = vld [vmem:[%s139 + $0xb8] sm:$0xf]
      %v195 = vld [vmem:[%s139 + $0xbc] sm:$0xf]
      %v196 = vld [vmem:[%s139 + $0xc0] sm:$0xf]
      %v197 = vld [vmem:[%s139 + $0xc4] sm:$0xf]
      %v198 = vld [vmem:[%s139 + $0xc8] sm:$0xf]
      %v199 = vld [vmem:[%s139 + $0xcc] sm:$0xf]
      %v200 = vld [vmem:[%s139 + $0xd0] sm:$0xf]
      %v201 = vld [vmem:[%s139 + $0xd4] sm:$0xf]
      %v202 = vld [vmem:[%s139 + $0xd8] sm:$0xf]
      %v203 = vld [vmem:[%s139 + $0xdc] sm:$0xf]
      %v204 = vld [vmem:[%s139 + $0xe0] sm:$0xf]
      %v205 = vld [vmem:[%s139 + $0xe4] sm:$0xf]
      %v206 = vld [vmem:[%s139 + $0xe8] sm:$0xf]
      %v207 = vld [vmem:[%s139 + $0xec] sm:$0xf]
      %v208 = vld [vmem:[%s139 + $0xf0] sm:$0xf]
      %v209 = vld [vmem:[%s139 + $0xf4] sm:$0xf]
      %v210 = vld [vmem:[%s139 + $0xf8] sm:$0xf]
      %v211 = vld [vmem:[%s139 + $0xfc] sm:$0xf]
      %v212 = vld [vmem:[%s1] sm:$0xf]
      %v213 = vld [vmem:[%s1 + $0x4] sm:$0xf]
      %v214 = vld [vmem:[%s1 + $0x8] sm:$0xf]
      %v215 = vld [vmem:[%s1 + $0xc] sm:$0xf]
      %v216 = vld [vmem:[%s1 + $0x10] sm:$0xf]
      %v217 = vld [vmem:[%s1 + $0x14] sm:$0xf]
      %v218 = vld [vmem:[%s1 + $0x18] sm:$0xf]
      %v219 = vld [vmem:[%s1 + $0x1c] sm:$0xf]
      %v220 = vld [vmem:[%s1 + $0x20] sm:$0xf]
      %v285 = vunpack.c.l.b16 %v148
      %v286 = vunpack.c.l.b16 %v149
      %v287 = vunpack.c.l.b16 %v150
      %v288 = vunpack.c.l.b16 %v151
      %v289 = vunpack.c.l.b16 %v152
      %v290 = vunpack.c.l.b16 %v153
      %v291 = vunpack.c.l.b16 %v154
      %v292 = vunpack.c.l.b16 %v155
      %v293 = vunpack.c.l.b16 %v156
      %v294 = vunpack.c.l.b16 %v157
      %v295 = vunpack.c.l.b16 %v158
      %v296 = vunpack.c.l.b16 %v159
      %v297 = vunpack.c.l.b16 %v160
      %v298 = vunpack.c.l.b16 %v161
      %v299 = vunpack.c.l.b16 %v162
      %v300 = vunpack.c.l.b16 %v163
      %v301 = vunpack.c.l.b16 %v164
      %v302 = vunpack.c.l.b16 %v165
      %v303 = vunpack.c.l.b16 %v166
      %v304 = vunpack.c.l.b16 %v167
      %v305 = vunpack.c.l.b16 %v168
      %v306 = vunpack.c.l.b16 %v169
      %v307 = vunpack.c.l.b16 %v170
      %v308 = vunpack.c.l.b16 %v171
      %v309 = vunpack.c.l.b16 %v172
      %v310 = vunpack.c.l.b16 %v173
      %v311 = vunpack.c.l.b16 %v174
      %v312 = vunpack.c.l.b16 %v175
      %v313 = vunpack.c.l.b16 %v176
      %v314 = vunpack.c.l.b16 %v177
      %v315 = vunpack.c.l.b16 %v178
      %v316 = vunpack.c.l.b16 %v179
      %v317 = vunpack.c.l.b16 %v180
      %v318 = vunpack.c.l.b16 %v181
      %v319 = vunpack.c.l.b16 %v182
      %v320 = vunpack.c.l.b16 %v183
      %v321 = vunpack.c.l.b16 %v184
      %v322 = vunpack.c.l.b16 %v185
      %v323 = vunpack.c.l.b16 %v186
      %v324 = vunpack.c.l.b16 %v187
      %v325 = vunpack.c.l.b16 %v188
      %v326 = vunpack.c.l.b16 %v189
      %v327 = vunpack.c.l.b16 %v190
      %v328 = vunpack.c.l.b16 %v191
      %v329 = vunpack.c.l.b16 %v192
      %v330 = vunpack.c.l.b16 %v193
      %v331 = vunpack.c.l.b16 %v194
      %v332 = vunpack.c.l.b16 %v195
      %v333 = vunpack.c.l.b16 %v196
      %v334 = vunpack.c.l.b16 %v197
      %v335 = vunpack.c.l.b16 %v198
      %v336 = vunpack.c.l.b16 %v199
      %v337 = vunpack.c.l.b16 %v200
      %v338 = vunpack.c.l.b16 %v201
      %v339 = vunpack.c.l.b16 %v202
      %v340 = vunpack.c.l.b16 %v203
      %v341 = vunpack.c.l.b16 %v204
      %v342 = vunpack.c.l.b16 %v205
      %v343 = vunpack.c.l.b16 %v206
      %v344 = vunpack.c.l.b16 %v207
      %v345 = vunpack.c.l.b16 %v208
      %v346 = vunpack.c.l.b16 %v209
      %v347 = vunpack.c.l.b16 %v210
      %v348 = vunpack.c.l.b16 %v211
      %v349 = vpack.c.b16 %v286, %v285
      %v350 = vpack.c.b16 %v288, %v287
      %v351 = vpack.c.b16 %v290, %v289
      %v352 = vpack.c.b16 %v292, %v291
      %v353 = vpack.c.b16 %v294, %v293
      %v354 = vpack.c.b16 %v296, %v295
      %v355 = vpack.c.b16 %v298, %v297
      %v356 = vpack.c.b16 %v300, %v299
      %v357 = vpack.c.b16 %v302, %v301
      %v358 = vpack.c.b16 %v304, %v303
      %v359 = vpack.c.b16 %v306, %v305
      %v360 = vpack.c.b16 %v308, %v307
      %v361 = vpack.c.b16 %v310, %v309
      %v362 = vpack.c.b16 %v312, %v311
      %v363 = vpack.c.b16 %v314, %v313
      %v364 = vpack.c.b16 %v316, %v315
      %v365 = vpack.c.b16 %v318, %v317
      %v366 = vpack.c.b16 %v320, %v319
      %v367 = vpack.c.b16 %v322, %v321
      %v368 = vpack.c.b16 %v324, %v323
      %v369 = vpack.c.b16 %v326, %v325
      %v370 = vpack.c.b16 %v328, %v327
      %v371 = vpack.c.b16 %v330, %v329
      %v372 = vpack.c.b16 %v332, %v331
      %v373 = vpack.c.b16 %v334, %v333
      %v374 = vpack.c.b16 %v336, %v335
      %v375 = vpack.c.b16 %v338, %v337
      %v376 = vpack.c.b16 %v340, %v339
      %v377 = vpack.c.b16 %v342, %v341
      %v378 = vpack.c.b16 %v344, %v343
      %v379 = vpack.c.b16 %v346, %v345
      %v380 = vpack.c.b16 %v348, %v347
      %v390 = vunpack.c.l.b16 %v212
      %v391 = vunpack.c.l.b16 %v213
      %v392 = vunpack.c.l.b16 %v214
      %v393 = vunpack.c.l.b16 %v215
      %v394 = vunpack.c.l.b16 %v216
      %v395 = vunpack.c.l.b16 %v217
      %v396 = vunpack.c.l.b16 %v218
      %v397 = vunpack.c.l.b16 %v219
      %v398 = vunpack.c.l.b16 %v220
      %v399 = vpack.c.b16 %v391, %v390
      %v400 = vpack.c.b16 %v393, %v392
      %v401 = vpack.c.b16 %v395, %v394
      %v402 = vpack.c.b16 %v397, %v396
      %v403 = vpack.c.b16 %v398, %v398
      %vm408 = vcmask 588800
      %v410 = vsel %vm408, %v349, 0
      %v413 = vsel %vm408, %v350, 0
      %v416 = vsel %vm408, %v351, 0
      %v419 = vsel %vm408, %v352, 0
      %v422 = vsel %vm408, %v353, 0
      %v425 = vsel %vm408, %v354, 0
      %v428 = vsel %vm408, %v355, 0
      %v431 = vsel %vm408, %v356, 0
      %v434 = vsel %vm408, %v357, 0
      %v437 = vsel %vm408, %v358, 0
      %v440 = vsel %vm408, %v359, 0
      %v443 = vsel %vm408, %v360, 0
      %v446 = vsel %vm408, %v361, 0
      %v449 = vsel %vm408, %v362, 0
      %v452 = vsel %vm408, %v363, 0
      %v455 = vsel %vm408, %v364, 0
      %v458 = vsel %vm408, %v365, 0
      %v461 = vsel %vm408, %v366, 0
      %v464 = vsel %vm408, %v367, 0
      %v467 = vsel %vm408, %v368, 0
      %v470 = vsel %vm408, %v369, 0
      %v473 = vsel %vm408, %v370, 0
      %v476 = vsel %vm408, %v371, 0
      %v479 = vsel %vm408, %v372, 0
      %v482 = vsel %vm408, %v373, 0
      %v485 = vsel %vm408, %v374, 0
      %v488 = vsel %vm408, %v375, 0
      %v491 = vsel %vm408, %v376, 0
      %v494 = vsel %vm408, %v377, 0
      %v497 = vsel %vm408, %v378, 0
      %v500 = vsel %vm408, %v379, 0
      %v503 = vsel %vm408, %v380, 0
      %vm505 = vcmask 1043456
      %v507 = vsel %vm505, %v403, 0
      %509 = vmatprep.subr.bf16.mxu0 0
      %510 = vmatpush1.bf16.msra.mxu0 %v399
      %511 = vmatprep.subr.bf16.mxu0 0
      %512 = vmatpush1.bf16.msra.mxu0 %v400
      %513 = vmatprep.subr.bf16.mxu0 0
      %514 = vmatpush1.bf16.msra.mxu0 %v401
      %515 = vmatprep.subr.bf16.mxu0 0
      %516 = vmatpush1.bf16.msra.mxu0 %v402
      %517 = vmatprep.subr.bf16.mxu0 0
      %518 = vmatpush1.bf16.msra.mxu0 %v507
      %519 = vmatprep.subr.bf16.mxu0 0
      %520 = vmatpush1.bf16.msra.mxu0 0
      %521 = vmatprep.subr.bf16.mxu0 0
      %522 = vmatpush1.bf16.msra.mxu0 0
      %523 = vmatprep.subr.bf16.mxu0 0
      %524 = vmatpush1.bf16.msra.mxu0 0
      %525 = vmatprep.subr.bf16.mxu0 0
      %526 = vmatpush1.bf16.msra.mxu0 0
      %527 = vmatprep.subr.bf16.mxu0 0
      %528 = vmatpush1.bf16.msra.mxu0 0
      %529 = vmatprep.subr.bf16.mxu0 0
      %530 = vmatpush1.bf16.msra.mxu0 0
      %531 = vmatprep.subr.bf16.mxu0 0
      %532 = vmatpush1.bf16.msra.mxu0 0
      %533 = vmatprep.subr.bf16.mxu0 0
      %534 = vmatpush1.bf16.msra.mxu0 0
      %535 = vmatprep.subr.bf16.mxu0 0
      %536 = vmatpush1.bf16.msra.mxu0 0
      %537 = vmatprep.subr.bf16.mxu0 0
      %538 = vmatpush1.bf16.msra.mxu0 0
      %539 = vmatprep.subr.bf16.mxu0 0
      %540 = vmatpush1.bf16.msra.mxu0 0
      %541 = vmatprep.mubr.bf16.mxu0 0
      %542 = vmatmul.mubr.bf16.gmra.mrb[0].mxu0 %v410
      %v543 = vpop.f32.mrb[0].mxu0
      %v544 = vadd.f32 0.0, %v543
      %v545 = vpop.f32.mrb[0].mxu0
      %v546 = vpop.f32.mrb[0].mxu0
      %v547 = vadd.f32 0.0, %v546
      %v548 = vpop.f32.mrb[0].mxu0
      %549 = vmatprep.mubr.bf16.mxu0 0
      %550 = vmatmul.mubr.bf16.gmra.mrb[0].mxu0 %v413
      %v551 = vpop.f32.mrb[0].mxu0
      %v552 = vadd.f32 0.0, %v551
      %v553 = vpop.f32.mrb[0].mxu0
      %v554 = vpop.f32.mrb[0].mxu0
      %v555 = vadd.f32 0.0, %v554
      %v556 = vpop.f32.mrb[0].mxu0
      %557 = vmatprep.mubr.bf16.mxu0 0
      %558 = vmatmul.mubr.bf16.gmra.mrb[0].mxu0 %v416
      %v559 = vpop.f32.mrb[0].mxu0
      %v560 = vadd.f32 0.0, %v559
      %v561 = vpop.f32.mrb[0].mxu0
      %v562 = vpop.f32.mrb[0].mxu0
      %v563 = vadd.f32 0.0, %v562
      %v564 = vpop.f32.mrb[0].mxu0
      %565 = vmatprep.mubr.bf16.mxu0 0
      %566 = vmatmul.mubr.bf16.gmra.mrb[0].mxu0 %v419
      %v567 = vpop.f32.mrb[0].mxu0
      %v568 = vadd.f32 0.0, %v567
      %v569 = vpop.f32.mrb[0].mxu0
      %v570 = vpop.f32.mrb[0].mxu0
      %v571 = vadd.f32 0.0, %v570
      %v572 = vpop.f32.mrb[0].mxu0
      %573 = vmatprep.mubr.bf16.mxu0 0
      %574 = vmatmul.mubr.bf16.gmra.mrb[0].mxu0 %v422
      %v575 = vpop.f32.mrb[0].mxu0
      %v576 = vadd.f32 0.0, %v575
      %v577 = vpop.f32.mrb[0].mxu0
      %v578 = vpop.f32.mrb[0].mxu0
      %v579 = vadd.f32 0.0, %v578
      %v580 = vpop.f32.mrb[0].mxu0
      %581 = vmatprep.mubr.bf16.mxu0 0
      %582 = vmatmul.mubr.bf16.gmra.mrb[0].mxu0 %v425
      %v583 = vpop.f32.mrb[0].mxu0
      %v584 = vadd.f32 0.0, %v583
      %v585 = vpop.f32.mrb[0].mxu0
      %v586 = vpop.f32.mrb[0].mxu0
      %v587 = vadd.f32 0.0, %v586
      %v588 = vpop.f32.mrb[0].mxu0
      %589 = vmatprep.mubr.bf16.mxu0 0
      %590 = vmatmul.mubr.bf16.gmra.mrb[0].mxu0 %v428
      %v591 = vpop.f32.mrb[0].mxu0
      %v592 = vadd.f32 0.0, %v591
      %v593 = vpop.f32.mrb[0].mxu0
      %v594 = vpop.f32.mrb[0].mxu0
      %v595 = vadd.f32 0.0, %v594
      %v596 = vpop.f32.mrb[0].mxu0
      %597 = vmatprep.mubr.bf16.mxu0 0
      %598 = vmatmul.mubr.bf16.gmra.mrb[0].mxu0 %v431
      %v599 = vpop.f32.mrb[0].mxu0
      %v600 = vadd.f32 0.0, %v599
      %v601 = vpop.f32.mrb[0].mxu0
      %v602 = vpop.f32.mrb[0].mxu0
      %v603 = vadd.f32 0.0, %v602
      %v604 = vpop.f32.mrb[0].mxu0
      %605 = vmatprep.mubr.bf16.mxu0 0
      %606 = vmatmul.mubr.bf16.gmra.mrb[0].mxu0 %v434
      %v607 = vpop.f32.mrb[0].mxu0
      %v608 = vadd.f32 0.0, %v607
      %v609 = vpop.f32.mrb[0].mxu0
      %v610 = vpop.f32.mrb[0].mxu0
      %v611 = vadd.f32 0.0, %v610
      %v612 = vpop.f32.mrb[0].mxu0
      %613 = vmatprep.mubr.bf16.mxu0 0
      %614 = vmatmul.mubr.bf16.gmra.mrb[0].mxu0 %v437
      %v615 = vpop.f32.mrb[0].mxu0
      %v616 = vadd.f32 0.0, %v615
      %v617 = vpop.f32.mrb[0].mxu0
      %v618 = vpop.f32.mrb[0].mxu0
      %v619 = vadd.f32 0.0, %v618
      %v620 = vpop.f32.mrb[0].mxu0
      %621 = vmatprep.mubr.bf16.mxu0 0
      %622 = vmatmul.mubr.bf16.gmra.mrb[0].mxu0 %v440
      %v623 = vpop.f32.mrb[0].mxu0
      %v624 = vadd.f32 0.0, %v623
      %v625 = vpop.f32.mrb[0].mxu0
      %v626 = vpop.f32.mrb[0].mxu0
      %v627 = vadd.f32 0.0, %v626
      %v628 = vpop.f32.mrb[0].mxu0
      %629 = vmatprep.mubr.bf16.mxu0 0
      %630 = vmatmul.mubr.bf16.gmra.mrb[0].mxu0 %v443
      %v631 = vpop.f32.mrb[0].mxu0
      %v632 = vadd.f32 0.0, %v631
      %v633 = vpop.f32.mrb[0].mxu0
      %v634 = vpop.f32.mrb[0].mxu0
      %v635 = vadd.f32 0.0, %v634
      %v636 = vpop.f32.mrb[0].mxu0
      %637 = vmatprep.mubr.bf16.mxu0 0
      %638 = vmatmul.mubr.bf16.gmra.mrb[0].mxu0 %v446
      %v639 = vpop.f32.mrb[0].mxu0
      %v640 = vadd.f32 0.0, %v639
      %v641 = vpop.f32.mrb[0].mxu0
      %v642 = vpop.f32.mrb[0].mxu0
      %v643 = vadd.f32 0.0, %v642
      %v644 = vpop.f32.mrb[0].mxu0
      %645 = vmatprep.mubr.bf16.mxu0 0
      %646 = vmatmul.mubr.bf16.gmra.mrb[0].mxu0 %v449
      %v647 = vpop.f32.mrb[0].mxu0
      %v648 = vadd.f32 0.0, %v647
      %v649 = vpop.f32.mrb[0].mxu0
      %v650 = vpop.f32.mrb[0].mxu0
      %v651 = vadd.f32 0.0, %v650
      %v652 = vpop.f32.mrb[0].mxu0
      %653 = vmatprep.mubr.bf16.mxu0 0
      %654 = vmatmul.mubr.bf16.gmra.mrb[0].mxu0 %v452
      %v655 = vpop.f32.mrb[0].mxu0
      %v656 = vadd.f32 0.0, %v655
      %v657 = vpop.f32.mrb[0].mxu0
      %v658 = vpop.f32.mrb[0].mxu0
      %v659 = vadd.f32 0.0, %v658
      %v660 = vpop.f32.mrb[0].mxu0
      %661 = vmatprep.mubr.bf16.mxu0 0
      %662 = vmatmul.mubr.bf16.gmra.mrb[0].mxu0 %v455
      %v663 = vpop.f32.mrb[0].mxu0
      %v664 = vadd.f32 0.0, %v663
      %v665 = vpop.f32.mrb[0].mxu0
      %v666 = vpop.f32.mrb[0].mxu0
      %v667 = vadd.f32 0.0, %v666
      %v668 = vpop.f32.mrb[0].mxu0
      %669 = vmatprep.mubr.bf16.mxu0 0
      %670 = vmatmul.mubr.bf16.gmra.mrb[0].mxu0 %v458
      %v671 = vpop.f32.mrb[0].mxu0
      %v672 = vadd.f32 0.0, %v671
      %v673 = vpop.f32.mrb[0].mxu0
      %v674 = vpop.f32.mrb[0].mxu0
      %v675 = vadd.f32 0.0, %v674
      %v676 = vpop.f32.mrb[0].mxu0
      %677 = vmatprep.mubr.bf16.mxu0 0
      %678 = vmatmul.mubr.bf16.gmra.mrb[0].mxu0 %v461
      %v679 = vpop.f32.mrb[0].mxu0
      %v680 = vadd.f32 0.0, %v679
      %v681 = vpop.f32.mrb[0].mxu0
      %v682 = vpop.f32.mrb[0].mxu0
      %v683 = vadd.f32 0.0, %v682
      %v684 = vpop.f32.mrb[0].mxu0
      %685 = vmatprep.mubr.bf16.mxu0 0
      %686 = vmatmul.mubr.bf16.gmra.mrb[0].mxu0 %v464
      %v687 = vpop.f32.mrb[0].mxu0
      %v688 = vadd.f32 0.0, %v687
      %v689 = vpop.f32.mrb[0].mxu0
      %v690 = vpop.f32.mrb[0].mxu0
      %v691 = vadd.f32 0.0, %v690
      %v692 = vpop.f32.mrb[0].mxu0
      %693 = vmatprep.mubr.bf16.mxu0 0
      %694 = vmatmul.mubr.bf16.gmra.mrb[0].mxu0 %v467
      %v695 = vpop.f32.mrb[0].mxu0
      %v696 = vadd.f32 0.0, %v695
      %v697 = vpop.f32.mrb[0].mxu0
      %v698 = vpop.f32.mrb[0].mxu0
      %v699 = vadd.f32 0.0, %v698
      %v700 = vpop.f32.mrb[0].mxu0
      %701 = vmatprep.mubr.bf16.mxu0 0
      %702 = vmatmul.mubr.bf16.gmra.mrb[0].mxu0 %v470
      %v703 = vpop.f32.mrb[0].mxu0
      %v704 = vadd.f32 0.0, %v703
      %v705 = vpop.f32.mrb[0].mxu0
      %v706 = vpop.f32.mrb[0].mxu0
      %v707 = vadd.f32 0.0, %v706
      %v708 = vpop.f32.mrb[0].mxu0
      %709 = vmatprep.mubr.bf16.mxu0 0
      %710 = vmatmul.mubr.bf16.gmra.mrb[0].mxu0 %v473
      %v711 = vpop.f32.mrb[0].mxu0
      %v712 = vadd.f32 0.0, %v711
      %v713 = vpop.f32.mrb[0].mxu0
      %v714 = vpop.f32.mrb[0].mxu0
      %v715 = vadd.f32 0.0, %v714
      %v716 = vpop.f32.mrb[0].mxu0
      %717 = vmatprep.mubr.bf16.mxu0 0
      %718 = vmatmul.mubr.bf16.gmra.mrb[0].mxu0 %v476
      %v719 = vpop.f32.mrb[0].mxu0
      %v720 = vadd.f32 0.0, %v719
      %v721 = vpop.f32.mrb[0].mxu0
      %v722 = vpop.f32.mrb[0].mxu0
      %v723 = vadd.f32 0.0, %v722
      %v724 = vpop.f32.mrb[0].mxu0
      %725 = vmatprep.mubr.bf16.mxu0 0
      %726 = vmatmul.mubr.bf16.gmra.mrb[0].mxu0 %v479
      %v727 = vpop.f32.mrb[0].mxu0
      %v728 = vadd.f32 0.0, %v727
      %v729 = vpop.f32.mrb[0].mxu0
      %v730 = vpop.f32.mrb[0].mxu0
      %v731 = vadd.f32 0.0, %v730
      %v732 = vpop.f32.mrb[0].mxu0
      %733 = vmatprep.mubr.bf16.mxu0 0
      %734 = vmatmul.mubr.bf16.gmra.mrb[0].mxu0 %v482
      %v735 = vpop.f32.mrb[0].mxu0
      %v736 = vadd.f32 0.0, %v735
      %v737 = vpop.f32.mrb[0].mxu0
      %v738 = vpop.f32.mrb[0].mxu0
      %v739 = vadd.f32 0.0, %v738
      %v740 = vpop.f32.mrb[0].mxu0
      %741 = vmatprep.mubr.bf16.mxu0 0
      %742 = vmatmul.mubr.bf16.gmra.mrb[0].mxu0 %v485
      %v743 = vpop.f32.mrb[0].mxu0
      %v744 = vadd.f32 0.0, %v743
      %v745 = vpop.f32.mrb[0].mxu0
      %v746 = vpop.f32.mrb[0].mxu0
      %v747 = vadd.f32 0.0, %v746
      %v748 = vpop.f32.mrb[0].mxu0
      %749 = vmatprep.mubr.bf16.mxu0 0
      %750 = vmatmul.mubr.bf16.gmra.mrb[0].mxu0 %v488
      %v751 = vpop.f32.mrb[0].mxu0
      %v752 = vadd.f32 0.0, %v751
      %v753 = vpop.f32.mrb[0].mxu0
      %v754 = vpop.f32.mrb[0].mxu0
      %v755 = vadd.f32 0.0, %v754
      %v756 = vpop.f32.mrb[0].mxu0
      %757 = vmatprep.mubr.bf16.mxu0 0
      %758 = vmatmul.mubr.bf16.gmra.mrb[0].mxu0 %v491
      %v759 = vpop.f32.mrb[0].mxu0
      %v760 = vadd.f32 0.0, %v759
      %v761 = vpop.f32.mrb[0].mxu0
      %v762 = vpop.f32.mrb[0].mxu0
      %v763 = vadd.f32 0.0, %v762
      %v764 = vpop.f32.mrb[0].mxu0
      %765 = vmatprep.mubr.bf16.mxu0 0
      %766 = vmatmul.mubr.bf16.gmra.mrb[0].mxu0 %v494
      %v767 = vpop.f32.mrb[0].mxu0
      %v768 = vadd.f32 0.0, %v767
      %v769 = vpop.f32.mrb[0].mxu0
      %v770 = vpop.f32.mrb[0].mxu0
      %v771 = vadd.f32 0.0, %v770
      %v772 = vpop.f32.mrb[0].mxu0
      %773 = vmatprep.mubr.bf16.mxu0 0
      %774 = vmatmul.mubr.bf16.gmra.mrb[0].mxu0 %v497
      %v775 = vpop.f32.mrb[0].mxu0
      %v776 = vadd.f32 0.0, %v775
      %v777 = vpop.f32.mrb[0].mxu0
      %v778 = vpop.f32.mrb[0].mxu0
      %v779 = vadd.f32 0.0, %v778
      %v780 = vpop.f32.mrb[0].mxu0
      %781 = vmatprep.mubr.bf16.mxu0 0
      %782 = vmatmul.mubr.bf16.gmra.mrb[0].mxu0 %v500
      %v783 = vpop.f32.mrb[0].mxu0
      %v784 = vadd.f32 0.0, %v783
      %v785 = vpop.f32.mrb[0].mxu0
      %v786 = vpop.f32.mrb[0].mxu0
      %v787 = vadd.f32 0.0, %v786
      %v788 = vpop.f32.mrb[0].mxu0
      %789 = vmatprep.mubr.bf16.mxu0 0
      %790 = vmatmul.mubr.bf16.gmra.mrb[0].mxu0 %v503
      %v791 = vpop.f32.mrb[0].mxu0
      %v792 = vadd.f32 0.0, %v791
      %v793 = vpop.f32.mrb[0].mxu0
      %v794 = vpop.f32.mrb[0].mxu0
      %v795 = vadd.f32 0.0, %v794
      %v796 = vpop.f32.mrb[0].mxu0
      %797 = vdwg.mxu0
      %v798 = vtanh.pop %v544
      %v799 = vtanh.pop %v547
      %v800 = vtanh.pop %v552
      %v801 = vtanh.pop %v555
      %v802 = vtanh.pop %v560
      %v803 = vtanh.pop %v563
      %v804 = vtanh.pop %v568
      %v805 = vtanh.pop %v571
      %v806 = vtanh.pop %v576
      %v807 = vtanh.pop %v579
      %v808 = vtanh.pop %v584
      %v809 = vtanh.pop %v587
      %v810 = vtanh.pop %v592
      %v811 = vtanh.pop %v595
      %v812 = vtanh.pop %v600
      %v813 = vtanh.pop %v603
      %v814 = vtanh.pop %v608
      %v815 = vtanh.pop %v611
      %v816 = vtanh.pop %v616
      %v817 = vtanh.pop %v619
      %v818 = vtanh.pop %v624
      %v819 = vtanh.pop %v627
      %v820 = vtanh.pop %v632
      %v821 = vtanh.pop %v635
      %v822 = vtanh.pop %v640
      %v823 = vtanh.pop %v643
      %v824 = vtanh.pop %v648
      %v825 = vtanh.pop %v651
      %v826 = vtanh.pop %v656
      %v827 = vtanh.pop %v659
      %v828 = vtanh.pop %v664
      %v829 = vtanh.pop %v667
      %v830 = vtanh.pop %v672
      %v831 = vtanh.pop %v675
      %v832 = vtanh.pop %v680
      %v833 = vtanh.pop %v683
      %v834 = vtanh.pop %v688
      %v835 = vtanh.pop %v691
      %v836 = vtanh.pop %v696
      %v837 = vtanh.pop %v699
      %v838 = vtanh.pop %v704
      %v839 = vtanh.pop %v707
      %v840 = vtanh.pop %v712
      %v841 = vtanh.pop %v715
      %v842 = vtanh.pop %v720
      %v843 = vtanh.pop %v723
      %v844 = vtanh.pop %v728
      %v845 = vtanh.pop %v731
      %v846 = vtanh.pop %v736
      %v847 = vtanh.pop %v739
      %v848 = vtanh.pop %v744
      %v849 = vtanh.pop %v747
      %v850 = vtanh.pop %v752
      %v851 = vtanh.pop %v755
      %v852 = vtanh.pop %v760
      %v853 = vtanh.pop %v763
      %v854 = vtanh.pop %v768
      %v855 = vtanh.pop %v771
      %v856 = vtanh.pop %v776
      %v857 = vtanh.pop %v779
      %v858 = vtanh.pop %v784
      %v859 = vtanh.pop %v787
      %v860 = vtanh.pop %v792
      %v861 = vtanh.pop %v795
      %v862 = vpack.c.bf16 %v799, %v798
      %v863 = vpack.c.bf16 %v801, %v800
      %v864 = vpack.c.bf16 %v803, %v802
      %v865 = vpack.c.bf16 %v805, %v804
      %v866 = vpack.c.bf16 %v807, %v806
      %v867 = vpack.c.bf16 %v809, %v808
      %v868 = vpack.c.bf16 %v811, %v810
      %v869 = vpack.c.bf16 %v813, %v812
      %v870 = vpack.c.bf16 %v815, %v814
      %v871 = vpack.c.bf16 %v817, %v816
      %v872 = vpack.c.bf16 %v819, %v818
      %v873 = vpack.c.bf16 %v821, %v820
      %v874 = vpack.c.bf16 %v823, %v822
      %v875 = vpack.c.bf16 %v825, %v824
      %v876 = vpack.c.bf16 %v827, %v826
      %v877 = vpack.c.bf16 %v829, %v828
      %v878 = vpack.c.bf16 %v831, %v830
      %v879 = vpack.c.bf16 %v833, %v832
      %v880 = vpack.c.bf16 %v835, %v834
      %v881 = vpack.c.bf16 %v837, %v836
      %v882 = vpack.c.bf16 %v839, %v838
      %v883 = vpack.c.bf16 %v841, %v840
      %v884 = vpack.c.bf16 %v843, %v842
      %v885 = vpack.c.bf16 %v845, %v844
      %v886 = vpack.c.bf16 %v847, %v846
      %v887 = vpack.c.bf16 %v849, %v848
      %v888 = vpack.c.bf16 %v851, %v850
      %v889 = vpack.c.bf16 %v853, %v852
      %v890 = vpack.c.bf16 %v855, %v854
      %v891 = vpack.c.bf16 %v857, %v856
      %v892 = vpack.c.bf16 %v859, %v858
      %v893 = vpack.c.bf16 %v861, %v860
      %v926 = vunpack.c.l.b16 %v862
      %v927 = vunpack.c.h.b16 %v862
      %v928 = vunpack.c.l.b16 %v863
      %v929 = vunpack.c.h.b16 %v863
      %v930 = vunpack.c.l.b16 %v864
      %v931 = vunpack.c.h.b16 %v864
      %v932 = vunpack.c.l.b16 %v865
      %v933 = vunpack.c.h.b16 %v865
      %v934 = vunpack.c.l.b16 %v866
      %v935 = vunpack.c.h.b16 %v866
      %v936 = vunpack.c.l.b16 %v867
      %v937 = vunpack.c.h.b16 %v867
      %v938 = vunpack.c.l.b16 %v868
      %v939 = vunpack.c.h.b16 %v868
      %v940 = vunpack.c.l.b16 %v869
      %v941 = vunpack.c.h.b16 %v869
      %v942 = vunpack.c.l.b16 %v870
      %v943 = vunpack.c.h.b16 %v870
      %v944 = vunpack.c.l.b16 %v871
      %v945 = vunpack.c.h.b16 %v871
      %v946 = vunpack.c.l.b16 %v872
      %v947 = vunpack.c.h.b16 %v872
      %v948 = vunpack.c.l.b16 %v873
      %v949 = vunpack.c.h.b16 %v873
      %v950 = vunpack.c.l.b16 %v874
      %v951 = vunpack.c.h.b16 %v874
      %v952 = vunpack.c.l.b16 %v875
      %v953 = vunpack.c.h.b16 %v875
      %v954 = vunpack.c.l.b16 %v876
      %v955 = vunpack.c.h.b16 %v876
      %v956 = vunpack.c.l.b16 %v877
      %v957 = vunpack.c.h.b16 %v877
      %v958 = vunpack.c.l.b16 %v878
      %v959 = vunpack.c.h.b16 %v878
      %v960 = vunpack.c.l.b16 %v879
      %v961 = vunpack.c.h.b16 %v879
      %v962 = vunpack.c.l.b16 %v880
      %v963 = vunpack.c.h.b16 %v880
      %v964 = vunpack.c.l.b16 %v881
      %v965 = vunpack.c.h.b16 %v881
      %v966 = vunpack.c.l.b16 %v882
      %v967 = vunpack.c.h.b16 %v882
      %v968 = vunpack.c.l.b16 %v883
      %v969 = vunpack.c.h.b16 %v883
      %v970 = vunpack.c.l.b16 %v884
      %v971 = vunpack.c.h.b16 %v884
      %v972 = vunpack.c.l.b16 %v885
      %v973 = vunpack.c.h.b16 %v885
      %v974 = vunpack.c.l.b16 %v886
      %v975 = vunpack.c.h.b16 %v886
      %v976 = vunpack.c.l.b16 %v887
      %v977 = vunpack.c.h.b16 %v887
      %v978 = vunpack.c.l.b16 %v888
      %v979 = vunpack.c.h.b16 %v888
      %v980 = vunpack.c.l.b16 %v889
      %v981 = vunpack.c.h.b16 %v889
      %v982 = vunpack.c.l.b16 %v890
      %v983 = vunpack.c.h.b16 %v890
      %v984 = vunpack.c.l.b16 %v891
      %v985 = vunpack.c.h.b16 %v891
      %v986 = vunpack.c.l.b16 %v892
      %v987 = vunpack.c.h.b16 %v892
      %v988 = vunpack.c.l.b16 %v893
      %v989 = vunpack.c.h.b16 %v893
      %v990 = vpack.c.b16 %v926, %v926
      %v991 = vpack.c.b16 %v927, %v927
      %v992 = vpack.c.b16 %v928, %v928
      %v993 = vpack.c.b16 %v929, %v929
      %v994 = vpack.c.b16 %v930, %v930
      %v995 = vpack.c.b16 %v931, %v931
      %v996 = vpack.c.b16 %v932, %v932
      %v997 = vpack.c.b16 %v933, %v933
      %v998 = vpack.c.b16 %v934, %v934
      %v999 = vpack.c.b16 %v935, %v935
      %v1000 = vpack.c.b16 %v936, %v936
      %v1001 = vpack.c.b16 %v937, %v937
      %v1002 = vpack.c.b16 %v938, %v938
      %v1003 = vpack.c.b16 %v939, %v939
      %v1004 = vpack.c.b16 %v940, %v940
      %v1005 = vpack.c.b16 %v941, %v941
      %v1006 = vpack.c.b16 %v942, %v942
      %v1007 = vpack.c.b16 %v943, %v943
      %v1008 = vpack.c.b16 %v944, %v944
      %v1009 = vpack.c.b16 %v945, %v945
      %v1010 = vpack.c.b16 %v946, %v946
      %v1011 = vpack.c.b16 %v947, %v947
      %v1012 = vpack.c.b16 %v948, %v948
      %v1013 = vpack.c.b16 %v949, %v949
      %v1014 = vpack.c.b16 %v950, %v950
      %v1015 = vpack.c.b16 %v951, %v951
      %v1016 = vpack.c.b16 %v952, %v952
      %v1017 = vpack.c.b16 %v953, %v953
      %v1018 = vpack.c.b16 %v954, %v954
      %v1019 = vpack.c.b16 %v955, %v955
      %v1020 = vpack.c.b16 %v956, %v956
      %v1021 = vpack.c.b16 %v957, %v957
      %v1022 = vpack.c.b16 %v958, %v958
      %v1023 = vpack.c.b16 %v959, %v959
      %v1024 = vpack.c.b16 %v960, %v960
      %v1025 = vpack.c.b16 %v961, %v961
      %v1026 = vpack.c.b16 %v962, %v962
      %v1027 = vpack.c.b16 %v963, %v963
      %v1028 = vpack.c.b16 %v964, %v964
      %v1029 = vpack.c.b16 %v965, %v965
      %v1030 = vpack.c.b16 %v966, %v966
      %v1031 = vpack.c.b16 %v967, %v967
      %v1032 = vpack.c.b16 %v968, %v968
      %v1033 = vpack.c.b16 %v969, %v969
      %v1034 = vpack.c.b16 %v970, %v970
      %v1035 = vpack.c.b16 %v971, %v971
      %v1036 = vpack.c.b16 %v972, %v972
      %v1037 = vpack.c.b16 %v973, %v973
      %v1038 = vpack.c.b16 %v974, %v974
      %v1039 = vpack.c.b16 %v975, %v975
      %v1040 = vpack.c.b16 %v976, %v976
      %v1041 = vpack.c.b16 %v977, %v977
      %v1042 = vpack.c.b16 %v978, %v978
      %v1043 = vpack.c.b16 %v979, %v979
      %v1044 = vpack.c.b16 %v980, %v980
      %v1045 = vpack.c.b16 %v981, %v981
      %v1046 = vpack.c.b16 %v982, %v982
      %v1047 = vpack.c.b16 %v983, %v983
      %v1048 = vpack.c.b16 %v984, %v984
      %v1049 = vpack.c.b16 %v985, %v985
      %v1050 = vpack.c.b16 %v986, %v986
      %v1051 = vpack.c.b16 %v987, %v987
      %v1052 = vpack.c.b16 %v988, %v988
      %v1053 = vpack.c.b16 %v989, %v989
      %1118 = vst [vmem:[%s145] sm:$0xf] %v990
      %1119 = vst [vmem:[%s145 + $0x4] sm:$0xf] %v991
      %1120 = vst [vmem:[%s145 + $0x8] sm:$0xf] %v992
      %1121 = vst [vmem:[%s145 + $0xc] sm:$0xf] %v993
      %1122 = vst [vmem:[%s145 + $0x10] sm:$0xf] %v994
      %1123 = vst [vmem:[%s145 + $0x14] sm:$0xf] %v995
      %1124 = vst [vmem:[%s145 + $0x18] sm:$0xf] %v996
      %1125 = vst [vmem:[%s145 + $0x1c] sm:$0xf] %v997
      %1126 = vst [vmem:[%s145 + $0x20] sm:$0xf] %v998
      %1127 = vst [vmem:[%s145 + $0x24] sm:$0xf] %v999
      %1128 = vst [vmem:[%s145 + $0x28] sm:$0xf] %v1000
      %1129 = vst [vmem:[%s145 + $0x2c] sm:$0xf] %v1001
      %1130 = vst [vmem:[%s145 + $0x30] sm:$0xf] %v1002
      %1131 = vst [vmem:[%s145 + $0x34] sm:$0xf] %v1003
      %1132 = vst [vmem:[%s145 + $0x38] sm:$0xf] %v1004
      %1133 = vst [vmem:[%s145 + $0x3c] sm:$0xf] %v1005
      %1134 = vst [vmem:[%s145 + $0x40] sm:$0xf] %v1006
      %1135 = vst [vmem:[%s145 + $0x44] sm:$0xf] %v1007
      %1136 = vst [vmem:[%s145 + $0x48] sm:$0xf] %v1008
      %1137 = vst [vmem:[%s145 + $0x4c] sm:$0xf] %v1009
      %1138 = vst [vmem:[%s145 + $0x50] sm:$0xf] %v1010
      %1139 = vst [vmem:[%s145 + $0x54] sm:$0xf] %v1011
      %1140 = vst [vmem:[%s145 + $0x58] sm:$0xf] %v1012
      %1141 = vst [vmem:[%s145 + $0x5c] sm:$0xf] %v1013
      %1142 = vst [vmem:[%s145 + $0x60] sm:$0xf] %v1014
      %1143 = vst [vmem:[%s145 + $0x64] sm:$0xf] %v1015
      %1144 = vst [vmem:[%s145 + $0x68] sm:$0xf] %v1016
      %1145 = vst [vmem:[%s145 + $0x6c] sm:$0xf] %v1017
      %1146 = vst [vmem:[%s145 + $0x70] sm:$0xf] %v1018
      %1147 = vst [vmem:[%s145 + $0x74] sm:$0xf] %v1019
      %1148 = vst [vmem:[%s145 + $0x78] sm:$0xf] %v1020
      %1149 = vst [vmem:[%s145 + $0x7c] sm:$0xf] %v1021
      %1150 = vst [vmem:[%s145 + $0x80] sm:$0xf] %v1022
      %1151 = vst [vmem:[%s145 + $0x84] sm:$0xf] %v1023
      %1152 = vst [vmem:[%s145 + $0x88] sm:$0xf] %v1024
      %1153 = vst [vmem:[%s145 + $0x8c] sm:$0xf] %v1025
      %1154 = vst [vmem:[%s145 + $0x90] sm:$0xf] %v1026
      %1155 = vst [vmem:[%s145 + $0x94] sm:$0xf] %v1027
      %1156 = vst [vmem:[%s145 + $0x98] sm:$0xf] %v1028
      %1157 = vst [vmem:[%s145 + $0x9c] sm:$0xf] %v1029
      %1158 = vst [vmem:[%s145 + $0xa0] sm:$0xf] %v1030
      %1159 = vst [vmem:[%s145 + $0xa4] sm:$0xf] %v1031
      %1160 = vst [vmem:[%s145 + $0xa8] sm:$0xf] %v1032
      %1161 = vst [vmem:[%s145 + $0xac] sm:$0xf] %v1033
      %1162 = vst [vmem:[%s145 + $0xb0] sm:$0xf] %v1034
      %1163 = vst [vmem:[%s145 + $0xb4] sm:$0xf] %v1035
      %1164 = vst [vmem:[%s145 + $0xb8] sm:$0xf] %v1036
      %1165 = vst [vmem:[%s145 + $0xbc] sm:$0xf] %v1037
      %1166 = vst [vmem:[%s145 + $0xc0] sm:$0xf] %v1038
      %1167 = vst [vmem:[%s145 + $0xc4] sm:$0xf] %v1039
      %1168 = vst [vmem:[%s145 + $0xc8] sm:$0xf] %v1040
      %1169 = vst [vmem:[%s145 + $0xcc] sm:$0xf] %v1041
      %1170 = vst [vmem:[%s145 + $0xd0] sm:$0xf] %v1042
      %1171 = vst [vmem:[%s145 + $0xd4] sm:$0xf] %v1043
      %1172 = vst [vmem:[%s145 + $0xd8] sm:$0xf] %v1044
      %1173 = vst [vmem:[%s145 + $0xdc] sm:$0xf] %v1045
      %1174 = vst [vmem:[%s145 + $0xe0] sm:$0xf] %v1046
      %1175 = vst [vmem:[%s145 + $0xe4] sm:$0xf] %v1047
      %1176 = vst [vmem:[%s145 + $0xe8] sm:$0xf] %v1048
      %1177 = vst [vmem:[%s145 + $0xec] sm:$0xf] %v1049
      %1178 = vst [vmem:[%s145 + $0xf0] sm:$0xf] %v1050
      %1179 = vst [vmem:[%s145 + $0xf4] sm:$0xf] %v1051
      %1180 = vst [vmem:[%s145 + $0xf8] sm:$0xf] %v1052
      %1181 = vst [vmem:[%s145 + $0xfc] sm:$0xf] %v1053
      %s1182 = smul.u32 64, %s13
      %p1183 = scmp.lt.s32.totalorder %s1182, 255
      %s1184 = scalar_select %p1183, %s1182, 255
      %s1185 = smul.addr %s1184, 4
      %s1186 = scalar_lea.vmem %s2, %s1185
      // Predicated region
      $region29: #{_generator_forward.17} parent=27 // pred_check
        %p1187 = pneg %p78
      $region30: #{_generator_forward.17} parent=27 // pred_check_branch
        %1189 = sbr.rel (%p1187) target = $region32
      $region31: #{_generator_forward.17} parent=27 // pred_region
        %s1190 = smul.u32 64, %s13
      $region32: #{_generator_forward.17} parent=27 // pred_fallthru
        _
    $region28: #{_generator_forward.17} parent=5 // pred_fallthru
      _
    %p1191 = scmp.le.s32.totalorder 2, %s8
    // Predicated region
    $region33: #{_generator_forward.17} parent=5 // pred_check
      %p1192 = pneg %p1191
    $region34: #{_generator_forward.17} parent=5 // pred_check_branch
      %1194 = sbr.rel (%p1192) target = $region36
    $region35: #{_generator_forward.17} parent=5 // pred_region
      %s1195 = ssub.s32 %s8, 2
      // Predicated region
      $region37: #{_generator_forward.17} parent=35 // pred_check
        %p1196 = pneg %p84
      $region38: #{_generator_forward.17} parent=35 // pred_check_branch
        %1198 = sbr.rel (%p1196) target = $region40
      $region39: #{_generator_forward.17} parent=35 // pred_region
        %s1199 = smul.u32 64, %s14
        %p1200 = scmp.lt.s32.totalorder %s1199, 255
        %s1201 = scalar_select %p1200, %s1199, 255
        %s1202 = smul.addr %s1201, 4
        %s1203 = scalar_lea.vmem %s2, %s1202
      $region40: #{_generator_forward.17} parent=35 // pred_fallthru
        _
    $region36: #{_generator_forward.17} parent=5 // pred_fallthru
      _
  $region6: #{_generator_forward.17} parent=0 // loop_footer
    %s12 = sadd.s32 1, %s8
  $region7: #{_generator_forward.17} parent=0 // loop_footer_branch
    %7 = sbr.rel target = $region3
  $region8: #{_generator_forward.17} parent=0 // loop_exit
    _

</llo_original>
